<compile_context>
chip_gen: v7x
topology: tpu7x:2x2x1
jax: 0.10.0
libtpu: 0.0.40
codegen_flags: <defaults>
</compile_context>

<pallas_src>
import functools

import jax
import jax.numpy as jnp
import numpy as np
from jax.experimental import pallas as pl
from jax.experimental.pallas import tpu as pltpu


def _kernel(p_ref, w3_ref, b3_ref, w1_ref, b1_ref, awt_ref, o_ref,
            *, H, W, h_idx0, h_idx1, h_frac, Nb):
    cd = w3_ref.dtype                     # compute dtype for conv MXU operands
    w3 = w3_ref[...]                      # (C1, 9*Cin)
    b3 = b3_ref[...]                      # (C1, 1) f32  (BN folded)
    w1 = w1_ref[...]                      # (Cout, C1)
    b1 = b1_ref[...]                      # (Cout, 1) f32
    awt = awt_ref[...]                    # (W, W2) f32 interpolation weights
    H2 = len(h_idx0)

    for s in range(Nb):                   # static unroll over samples in block
        patches = p_ref[s]                # (9*Cin, H*W), lane-dense

        # --- 3x3 conv (BN folded into weights) + bias + ReLU: (C1, H*W) ---
        fm = jnp.dot(w3, patches, preferred_element_type=jnp.float32)
        fm = jnp.maximum(fm + b3, 0.0)

        # --- 1x1 conv: (Cout, H*W), f32 accumulation ---
        out = jnp.dot(w1, fm.astype(cd),
                      preferred_element_type=jnp.float32) + b1

        # --- bilinear upsample (align_corners=True), separable ---
        # W axis: one small (Cout, W) @ (W, W2) dot per input row; the lane
        # slice doubles as the flat->per-row relayout, paid on the smallest
        # array of the pipeline.  Kept in f32.
        rows = [jnp.dot(out[:, h * W:(h + 1) * W], awt,
                        preferred_element_type=jnp.float32)
                for h in range(H)]        # H x (Cout, W2) f32

        # H axis: static 2-tap blend per output row, stored straight into the
        # NCHW output block (no kron matrix, no post-kernel transpose).
        # TODO(synk): for large H2 (big scale/resolution), replace this static
        # unroll with a fori_loop over output rows using SMEM tap indices /
        # weights and tile W2 columns over a second grid axis.
        for j in range(H2):
            i0, i1, f = h_idx0[j], h_idx1[j], h_frac[j]
            row = rows[i0] if f == 0.0 else (1.0 - f) * rows[i0] + f * rows[i1]
            o_ref[s, :, j, :] = row.astype(o_ref.dtype)


def _interp_matrix(out_size, in_size):
    """align_corners=True 1-D bilinear interpolation matrix (out_size, in_size)."""
    if out_size == in_size:
        return np.eye(out_size, dtype=np.float32)
    if in_size == 1:
        return np.ones((out_size, 1), dtype=np.float32)
    i = np.arange(out_size, dtype=np.float64)
    src = np.zeros_like(i) if out_size == 1 else i * (in_size - 1) / (out_size - 1)
    i0 = np.clip(np.floor(src).astype(np.int64), 0, in_size - 2)
    frac = src - i0
    A = np.zeros((out_size, in_size), dtype=np.float32)
    A[np.arange(out_size), i0] = (1.0 - frac).astype(np.float32)
    A[np.arange(out_size), i0 + 1] = frac.astype(np.float32)
    return A


def _interp_taps(out_size, in_size):
    """align_corners=True taps: static (idx0, idx1, frac) per output index."""
    if in_size == 1:
        return (0,) * out_size, (0,) * out_size, (0.0,) * out_size
    i = np.arange(out_size, dtype=np.float64)
    src = np.zeros_like(i) if out_size == 1 else i * (in_size - 1) / (out_size - 1)
    i0 = np.clip(np.floor(src).astype(np.int64), 0, in_size - 2)
    frac = src - i0
    return (tuple(int(v) for v in i0),
            tuple(int(v) for v in i0 + 1),
            tuple(float(v) for v in frac))


def _pad_tile(rows, cols, itemsize):
    """Rough VMEM footprint of a (rows, cols) tile: pad to (8, 128)."""
    return (-(-rows // 8) * 8) * (-(-cols // 128) * 128) * itemsize


def flynet_head(x_nchw, params, scale, *, compute_dtype=jnp.float32,
                samples_per_step=1):
    """x_nchw: (N, Cin, H, W) float32. Returns (N, Cout, H*scale, W*scale) f32."""
    w3, gamma, beta, mean, var, eps, w1, b1 = (
        params["w3"], params["gamma"], params["beta"], params["mean"],
        params["var"], params["eps"], params["w1"], params["b1"])

    N, Cin, H, W = x_nchw.shape
    C1 = w3.shape[0]          # 64 (128 for is_aux heads)
    Cout = w1.shape[0]
    H2, W2 = H * scale, W * scale
    Nb = samples_per_step
    assert N % Nb == 0, "samples_per_step must divide the batch"

    # Fold eval-mode BN into the 3x3 conv; lay weights out for channel-first
    # im2col: W3f[c1, (kh*3+kw)*Cin + cin] = s[c1] * w3[c1, cin, kh, kw].
    s = gamma / jnp.sqrt(var + eps)                                   # (C1,)
    w3f = (jnp.transpose(w3, (0, 2, 3, 1)).reshape(C1, 9 * Cin)
           * s[:, None]).astype(compute_dtype)
    b3 = (beta - mean * s).reshape(C1, 1).astype(jnp.float32)
    w1m = w1[:, :, 0, 0].astype(compute_dtype)                        # (Cout, C1)
    b1c = b1.reshape(Cout, 1).astype(jnp.float32)

    # Wrapper-side im2col -> lane-dense (H*W minor) kernel input (review (a)).
    xp = jnp.pad(x_nchw, ((0, 0), (0, 0), (1, 1), (1, 1)))
    cols = [xp[:, :, kh:kh + H, kw:kw + W]
            for kh in range(3) for kw in range(3)]
    patches = (jnp.concatenate(cols, axis=1)
               .reshape(N, 9 * Cin, H * W).astype(compute_dtype))

    # Separable align_corners=True bilinear weights (always f32).
    awt = jnp.asarray(_interp_matrix(W2, W).T)                        # (W, W2)
    h0, h1, hf = _interp_taps(H2, H)

    kernel = functools.partial(_kernel, H=H, W=W,
                               h_idx0=h0, h_idx1=h1, h_frac=hf, Nb=Nb)

    # VMEM limit sized from the actual resident buffers (+ headroom).
    cds = jnp.dtype(compute_dtype).itemsize
    in_vmem = 2 * (Nb * _pad_tile(9 * Cin, H * W, cds)       # patches block
                   + _pad_tile(C1, 9 * Cin, cds)             # w3f
                   + _pad_tile(C1, 1, 4)                     # b3
                   + _pad_tile(Cout, C1, cds)                # w1m
                   + _pad_tile(Cout, 1, 4)                   # b1c
                   + _pad_tile(W, W2, 4))                    # awt
    out_vmem = 2 * Nb * Cout * _pad_tile(H2, W2, 4)
    live_vmem = (_pad_tile(C1, H * W, 4) + _pad_tile(Cout, H * W, 4)
                 + (H + 2) * _pad_tile(Cout, W2, 4))         # fm, out, rows
    vmem_limit = int(min(64 << 20, in_vmem + out_vmem + live_vmem + (4 << 20)))

    out = pl.pallas_call(
        kernel,
        out_shape=jax.ShapeDtypeStruct((N, Cout, H2, W2), jnp.float32),
        grid_spec=pltpu.PrefetchScalarGridSpec(
            num_scalar_prefetch=0,
            grid=(N // Nb,),
            in_specs=[
                pl.BlockSpec((Nb, 9 * Cin, H * W), lambda n: (n, 0, 0)),
                pl.BlockSpec((C1, 9 * Cin), lambda n: (0, 0)),
                pl.BlockSpec((C1, 1), lambda n: (0, 0)),
                pl.BlockSpec((Cout, C1), lambda n: (0, 0)),
                pl.BlockSpec((Cout, 1), lambda n: (0, 0)),
                pl.BlockSpec((W, W2), lambda n: (0, 0)),
            ],
            out_specs=pl.BlockSpec((Nb, Cout, H2, W2),
                                   lambda n: (n, 0, 0, 0)),
        ),
        compiler_params=pltpu.CompilerParams(
            dimension_semantics=("parallel",),
            vmem_limit_bytes=vmem_limit),
    )(patches, w3f, b3, w1m, b1c, awt)

    return out  # already NCHW, no post-kernel reshape/transpose needed


def flynet_head_reference(x_nchw, params, scale):
    """Pure-JAX reference (lax.conv + explicit BN + interpolation matrices)."""
    w3, gamma, beta, mean, var, eps, w1, b1 = (
        params["w3"], params["gamma"], params["beta"], params["mean"],
        params["var"], params["eps"], params["w1"], params["b1"])
    N, Cin, H, W = x_nchw.shape
    H2, W2 = H * scale, W * scale

    fm = jax.lax.conv_general_dilated(
        x_nchw, w3, window_strides=(1, 1), padding=((1, 1), (1, 1)),
        dimension_numbers=("NCHW", "OIHW", "NCHW"))
    fm = (fm - mean[None, :, None, None]) / jnp.sqrt(var + eps)[None, :, None, None]
    fm = fm * gamma[None, :, None, None] + beta[None, :, None, None]
    fm = jnp.maximum(fm, 0.0)
    out = jax.lax.conv_general_dilated(
        fm, w1, window_strides=(1, 1), padding=((0, 0), (0, 0)),
        dimension_numbers=("NCHW", "OIHW", "NCHW"))
    out = out + b1[None, :, None, None]
    ah = jnp.asarray(_interp_matrix(H2, H))
    aw = jnp.asarray(_interp_matrix(W2, W))
    return jnp.einsum("Hh,nchw,Ww->ncHW", ah, out, aw)


if __name__ == "__main__":
    # Small shapes: batch=2, in_planes=4, 16x16, out_planes=5, scale=2, is_aux=False.
    N, Cin, H, W = 2, 4, 16, 16
    C1, Cout, scale = 64, 5, 2

    key = jax.random.PRNGKey(0)
    kx, kw3, kw1 = jax.random.split(key, 3)

    x = jax.random.normal(kx, (N, Cin, H, W), jnp.float32)

    # kaiming_normal_(a=1): gain = 1, std = 1/sqrt(fan_in)
    w3 = jax.random.normal(kw3, (C1, Cin, 3, 3), jnp.float32) / jnp.sqrt(Cin * 9.0)
    w1 = jax.random.normal(kw1, (Cout, C1, 1, 1), jnp.float32) / jnp.sqrt(float(C1))
    b1 = jnp.zeros((Cout,), jnp.float32)       # nn.init.constant_(bias, 0)

    # BatchNorm2d defaults (eval-mode running stats).
    params = dict(
        w3=w3,
        gamma=jnp.ones((C1,), jnp.float32),
        beta=jnp.zeros((C1,), jnp.float32),
        mean=jnp.zeros((C1,), jnp.float32),
        var=jnp.ones((C1,), jnp.float32),
        eps=jnp.float32(1e-5),
        w1=w1,
        b1=b1,
    )

    out = jax.block_until_ready(flynet_head(x, params, scale))
    ref = jax.block_until_ready(flynet_head_reference(x, params, scale))
    np.testing.assert_allclose(np.asarray(out), np.asarray(ref),
                               rtol=1e-4, atol=1e-4)

    # Also exercise the multi-sample-per-grid-step path (v5e/v6e step-overhead
    # amortization).
    out2 = jax.block_until_ready(
        flynet_head(x, params, scale, samples_per_step=2))
    np.testing.assert_allclose(np.asarray(out2), np.asarray(ref),
                               rtol=1e-4, atol=1e-4)

    print("KERNEL_OK")
</pallas_src>

<mosaic_0001>
module attributes {stable_mosaic.version = 11 : i64} {
  func.func @_kernel(%arg0: i32, %arg1: memref<1x36x256xf32, #tpu.memory_space<vmem>>, %arg2: memref<64x36xf32, #tpu.memory_space<vmem>>, %arg3: memref<64x1xf32, #tpu.memory_space<vmem>>, %arg4: memref<5x64xf32, #tpu.memory_space<vmem>>, %arg5: memref<5x1xf32, #tpu.memory_space<vmem>>, %arg6: memref<16x32xf32, #tpu.memory_space<vmem>>, %arg7: memref<1x5x32x32xf32, #tpu.memory_space<vmem>>) attributes {dimension_semantics = [#tpu.dimension_semantics<parallel>], iteration_bounds = array<i64: 2>, scalar_prefetch = 0 : i64, scratch_operands = 0 : i64, tpu.core_type = #tpu.core_type<tc>, window_params = [{transform_indices = @transform_0, window_bounds = array<i64: 1, 36, 256>}, {pipeline_mode = #tpu.pipeline_mode<synchronous>, transform_indices = @transform_1, window_bounds = array<i64: 64, 36>}, {pipeline_mode = #tpu.pipeline_mode<synchronous>, transform_indices = @transform_2, window_bounds = array<i64: 64, 1>}, {pipeline_mode = #tpu.pipeline_mode<synchronous>, transform_indices = @transform_3, window_bounds = array<i64: 5, 64>}, {pipeline_mode = #tpu.pipeline_mode<synchronous>, transform_indices = @transform_4, window_bounds = array<i64: 5, 1>}, {pipeline_mode = #tpu.pipeline_mode<synchronous>, transform_indices = @transform_5, window_bounds = array<i64: 16, 32>}, {transform_indices = @transform_6, window_bounds = array<i64: 1, 5, 32, 32>}]} {
    %c0 = arith.constant 0 : index
    %c0_0 = arith.constant 0 : index
    %0 = vector.load %arg2[%c0, %c0_0] : memref<64x36xf32, #tpu.memory_space<vmem>>, vector<64x36xf32>
    %c0_1 = arith.constant 0 : index
    %c0_2 = arith.constant 0 : index
    %1 = vector.load %arg3[%c0_1, %c0_2] : memref<64x1xf32, #tpu.memory_space<vmem>>, vector<64x1xf32>
    %c0_3 = arith.constant 0 : index
    %c0_4 = arith.constant 0 : index
    %2 = vector.load %arg4[%c0_3, %c0_4] : memref<5x64xf32, #tpu.memory_space<vmem>>, vector<5x64xf32>
    %c0_5 = arith.constant 0 : index
    %c0_6 = arith.constant 0 : index
    %3 = vector.load %arg5[%c0_5, %c0_6] : memref<5x1xf32, #tpu.memory_space<vmem>>, vector<5x1xf32>
    %c0_7 = arith.constant 0 : index
    %c0_8 = arith.constant 0 : index
    %4 = vector.load %arg6[%c0_7, %c0_8] : memref<16x32xf32, #tpu.memory_space<vmem>>, vector<16x32xf32>
    %c0_9 = arith.constant 0 : index
    %c0_10 = arith.constant 0 : index
    %c0_11 = arith.constant 0 : index
    %5 = vector.load %arg1[%c0_9, %c0_10, %c0_11] : memref<1x36x256xf32, #tpu.memory_space<vmem>>, vector<1x36x256xf32>
    %6 = vector.shape_cast %5 : vector<1x36x256xf32> to vector<36x256xf32>
    %cst = arith.constant dense<0.000000e+00> : vector<64x256xf32>
    %7 = tpu.matmul %0, %6, %cst {dimension_numbers = #tpu.dot_dimension_numbers<[1], [0], [0], [1], [0, 0, 1, 1], [], []>} : vector<64x36xf32>, vector<36x256xf32>, vector<64x256xf32> -> vector<64x256xf32>
    %8 = vector.broadcast %1 : vector<64x1xf32> to vector<64x256xf32>
    %9 = arith.addf %7, %8 : vector<64x256xf32>
    %cst_12 = arith.constant 0.000000e+00 : f32
    %10 = vector.broadcast %cst_12 : f32 to vector<64x256xf32>
    %11 = arith.maximumf %9, %10 : vector<64x256xf32>
    %cst_13 = arith.constant dense<0.000000e+00> : vector<5x256xf32>
    %12 = tpu.matmul %2, %11, %cst_13 {dimension_numbers = #tpu.dot_dimension_numbers<[1], [0], [0], [1], [0, 0, 1, 1], [], []>} : vector<5x64xf32>, vector<64x256xf32>, vector<5x256xf32> -> vector<5x256xf32>
    %13 = vector.broadcast %3 : vector<5x1xf32> to vector<5x256xf32>
    %14 = arith.addf %12, %13 : vector<5x256xf32>
    %15 = vector.extract_strided_slice %14 {offsets = [0, 0], sizes = [5, 16], strides = [1, 1]} : vector<5x256xf32> to vector<5x16xf32>
    %cst_14 = arith.constant dense<0.000000e+00> : vector<5x32xf32>
    %16 = tpu.matmul %15, %4, %cst_14 {dimension_numbers = #tpu.dot_dimension_numbers<[1], [0], [0], [1], [0, 0, 1, 1], [], []>} : vector<5x16xf32>, vector<16x32xf32>, vector<5x32xf32> -> vector<5x32xf32>
    %17 = vector.extract_strided_slice %14 {offsets = [0, 16], sizes = [5, 16], strides = [1, 1]} : vector<5x256xf32> to vector<5x16xf32>
    %cst_15 = arith.constant dense<0.000000e+00> : vector<5x32xf32>
    %18 = tpu.matmul %17, %4, %cst_15 {dimension_numbers = #tpu.dot_dimension_numbers<[1], [0], [0], [1], [0, 0, 1, 1], [], []>} : vector<5x16xf32>, vector<16x32xf32>, vector<5x32xf32> -> vector<5x32xf32>
    %19 = vector.extract_strided_slice %14 {offsets = [0, 32], sizes = [5, 16], strides = [1, 1]} : vector<5x256xf32> to vector<5x16xf32>
    %cst_16 = arith.constant dense<0.000000e+00> : vector<5x32xf32>
    %20 = tpu.matmul %19, %4, %cst_16 {dimension_numbers = #tpu.dot_dimension_numbers<[1], [0], [0], [1], [0, 0, 1, 1], [], []>} : vector<5x16xf32>, vector<16x32xf32>, vector<5x32xf32> -> vector<5x32xf32>
    %21 = vector.extract_strided_slice %14 {offsets = [0, 48], sizes = [5, 16], strides = [1, 1]} : vector<5x256xf32> to vector<5x16xf32>
    %cst_17 = arith.constant dense<0.000000e+00> : vector<5x32xf32>
    %22 = tpu.matmul %21, %4, %cst_17 {dimension_numbers = #tpu.dot_dimension_numbers<[1], [0], [0], [1], [0, 0, 1, 1], [], []>} : vector<5x16xf32>, vector<16x32xf32>, vector<5x32xf32> -> vector<5x32xf32>
    %23 = vector.extract_strided_slice %14 {offsets = [0, 64], sizes = [5, 16], strides = [1, 1]} : vector<5x256xf32> to vector<5x16xf32>
    %cst_18 = arith.constant dense<0.000000e+00> : vector<5x32xf32>
    %24 = tpu.matmul %23, %4, %cst_18 {dimension_numbers = #tpu.dot_dimension_numbers<[1], [0], [0], [1], [0, 0, 1, 1], [], []>} : vector<5x16xf32>, vector<16x32xf32>, vector<5x32xf32> -> vector<5x32xf32>
    %25 = vector.extract_strided_slice %14 {offsets = [0, 80], sizes = [5, 16], strides = [1, 1]} : vector<5x256xf32> to vector<5x16xf32>
    %cst_19 = arith.constant dense<0.000000e+00> : vector<5x32xf32>
    %26 = tpu.matmul %25, %4, %cst_19 {dimension_numbers = #tpu.dot_dimension_numbers<[1], [0], [0], [1], [0, 0, 1, 1], [], []>} : vector<5x16xf32>, vector<16x32xf32>, vector<5x32xf32> -> vector<5x32xf32>
    %27 = vector.extract_strided_slice %14 {offsets = [0, 96], sizes = [5, 16], strides = [1, 1]} : vector<5x256xf32> to vector<5x16xf32>
    %cst_20 = arith.constant dense<0.000000e+00> : vector<5x32xf32>
    %28 = tpu.matmul %27, %4, %cst_20 {dimension_numbers = #tpu.dot_dimension_numbers<[1], [0], [0], [1], [0, 0, 1, 1], [], []>} : vector<5x16xf32>, vector<16x32xf32>, vector<5x32xf32> -> vector<5x32xf32>
    %29 = vector.extract_strided_slice %14 {offsets = [0, 112], sizes = [5, 16], strides = [1, 1]} : vector<5x256xf32> to vector<5x16xf32>
    %cst_21 = arith.constant dense<0.000000e+00> : vector<5x32xf32>
    %30 = tpu.matmul %29, %4, %cst_21 {dimension_numbers = #tpu.dot_dimension_numbers<[1], [0], [0], [1], [0, 0, 1, 1], [], []>} : vector<5x16xf32>, vector<16x32xf32>, vector<5x32xf32> -> vector<5x32xf32>
    %31 = vector.extract_strided_slice %14 {offsets = [0, 128], sizes = [5, 16], strides = [1, 1]} : vector<5x256xf32> to vector<5x16xf32>
    %cst_22 = arith.constant dense<0.000000e+00> : vector<5x32xf32>
    %32 = tpu.matmul %31, %4, %cst_22 {dimension_numbers = #tpu.dot_dimension_numbers<[1], [0], [0], [1], [0, 0, 1, 1], [], []>} : vector<5x16xf32>, vector<16x32xf32>, vector<5x32xf32> -> vector<5x32xf32>
    %33 = vector.extract_strided_slice %14 {offsets = [0, 144], sizes = [5, 16], strides = [1, 1]} : vector<5x256xf32> to vector<5x16xf32>
    %cst_23 = arith.constant dense<0.000000e+00> : vector<5x32xf32>
    %34 = tpu.matmul %33, %4, %cst_23 {dimension_numbers = #tpu.dot_dimension_numbers<[1], [0], [0], [1], [0, 0, 1, 1], [], []>} : vector<5x16xf32>, vector<16x32xf32>, vector<5x32xf32> -> vector<5x32xf32>
    %35 = vector.extract_strided_slice %14 {offsets = [0, 160], sizes = [5, 16], strides = [1, 1]} : vector<5x256xf32> to vector<5x16xf32>
    %cst_24 = arith.constant dense<0.000000e+00> : vector<5x32xf32>
    %36 = tpu.matmul %35, %4, %cst_24 {dimension_numbers = #tpu.dot_dimension_numbers<[1], [0], [0], [1], [0, 0, 1, 1], [], []>} : vector<5x16xf32>, vector<16x32xf32>, vector<5x32xf32> -> vector<5x32xf32>
    %37 = vector.extract_strided_slice %14 {offsets = [0, 176], sizes = [5, 16], strides = [1, 1]} : vector<5x256xf32> to vector<5x16xf32>
    %cst_25 = arith.constant dense<0.000000e+00> : vector<5x32xf32>
    %38 = tpu.matmul %37, %4, %cst_25 {dimension_numbers = #tpu.dot_dimension_numbers<[1], [0], [0], [1], [0, 0, 1, 1], [], []>} : vector<5x16xf32>, vector<16x32xf32>, vector<5x32xf32> -> vector<5x32xf32>
    %39 = vector.extract_strided_slice %14 {offsets = [0, 192], sizes = [5, 16], strides = [1, 1]} : vector<5x256xf32> to vector<5x16xf32>
    %cst_26 = arith.constant dense<0.000000e+00> : vector<5x32xf32>
    %40 = tpu.matmul %39, %4, %cst_26 {dimension_numbers = #tpu.dot_dimension_numbers<[1], [0], [0], [1], [0, 0, 1, 1], [], []>} : vector<5x16xf32>, vector<16x32xf32>, vector<5x32xf32> -> vector<5x32xf32>
    %41 = vector.extract_strided_slice %14 {offsets = [0, 208], sizes = [5, 16], strides = [1, 1]} : vector<5x256xf32> to vector<5x16xf32>
    %cst_27 = arith.constant dense<0.000000e+00> : vector<5x32xf32>
    %42 = tpu.matmul %41, %4, %cst_27 {dimension_numbers = #tpu.dot_dimension_numbers<[1], [0], [0], [1], [0, 0, 1, 1], [], []>} : vector<5x16xf32>, vector<16x32xf32>, vector<5x32xf32> -> vector<5x32xf32>
    %43 = vector.extract_strided_slice %14 {offsets = [0, 224], sizes = [5, 16], strides = [1, 1]} : vector<5x256xf32> to vector<5x16xf32>
    %cst_28 = arith.constant dense<0.000000e+00> : vector<5x32xf32>
    %44 = tpu.matmul %43, %4, %cst_28 {dimension_numbers = #tpu.dot_dimension_numbers<[1], [0], [0], [1], [0, 0, 1, 1], [], []>} : vector<5x16xf32>, vector<16x32xf32>, vector<5x32xf32> -> vector<5x32xf32>
    %45 = vector.extract_strided_slice %14 {offsets = [0, 240], sizes = [5, 16], strides = [1, 1]} : vector<5x256xf32> to vector<5x16xf32>
    %cst_29 = arith.constant dense<0.000000e+00> : vector<5x32xf32>
    %46 = tpu.matmul %45, %4, %cst_29 {dimension_numbers = #tpu.dot_dimension_numbers<[1], [0], [0], [1], [0, 0, 1, 1], [], []>} : vector<5x16xf32>, vector<16x32xf32>, vector<5x32xf32> -> vector<5x32xf32>
    %c0_30 = arith.constant 0 : index
    %c0_31 = arith.constant 0 : index
    %c0_32 = arith.constant 0 : index
    %c0_33 = arith.constant 0 : index
    %47 = vector.load %arg7[%c0_30, %c0_31, %c0_32, %c0_33] : memref<1x5x32x32xf32, #tpu.memory_space<vmem>>, vector<1x5x1x32xf32>
    %48 = vector.shape_cast %47 : vector<1x5x1x32xf32> to vector<5x32xf32>
    %49 = vector.shape_cast %16 : vector<5x32xf32> to vector<1x5x1x32xf32>
    tpu.vector_store %arg7[%c0_30, %c0_31, %c0_32, %c0_33], %49 {strides = array<i32>} : memref<1x5x32x32xf32, #tpu.memory_space<vmem>>, vector<1x5x1x32xf32>,
    %cst_34 = arith.constant 5.161290e-01 : f32
    %50 = vector.broadcast %cst_34 : f32 to vector<5x32xf32>
    %51 = arith.mulf %50, %16 : vector<5x32xf32>
    %cst_35 = arith.constant 0.483870953 : f32
    %52 = vector.broadcast %cst_35 : f32 to vector<5x32xf32>
    %53 = arith.mulf %52, %18 : vector<5x32xf32>
    %54 = arith.addf %51, %53 : vector<5x32xf32>
    %c0_36 = arith.constant 0 : index
    %c0_37 = arith.constant 0 : index
    %c1 = arith.constant 1 : index
    %c0_38 = arith.constant 0 : index
    %55 = vector.load %arg7[%c0_36, %c0_37, %c1, %c0_38] : memref<1x5x32x32xf32, #tpu.memory_space<vmem>>, vector<1x5x1x32xf32>
    %56 = vector.shape_cast %55 : vector<1x5x1x32xf32> to vector<5x32xf32>
    %57 = vector.shape_cast %54 : vector<5x32xf32> to vector<1x5x1x32xf32>
    tpu.vector_store %arg7[%c0_36, %c0_37, %c1, %c0_38], %57 {strides = array<i32>} : memref<1x5x32x32xf32, #tpu.memory_space<vmem>>, vector<1x5x1x32xf32>,
    %cst_39 = arith.constant 0.0322580636 : f32
    %58 = vector.broadcast %cst_39 : f32 to vector<5x32xf32>
    %59 = arith.mulf %58, %16 : vector<5x32xf32>
    %cst_40 = arith.constant 0.967741906 : f32
    %60 = vector.broadcast %cst_40 : f32 to vector<5x32xf32>
    %61 = arith.mulf %60, %18 : vector<5x32xf32>
    %62 = arith.addf %59, %61 : vector<5x32xf32>
    %c0_41 = arith.constant 0 : index
    %c0_42 = arith.constant 0 : index
    %c2 = arith.constant 2 : index
    %c0_43 = arith.constant 0 : index
    %63 = vector.load %arg7[%c0_41, %c0_42, %c2, %c0_43] : memref<1x5x32x32xf32, #tpu.memory_space<vmem>>, vector<1x5x1x32xf32>
    %64 = vector.shape_cast %63 : vector<1x5x1x32xf32> to vector<5x32xf32>
    %65 = vector.shape_cast %62 : vector<5x32xf32> to vector<1x5x1x32xf32>
    tpu.vector_store %arg7[%c0_41, %c0_42, %c2, %c0_43], %65 {strides = array<i32>} : memref<1x5x32x32xf32, #tpu.memory_space<vmem>>, vector<1x5x1x32xf32>,
    %cst_44 = arith.constant 0.54838711 : f32
    %66 = vector.broadcast %cst_44 : f32 to vector<5x32xf32>
    %67 = arith.mulf %66, %18 : vector<5x32xf32>
    %cst_45 = arith.constant 0.45161289 : f32
    %68 = vector.broadcast %cst_45 : f32 to vector<5x32xf32>
    %69 = arith.mulf %68, %20 : vector<5x32xf32>
    %70 = arith.addf %67, %69 : vector<5x32xf32>
    %c0_46 = arith.constant 0 : index
    %c0_47 = arith.constant 0 : index
    %c3 = arith.constant 3 : index
    %c0_48 = arith.constant 0 : index
    %71 = vector.load %arg7[%c0_46, %c0_47, %c3, %c0_48] : memref<1x5x32x32xf32, #tpu.memory_space<vmem>>, vector<1x5x1x32xf32>
    %72 = vector.shape_cast %71 : vector<1x5x1x32xf32> to vector<5x32xf32>
    %73 = vector.shape_cast %70 : vector<5x32xf32> to vector<1x5x1x32xf32>
    tpu.vector_store %arg7[%c0_46, %c0_47, %c3, %c0_48], %73 {strides = array<i32>} : memref<1x5x32x32xf32, #tpu.memory_space<vmem>>, vector<1x5x1x32xf32>,
    %cst_49 = arith.constant 0.0645161271 : f32
    %74 = vector.broadcast %cst_49 : f32 to vector<5x32xf32>
    %75 = arith.mulf %74, %18 : vector<5x32xf32>
    %cst_50 = arith.constant 0.935483872 : f32
    %76 = vector.broadcast %cst_50 : f32 to vector<5x32xf32>
    %77 = arith.mulf %76, %20 : vector<5x32xf32>
    %78 = arith.addf %75, %77 : vector<5x32xf32>
    %c0_51 = arith.constant 0 : index
    %c0_52 = arith.constant 0 : index
    %c4 = arith.constant 4 : index
    %c0_53 = arith.constant 0 : index
    %79 = vector.load %arg7[%c0_51, %c0_52, %c4, %c0_53] : memref<1x5x32x32xf32, #tpu.memory_space<vmem>>, vector<1x5x1x32xf32>
    %80 = vector.shape_cast %79 : vector<1x5x1x32xf32> to vector<5x32xf32>
    %81 = vector.shape_cast %78 : vector<5x32xf32> to vector<1x5x1x32xf32>
    tpu.vector_store %arg7[%c0_51, %c0_52, %c4, %c0_53], %81 {strides = array<i32>} : memref<1x5x32x32xf32, #tpu.memory_space<vmem>>, vector<1x5x1x32xf32>,
    %cst_54 = arith.constant 0.580645144 : f32
    %82 = vector.broadcast %cst_54 : f32 to vector<5x32xf32>
    %83 = arith.mulf %82, %20 : vector<5x32xf32>
    %cst_55 = arith.constant 0.419354826 : f32
    %84 = vector.broadcast %cst_55 : f32 to vector<5x32xf32>
    %85 = arith.mulf %84, %22 : vector<5x32xf32>
    %86 = arith.addf %83, %85 : vector<5x32xf32>
    %c0_56 = arith.constant 0 : index
    %c0_57 = arith.constant 0 : index
    %c5 = arith.constant 5 : index
    %c0_58 = arith.constant 0 : index
    %87 = vector.load %arg7[%c0_56, %c0_57, %c5, %c0_58] : memref<1x5x32x32xf32, #tpu.memory_space<vmem>>, vector<1x5x1x32xf32>
    %88 = vector.shape_cast %87 : vector<1x5x1x32xf32> to vector<5x32xf32>
    %89 = vector.shape_cast %86 : vector<5x32xf32> to vector<1x5x1x32xf32>
    tpu.vector_store %arg7[%c0_56, %c0_57, %c5, %c0_58], %89 {strides = array<i32>} : memref<1x5x32x32xf32, #tpu.memory_space<vmem>>, vector<1x5x1x32xf32>,
    %cst_59 = arith.constant 0.0967741906 : f32
    %90 = vector.broadcast %cst_59 : f32 to vector<5x32xf32>
    %91 = arith.mulf %90, %20 : vector<5x32xf32>
    %cst_60 = arith.constant 0.903225779 : f32
    %92 = vector.broadcast %cst_60 : f32 to vector<5x32xf32>
    %93 = arith.mulf %92, %22 : vector<5x32xf32>
    %94 = arith.addf %91, %93 : vector<5x32xf32>
    %c0_61 = arith.constant 0 : index
    %c0_62 = arith.constant 0 : index
    %c6 = arith.constant 6 : index
    %c0_63 = arith.constant 0 : index
    %95 = vector.load %arg7[%c0_61, %c0_62, %c6, %c0_63] : memref<1x5x32x32xf32, #tpu.memory_space<vmem>>, vector<1x5x1x32xf32>
    %96 = vector.shape_cast %95 : vector<1x5x1x32xf32> to vector<5x32xf32>
    %97 = vector.shape_cast %94 : vector<5x32xf32> to vector<1x5x1x32xf32>
    tpu.vector_store %arg7[%c0_61, %c0_62, %c6, %c0_63], %97 {strides = array<i32>} : memref<1x5x32x32xf32, #tpu.memory_space<vmem>>, vector<1x5x1x32xf32>,
    %cst_64 = arith.constant 0.612903237 : f32
    %98 = vector.broadcast %cst_64 : f32 to vector<5x32xf32>
    %99 = arith.mulf %98, %22 : vector<5x32xf32>
    %cst_65 = arith.constant 0.387096763 : f32
    %100 = vector.broadcast %cst_65 : f32 to vector<5x32xf32>
    %101 = arith.mulf %100, %24 : vector<5x32xf32>
    %102 = arith.addf %99, %101 : vector<5x32xf32>
    %c0_66 = arith.constant 0 : index
    %c0_67 = arith.constant 0 : index
    %c7 = arith.constant 7 : index
    %c0_68 = arith.constant 0 : index
    %103 = vector.load %arg7[%c0_66, %c0_67, %c7, %c0_68] : memref<1x5x32x32xf32, #tpu.memory_space<vmem>>, vector<1x5x1x32xf32>
    %104 = vector.shape_cast %103 : vector<1x5x1x32xf32> to vector<5x32xf32>
    %105 = vector.shape_cast %102 : vector<5x32xf32> to vector<1x5x1x32xf32>
    tpu.vector_store %arg7[%c0_66, %c0_67, %c7, %c0_68], %105 {strides = array<i32>} : memref<1x5x32x32xf32, #tpu.memory_space<vmem>>, vector<1x5x1x32xf32>,
    %cst_69 = arith.constant 0.129032254 : f32
    %106 = vector.broadcast %cst_69 : f32 to vector<5x32xf32>
    %107 = arith.mulf %106, %22 : vector<5x32xf32>
    %cst_70 = arith.constant 0.870967745 : f32
    %108 = vector.broadcast %cst_70 : f32 to vector<5x32xf32>
    %109 = arith.mulf %108, %24 : vector<5x32xf32>
    %110 = arith.addf %107, %109 : vector<5x32xf32>
    %c0_71 = arith.constant 0 : index
    %c0_72 = arith.constant 0 : index
    %c8 = arith.constant 8 : index
    %c0_73 = arith.constant 0 : index
    %111 = vector.load %arg7[%c0_71, %c0_72, %c8, %c0_73] : memref<1x5x32x32xf32, #tpu.memory_space<vmem>>, vector<1x5x1x32xf32>
    %112 = vector.shape_cast %111 : vector<1x5x1x32xf32> to vector<5x32xf32>
    %113 = vector.shape_cast %110 : vector<5x32xf32> to vector<1x5x1x32xf32>
    tpu.vector_store %arg7[%c0_71, %c0_72, %c8, %c0_73], %113 {strides = array<i32>} : memref<1x5x32x32xf32, #tpu.memory_space<vmem>>, vector<1x5x1x32xf32>,
    %cst_74 = arith.constant 0.645161271 : f32
    %114 = vector.broadcast %cst_74 : f32 to vector<5x32xf32>
    %115 = arith.mulf %114, %24 : vector<5x32xf32>
    %cst_75 = arith.constant 0.354838699 : f32
    %116 = vector.broadcast %cst_75 : f32 to vector<5x32xf32>
    %117 = arith.mulf %116, %26 : vector<5x32xf32>
    %118 = arith.addf %115, %117 : vector<5x32xf32>
    %c0_76 = arith.constant 0 : index
    %c0_77 = arith.constant 0 : index
    %c9 = arith.constant 9 : index
    %c0_78 = arith.constant 0 : index
    %119 = vector.load %arg7[%c0_76, %c0_77, %c9, %c0_78] : memref<1x5x32x32xf32, #tpu.memory_space<vmem>>, vector<1x5x1x32xf32>
    %120 = vector.shape_cast %119 : vector<1x5x1x32xf32> to vector<5x32xf32>
    %121 = vector.shape_cast %118 : vector<5x32xf32> to vector<1x5x1x32xf32>
    tpu.vector_store %arg7[%c0_76, %c0_77, %c9, %c0_78], %121 {strides = array<i32>} : memref<1x5x32x32xf32, #tpu.memory_space<vmem>>, vector<1x5x1x32xf32>,
    %cst_79 = arith.constant 0.161290318 : f32
    %122 = vector.broadcast %cst_79 : f32 to vector<5x32xf32>
    %123 = arith.mulf %122, %24 : vector<5x32xf32>
    %cst_80 = arith.constant 0.838709652 : f32
    %124 = vector.broadcast %cst_80 : f32 to vector<5x32xf32>
    %125 = arith.mulf %124, %26 : vector<5x32xf32>
    %126 = arith.addf %123, %125 : vector<5x32xf32>
    %c0_81 = arith.constant 0 : index
    %c0_82 = arith.constant 0 : index
    %c10 = arith.constant 10 : index
    %c0_83 = arith.constant 0 : index
    %127 = vector.load %arg7[%c0_81, %c0_82, %c10, %c0_83] : memref<1x5x32x32xf32, #tpu.memory_space<vmem>>, vector<1x5x1x32xf32>
    %128 = vector.shape_cast %127 : vector<1x5x1x32xf32> to vector<5x32xf32>
    %129 = vector.shape_cast %126 : vector<5x32xf32> to vector<1x5x1x32xf32>
    tpu.vector_store %arg7[%c0_81, %c0_82, %c10, %c0_83], %129 {strides = array<i32>} : memref<1x5x32x32xf32, #tpu.memory_space<vmem>>, vector<1x5x1x32xf32>,
    %cst_84 = arith.constant 0.677419364 : f32
    %130 = vector.broadcast %cst_84 : f32 to vector<5x32xf32>
    %131 = arith.mulf %130, %26 : vector<5x32xf32>
    %cst_85 = arith.constant 0.322580636 : f32
    %132 = vector.broadcast %cst_85 : f32 to vector<5x32xf32>
    %133 = arith.mulf %132, %28 : vector<5x32xf32>
    %134 = arith.addf %131, %133 : vector<5x32xf32>
    %c0_86 = arith.constant 0 : index
    %c0_87 = arith.constant 0 : index
    %c11 = arith.constant 11 : index
    %c0_88 = arith.constant 0 : index
    %135 = vector.load %arg7[%c0_86, %c0_87, %c11, %c0_88] : memref<1x5x32x32xf32, #tpu.memory_space<vmem>>, vector<1x5x1x32xf32>
    %136 = vector.shape_cast %135 : vector<1x5x1x32xf32> to vector<5x32xf32>
    %137 = vector.shape_cast %134 : vector<5x32xf32> to vector<1x5x1x32xf32>
    tpu.vector_store %arg7[%c0_86, %c0_87, %c11, %c0_88], %137 {strides = array<i32>} : memref<1x5x32x32xf32, #tpu.memory_space<vmem>>, vector<1x5x1x32xf32>,
    %cst_89 = arith.constant 0.193548381 : f32
    %138 = vector.broadcast %cst_89 : f32 to vector<5x32xf32>
    %139 = arith.mulf %138, %26 : vector<5x32xf32>
    %cst_90 = arith.constant 0.806451618 : f32
    %140 = vector.broadcast %cst_90 : f32 to vector<5x32xf32>
    %141 = arith.mulf %140, %28 : vector<5x32xf32>
    %142 = arith.addf %139, %141 : vector<5x32xf32>
    %c0_91 = arith.constant 0 : index
    %c0_92 = arith.constant 0 : index
    %c12 = arith.constant 12 : index
    %c0_93 = arith.constant 0 : index
    %143 = vector.load %arg7[%c0_91, %c0_92, %c12, %c0_93] : memref<1x5x32x32xf32, #tpu.memory_space<vmem>>, vector<1x5x1x32xf32>
    %144 = vector.shape_cast %143 : vector<1x5x1x32xf32> to vector<5x32xf32>
    %145 = vector.shape_cast %142 : vector<5x32xf32> to vector<1x5x1x32xf32>
    tpu.vector_store %arg7[%c0_91, %c0_92, %c12, %c0_93], %145 {strides = array<i32>} : memref<1x5x32x32xf32, #tpu.memory_space<vmem>>, vector<1x5x1x32xf32>,
    %cst_94 = arith.constant 0.709677398 : f32
    %146 = vector.broadcast %cst_94 : f32 to vector<5x32xf32>
    %147 = arith.mulf %146, %28 : vector<5x32xf32>
    %cst_95 = arith.constant 0.290322572 : f32
    %148 = vector.broadcast %cst_95 : f32 to vector<5x32xf32>
    %149 = arith.mulf %148, %30 : vector<5x32xf32>
    %150 = arith.addf %147, %149 : vector<5x32xf32>
    %c0_96 = arith.constant 0 : index
    %c0_97 = arith.constant 0 : index
    %c13 = arith.constant 13 : index
    %c0_98 = arith.constant 0 : index
    %151 = vector.load %arg7[%c0_96, %c0_97, %c13, %c0_98] : memref<1x5x32x32xf32, #tpu.memory_space<vmem>>, vector<1x5x1x32xf32>
    %152 = vector.shape_cast %151 : vector<1x5x1x32xf32> to vector<5x32xf32>
    %153 = vector.shape_cast %150 : vector<5x32xf32> to vector<1x5x1x32xf32>
    tpu.vector_store %arg7[%c0_96, %c0_97, %c13, %c0_98], %153 {strides = array<i32>} : memref<1x5x32x32xf32, #tpu.memory_space<vmem>>, vector<1x5x1x32xf32>,
    %cst_99 = arith.constant 0.225806445 : f32
    %154 = vector.broadcast %cst_99 : f32 to vector<5x32xf32>
    %155 = arith.mulf %154, %28 : vector<5x32xf32>
    %cst_100 = arith.constant 0.774193525 : f32
    %156 = vector.broadcast %cst_100 : f32 to vector<5x32xf32>
    %157 = arith.mulf %156, %30 : vector<5x32xf32>
    %158 = arith.addf %155, %157 : vector<5x32xf32>
    %c0_101 = arith.constant 0 : index
    %c0_102 = arith.constant 0 : index
    %c14 = arith.constant 14 : index
    %c0_103 = arith.constant 0 : index
    %159 = vector.load %arg7[%c0_101, %c0_102, %c14, %c0_103] : memref<1x5x32x32xf32, #tpu.memory_space<vmem>>, vector<1x5x1x32xf32>
    %160 = vector.shape_cast %159 : vector<1x5x1x32xf32> to vector<5x32xf32>
    %161 = vector.shape_cast %158 : vector<5x32xf32> to vector<1x5x1x32xf32>
    tpu.vector_store %arg7[%c0_101, %c0_102, %c14, %c0_103], %161 {strides = array<i32>} : memref<1x5x32x32xf32, #tpu.memory_space<vmem>>, vector<1x5x1x32xf32>,
    %cst_104 = arith.constant 0.741935492 : f32
    %162 = vector.broadcast %cst_104 : f32 to vector<5x32xf32>
    %163 = arith.mulf %162, %30 : vector<5x32xf32>
    %cst_105 = arith.constant 0.258064508 : f32
    %164 = vector.broadcast %cst_105 : f32 to vector<5x32xf32>
    %165 = arith.mulf %164, %32 : vector<5x32xf32>
    %166 = arith.addf %163, %165 : vector<5x32xf32>
    %c0_106 = arith.constant 0 : index
    %c0_107 = arith.constant 0 : index
    %c15 = arith.constant 15 : index
    %c0_108 = arith.constant 0 : index
    %167 = vector.load %arg7[%c0_106, %c0_107, %c15, %c0_108] : memref<1x5x32x32xf32, #tpu.memory_space<vmem>>, vector<1x5x1x32xf32>
    %168 = vector.shape_cast %167 : vector<1x5x1x32xf32> to vector<5x32xf32>
    %169 = vector.shape_cast %166 : vector<5x32xf32> to vector<1x5x1x32xf32>
    tpu.vector_store %arg7[%c0_106, %c0_107, %c15, %c0_108], %169 {strides = array<i32>} : memref<1x5x32x32xf32, #tpu.memory_space<vmem>>, vector<1x5x1x32xf32>,
    %cst_109 = arith.constant 0.258064508 : f32
    %170 = vector.broadcast %cst_109 : f32 to vector<5x32xf32>
    %171 = arith.mulf %170, %30 : vector<5x32xf32>
    %cst_110 = arith.constant 0.741935492 : f32
    %172 = vector.broadcast %cst_110 : f32 to vector<5x32xf32>
    %173 = arith.mulf %172, %32 : vector<5x32xf32>
    %174 = arith.addf %171, %173 : vector<5x32xf32>
    %c0_111 = arith.constant 0 : index
    %c0_112 = arith.constant 0 : index
    %c16 = arith.constant 16 : index
    %c0_113 = arith.constant 0 : index
    %175 = vector.load %arg7[%c0_111, %c0_112, %c16, %c0_113] : memref<1x5x32x32xf32, #tpu.memory_space<vmem>>, vector<1x5x1x32xf32>
    %176 = vector.shape_cast %175 : vector<1x5x1x32xf32> to vector<5x32xf32>
    %177 = vector.shape_cast %174 : vector<5x32xf32> to vector<1x5x1x32xf32>
    tpu.vector_store %arg7[%c0_111, %c0_112, %c16, %c0_113], %177 {strides = array<i32>} : memref<1x5x32x32xf32, #tpu.memory_space<vmem>>, vector<1x5x1x32xf32>,
    %cst_114 = arith.constant 0.774193525 : f32
    %178 = vector.broadcast %cst_114 : f32 to vector<5x32xf32>
    %179 = arith.mulf %178, %32 : vector<5x32xf32>
    %cst_115 = arith.constant 0.225806445 : f32
    %180 = vector.broadcast %cst_115 : f32 to vector<5x32xf32>
    %181 = arith.mulf %180, %34 : vector<5x32xf32>
    %182 = arith.addf %179, %181 : vector<5x32xf32>
    %c0_116 = arith.constant 0 : index
    %c0_117 = arith.constant 0 : index
    %c17 = arith.constant 17 : index
    %c0_118 = arith.constant 0 : index
    %183 = vector.load %arg7[%c0_116, %c0_117, %c17, %c0_118] : memref<1x5x32x32xf32, #tpu.memory_space<vmem>>, vector<1x5x1x32xf32>
    %184 = vector.shape_cast %183 : vector<1x5x1x32xf32> to vector<5x32xf32>
    %185 = vector.shape_cast %182 : vector<5x32xf32> to vector<1x5x1x32xf32>
    tpu.vector_store %arg7[%c0_116, %c0_117, %c17, %c0_118], %185 {strides = array<i32>} : memref<1x5x32x32xf32, #tpu.memory_space<vmem>>, vector<1x5x1x32xf32>,
    %cst_119 = arith.constant 0.290322572 : f32
    %186 = vector.broadcast %cst_119 : f32 to vector<5x32xf32>
    %187 = arith.mulf %186, %32 : vector<5x32xf32>
    %cst_120 = arith.constant 0.709677398 : f32
    %188 = vector.broadcast %cst_120 : f32 to vector<5x32xf32>
    %189 = arith.mulf %188, %34 : vector<5x32xf32>
    %190 = arith.addf %187, %189 : vector<5x32xf32>
    %c0_121 = arith.constant 0 : index
    %c0_122 = arith.constant 0 : index
    %c18 = arith.constant 18 : index
    %c0_123 = arith.constant 0 : index
    %191 = vector.load %arg7[%c0_121, %c0_122, %c18, %c0_123] : memref<1x5x32x32xf32, #tpu.memory_space<vmem>>, vector<1x5x1x32xf32>
    %192 = vector.shape_cast %191 : vector<1x5x1x32xf32> to vector<5x32xf32>
    %193 = vector.shape_cast %190 : vector<5x32xf32> to vector<1x5x1x32xf32>
    tpu.vector_store %arg7[%c0_121, %c0_122, %c18, %c0_123], %193 {strides = array<i32>} : memref<1x5x32x32xf32, #tpu.memory_space<vmem>>, vector<1x5x1x32xf32>,
    %cst_124 = arith.constant 0.806451618 : f32
    %194 = vector.broadcast %cst_124 : f32 to vector<5x32xf32>
    %195 = arith.mulf %194, %34 : vector<5x32xf32>
    %cst_125 = arith.constant 0.193548381 : f32
    %196 = vector.broadcast %cst_125 : f32 to vector<5x32xf32>
    %197 = arith.mulf %196, %36 : vector<5x32xf32>
    %198 = arith.addf %195, %197 : vector<5x32xf32>
    %c0_126 = arith.constant 0 : index
    %c0_127 = arith.constant 0 : index
    %c19 = arith.constant 19 : index
    %c0_128 = arith.constant 0 : index
    %199 = vector.load %arg7[%c0_126, %c0_127, %c19, %c0_128] : memref<1x5x32x32xf32, #tpu.memory_space<vmem>>, vector<1x5x1x32xf32>
    %200 = vector.shape_cast %199 : vector<1x5x1x32xf32> to vector<5x32xf32>
    %201 = vector.shape_cast %198 : vector<5x32xf32> to vector<1x5x1x32xf32>
    tpu.vector_store %arg7[%c0_126, %c0_127, %c19, %c0_128], %201 {strides = array<i32>} : memref<1x5x32x32xf32, #tpu.memory_space<vmem>>, vector<1x5x1x32xf32>,
    %cst_129 = arith.constant 0.322580636 : f32
    %202 = vector.broadcast %cst_129 : f32 to vector<5x32xf32>
    %203 = arith.mulf %202, %34 : vector<5x32xf32>
    %cst_130 = arith.constant 0.677419364 : f32
    %204 = vector.broadcast %cst_130 : f32 to vector<5x32xf32>
    %205 = arith.mulf %204, %36 : vector<5x32xf32>
    %206 = arith.addf %203, %205 : vector<5x32xf32>
    %c0_131 = arith.constant 0 : index
    %c0_132 = arith.constant 0 : index
    %c20 = arith.constant 20 : index
    %c0_133 = arith.constant 0 : index
    %207 = vector.load %arg7[%c0_131, %c0_132, %c20, %c0_133] : memref<1x5x32x32xf32, #tpu.memory_space<vmem>>, vector<1x5x1x32xf32>
    %208 = vector.shape_cast %207 : vector<1x5x1x32xf32> to vector<5x32xf32>
    %209 = vector.shape_cast %206 : vector<5x32xf32> to vector<1x5x1x32xf32>
    tpu.vector_store %arg7[%c0_131, %c0_132, %c20, %c0_133], %209 {strides = array<i32>} : memref<1x5x32x32xf32, #tpu.memory_space<vmem>>, vector<1x5x1x32xf32>,
    %cst_134 = arith.constant 0.838709652 : f32
    %210 = vector.broadcast %cst_134 : f32 to vector<5x32xf32>
    %211 = arith.mulf %210, %36 : vector<5x32xf32>
    %cst_135 = arith.constant 0.161290318 : f32
    %212 = vector.broadcast %cst_135 : f32 to vector<5x32xf32>
    %213 = arith.mulf %212, %38 : vector<5x32xf32>
    %214 = arith.addf %211, %213 : vector<5x32xf32>
    %c0_136 = arith.constant 0 : index
    %c0_137 = arith.constant 0 : index
    %c21 = arith.constant 21 : index
    %c0_138 = arith.constant 0 : index
    %215 = vector.load %arg7[%c0_136, %c0_137, %c21, %c0_138] : memref<1x5x32x32xf32, #tpu.memory_space<vmem>>, vector<1x5x1x32xf32>
    %216 = vector.shape_cast %215 : vector<1x5x1x32xf32> to vector<5x32xf32>
    %217 = vector.shape_cast %214 : vector<5x32xf32> to vector<1x5x1x32xf32>
    tpu.vector_store %arg7[%c0_136, %c0_137, %c21, %c0_138], %217 {strides = array<i32>} : memref<1x5x32x32xf32, #tpu.memory_space<vmem>>, vector<1x5x1x32xf32>,
    %cst_139 = arith.constant 0.354838699 : f32
    %218 = vector.broadcast %cst_139 : f32 to vector<5x32xf32>
    %219 = arith.mulf %218, %36 : vector<5x32xf32>
    %cst_140 = arith.constant 0.645161271 : f32
    %220 = vector.broadcast %cst_140 : f32 to vector<5x32xf32>
    %221 = arith.mulf %220, %38 : vector<5x32xf32>
    %222 = arith.addf %219, %221 : vector<5x32xf32>
    %c0_141 = arith.constant 0 : index
    %c0_142 = arith.constant 0 : index
    %c22 = arith.constant 22 : index
    %c0_143 = arith.constant 0 : index
    %223 = vector.load %arg7[%c0_141, %c0_142, %c22, %c0_143] : memref<1x5x32x32xf32, #tpu.memory_space<vmem>>, vector<1x5x1x32xf32>
    %224 = vector.shape_cast %223 : vector<1x5x1x32xf32> to vector<5x32xf32>
    %225 = vector.shape_cast %222 : vector<5x32xf32> to vector<1x5x1x32xf32>
    tpu.vector_store %arg7[%c0_141, %c0_142, %c22, %c0_143], %225 {strides = array<i32>} : memref<1x5x32x32xf32, #tpu.memory_space<vmem>>, vector<1x5x1x32xf32>,
    %cst_144 = arith.constant 0.870967745 : f32
    %226 = vector.broadcast %cst_144 : f32 to vector<5x32xf32>
    %227 = arith.mulf %226, %38 : vector<5x32xf32>
    %cst_145 = arith.constant 0.129032254 : f32
    %228 = vector.broadcast %cst_145 : f32 to vector<5x32xf32>
    %229 = arith.mulf %228, %40 : vector<5x32xf32>
    %230 = arith.addf %227, %229 : vector<5x32xf32>
    %c0_146 = arith.constant 0 : index
    %c0_147 = arith.constant 0 : index
    %c23 = arith.constant 23 : index
    %c0_148 = arith.constant 0 : index
    %231 = vector.load %arg7[%c0_146, %c0_147, %c23, %c0_148] : memref<1x5x32x32xf32, #tpu.memory_space<vmem>>, vector<1x5x1x32xf32>
    %232 = vector.shape_cast %231 : vector<1x5x1x32xf32> to vector<5x32xf32>
    %233 = vector.shape_cast %230 : vector<5x32xf32> to vector<1x5x1x32xf32>
    tpu.vector_store %arg7[%c0_146, %c0_147, %c23, %c0_148], %233 {strides = array<i32>} : memref<1x5x32x32xf32, #tpu.memory_space<vmem>>, vector<1x5x1x32xf32>,
    %cst_149 = arith.constant 0.387096763 : f32
    %234 = vector.broadcast %cst_149 : f32 to vector<5x32xf32>
    %235 = arith.mulf %234, %38 : vector<5x32xf32>
    %cst_150 = arith.constant 0.612903237 : f32
    %236 = vector.broadcast %cst_150 : f32 to vector<5x32xf32>
    %237 = arith.mulf %236, %40 : vector<5x32xf32>
    %238 = arith.addf %235, %237 : vector<5x32xf32>
    %c0_151 = arith.constant 0 : index
    %c0_152 = arith.constant 0 : index
    %c24 = arith.constant 24 : index
    %c0_153 = arith.constant 0 : index
    %239 = vector.load %arg7[%c0_151, %c0_152, %c24, %c0_153] : memref<1x5x32x32xf32, #tpu.memory_space<vmem>>, vector<1x5x1x32xf32>
    %240 = vector.shape_cast %239 : vector<1x5x1x32xf32> to vector<5x32xf32>
    %241 = vector.shape_cast %238 : vector<5x32xf32> to vector<1x5x1x32xf32>
    tpu.vector_store %arg7[%c0_151, %c0_152, %c24, %c0_153], %241 {strides = array<i32>} : memref<1x5x32x32xf32, #tpu.memory_space<vmem>>, vector<1x5x1x32xf32>,
    %cst_154 = arith.constant 0.903225779 : f32
    %242 = vector.broadcast %cst_154 : f32 to vector<5x32xf32>
    %243 = arith.mulf %242, %40 : vector<5x32xf32>
    %cst_155 = arith.constant 0.0967741906 : f32
    %244 = vector.broadcast %cst_155 : f32 to vector<5x32xf32>
    %245 = arith.mulf %244, %42 : vector<5x32xf32>
    %246 = arith.addf %243, %245 : vector<5x32xf32>
    %c0_156 = arith.constant 0 : index
    %c0_157 = arith.constant 0 : index
    %c25 = arith.constant 25 : index
    %c0_158 = arith.constant 0 : index
    %247 = vector.load %arg7[%c0_156, %c0_157, %c25, %c0_158] : memref<1x5x32x32xf32, #tpu.memory_space<vmem>>, vector<1x5x1x32xf32>
    %248 = vector.shape_cast %247 : vector<1x5x1x32xf32> to vector<5x32xf32>
    %249 = vector.shape_cast %246 : vector<5x32xf32> to vector<1x5x1x32xf32>
    tpu.vector_store %arg7[%c0_156, %c0_157, %c25, %c0_158], %249 {strides = array<i32>} : memref<1x5x32x32xf32, #tpu.memory_space<vmem>>, vector<1x5x1x32xf32>,
    %cst_159 = arith.constant 0.419354826 : f32
    %250 = vector.broadcast %cst_159 : f32 to vector<5x32xf32>
    %251 = arith.mulf %250, %40 : vector<5x32xf32>
    %cst_160 = arith.constant 0.580645144 : f32
    %252 = vector.broadcast %cst_160 : f32 to vector<5x32xf32>
    %253 = arith.mulf %252, %42 : vector<5x32xf32>
    %254 = arith.addf %251, %253 : vector<5x32xf32>
    %c0_161 = arith.constant 0 : index
    %c0_162 = arith.constant 0 : index
    %c26 = arith.constant 26 : index
    %c0_163 = arith.constant 0 : index
    %255 = vector.load %arg7[%c0_161, %c0_162, %c26, %c0_163] : memref<1x5x32x32xf32, #tpu.memory_space<vmem>>, vector<1x5x1x32xf32>
    %256 = vector.shape_cast %255 : vector<1x5x1x32xf32> to vector<5x32xf32>
    %257 = vector.shape_cast %254 : vector<5x32xf32> to vector<1x5x1x32xf32>
    tpu.vector_store %arg7[%c0_161, %c0_162, %c26, %c0_163], %257 {strides = array<i32>} : memref<1x5x32x32xf32, #tpu.memory_space<vmem>>, vector<1x5x1x32xf32>,
    %cst_164 = arith.constant 0.935483872 : f32
    %258 = vector.broadcast %cst_164 : f32 to vector<5x32xf32>
    %259 = arith.mulf %258, %42 : vector<5x32xf32>
    %cst_165 = arith.constant 0.0645161271 : f32
    %260 = vector.broadcast %cst_165 : f32 to vector<5x32xf32>
    %261 = arith.mulf %260, %44 : vector<5x32xf32>
    %262 = arith.addf %259, %261 : vector<5x32xf32>
    %c0_166 = arith.constant 0 : index
    %c0_167 = arith.constant 0 : index
    %c27 = arith.constant 27 : index
    %c0_168 = arith.constant 0 : index
    %263 = vector.load %arg7[%c0_166, %c0_167, %c27, %c0_168] : memref<1x5x32x32xf32, #tpu.memory_space<vmem>>, vector<1x5x1x32xf32>
    %264 = vector.shape_cast %263 : vector<1x5x1x32xf32> to vector<5x32xf32>
    %265 = vector.shape_cast %262 : vector<5x32xf32> to vector<1x5x1x32xf32>
    tpu.vector_store %arg7[%c0_166, %c0_167, %c27, %c0_168], %265 {strides = array<i32>} : memref<1x5x32x32xf32, #tpu.memory_space<vmem>>, vector<1x5x1x32xf32>,
    %cst_169 = arith.constant 0.45161289 : f32
    %266 = vector.broadcast %cst_169 : f32 to vector<5x32xf32>
    %267 = arith.mulf %266, %42 : vector<5x32xf32>
    %cst_170 = arith.constant 0.54838711 : f32
    %268 = vector.broadcast %cst_170 : f32 to vector<5x32xf32>
    %269 = arith.mulf %268, %44 : vector<5x32xf32>
    %270 = arith.addf %267, %269 : vector<5x32xf32>
    %c0_171 = arith.constant 0 : index
    %c0_172 = arith.constant 0 : index
    %c28 = arith.constant 28 : index
    %c0_173 = arith.constant 0 : index
    %271 = vector.load %arg7[%c0_171, %c0_172, %c28, %c0_173] : memref<1x5x32x32xf32, #tpu.memory_space<vmem>>, vector<1x5x1x32xf32>
    %272 = vector.shape_cast %271 : vector<1x5x1x32xf32> to vector<5x32xf32>
    %273 = vector.shape_cast %270 : vector<5x32xf32> to vector<1x5x1x32xf32>
    tpu.vector_store %arg7[%c0_171, %c0_172, %c28, %c0_173], %273 {strides = array<i32>} : memref<1x5x32x32xf32, #tpu.memory_space<vmem>>, vector<1x5x1x32xf32>,
    %cst_174 = arith.constant 0.967741906 : f32
    %274 = vector.broadcast %cst_174 : f32 to vector<5x32xf32>
    %275 = arith.mulf %274, %44 : vector<5x32xf32>
    %cst_175 = arith.constant 0.0322580636 : f32
    %276 = vector.broadcast %cst_175 : f32 to vector<5x32xf32>
    %277 = arith.mulf %276, %46 : vector<5x32xf32>
    %278 = arith.addf %275, %277 : vector<5x32xf32>
    %c0_176 = arith.constant 0 : index
    %c0_177 = arith.constant 0 : index
    %c29 = arith.constant 29 : index
    %c0_178 = arith.constant 0 : index
    %279 = vector.load %arg7[%c0_176, %c0_177, %c29, %c0_178] : memref<1x5x32x32xf32, #tpu.memory_space<vmem>>, vector<1x5x1x32xf32>
    %280 = vector.shape_cast %279 : vector<1x5x1x32xf32> to vector<5x32xf32>
    %281 = vector.shape_cast %278 : vector<5x32xf32> to vector<1x5x1x32xf32>
    tpu.vector_store %arg7[%c0_176, %c0_177, %c29, %c0_178], %281 {strides = array<i32>} : memref<1x5x32x32xf32, #tpu.memory_space<vmem>>, vector<1x5x1x32xf32>,
    %cst_179 = arith.constant 0.483870953 : f32
    %282 = vector.broadcast %cst_179 : f32 to vector<5x32xf32>
    %283 = arith.mulf %282, %44 : vector<5x32xf32>
    %cst_180 = arith.constant 5.161290e-01 : f32
    %284 = vector.broadcast %cst_180 : f32 to vector<5x32xf32>
    %285 = arith.mulf %284, %46 : vector<5x32xf32>
    %286 = arith.addf %283, %285 : vector<5x32xf32>
    %c0_181 = arith.constant 0 : index
    %c0_182 = arith.constant 0 : index
    %c30 = arith.constant 30 : index
    %c0_183 = arith.constant 0 : index
    %287 = vector.load %arg7[%c0_181, %c0_182, %c30, %c0_183] : memref<1x5x32x32xf32, #tpu.memory_space<vmem>>, vector<1x5x1x32xf32>
    %288 = vector.shape_cast %287 : vector<1x5x1x32xf32> to vector<5x32xf32>
    %289 = vector.shape_cast %286 : vector<5x32xf32> to vector<1x5x1x32xf32>
    tpu.vector_store %arg7[%c0_181, %c0_182, %c30, %c0_183], %289 {strides = array<i32>} : memref<1x5x32x32xf32, #tpu.memory_space<vmem>>, vector<1x5x1x32xf32>,
    %cst_184 = arith.constant 0.000000e+00 : f32
    %290 = vector.broadcast %cst_184 : f32 to vector<5x32xf32>
    %291 = arith.mulf %290, %44 : vector<5x32xf32>
    %cst_185 = arith.constant 1.000000e+00 : f32
    %292 = vector.broadcast %cst_185 : f32 to vector<5x32xf32>
    %293 = arith.mulf %292, %46 : vector<5x32xf32>
    %294 = arith.addf %291, %293 : vector<5x32xf32>
    %c0_186 = arith.constant 0 : index
    %c0_187 = arith.constant 0 : index
    %c31 = arith.constant 31 : index
    %c0_188 = arith.constant 0 : index
    %295 = vector.load %arg7[%c0_186, %c0_187, %c31, %c0_188] : memref<1x5x32x32xf32, #tpu.memory_space<vmem>>, vector<1x5x1x32xf32>
    %296 = vector.shape_cast %295 : vector<1x5x1x32xf32> to vector<5x32xf32>
    %297 = vector.shape_cast %294 : vector<5x32xf32> to vector<1x5x1x32xf32>
    tpu.vector_store %arg7[%c0_186, %c0_187, %c31, %c0_188], %297 {strides = array<i32>} : memref<1x5x32x32xf32, #tpu.memory_space<vmem>>, vector<1x5x1x32xf32>,
    return
  }
  func.func @transform_0(%arg0: i32) -> (i32, i32, i32) {
    %c0_i32 = arith.constant 0 : i32
    %c0_i32_0 = arith.constant 0 : i32
    %c0_i32_1 = arith.constant 0 : i32
    return %arg0, %c0_i32, %c0_i32_0 : i32, i32, i32
  }
  func.func @transform_1(%arg0: i32) -> (i32, i32) {
    %c0_i32 = arith.constant 0 : i32
    %c0_i32_0 = arith.constant 0 : i32
    %c0_i32_1 = arith.constant 0 : i32
    return %c0_i32, %c0_i32_0 : i32, i32
  }
  func.func @transform_2(%arg0: i32) -> (i32, i32) {
    %c0_i32 = arith.constant 0 : i32
    %c0_i32_0 = arith.constant 0 : i32
    %c0_i32_1 = arith.constant 0 : i32
    return %c0_i32, %c0_i32_0 : i32, i32
  }
  func.func @transform_3(%arg0: i32) -> (i32, i32) {
    %c0_i32 = arith.constant 0 : i32
    %c0_i32_0 = arith.constant 0 : i32
    %c0_i32_1 = arith.constant 0 : i32
    return %c0_i32, %c0_i32_0 : i32, i32
  }
  func.func @transform_4(%arg0: i32) -> (i32, i32) {
    %c0_i32 = arith.constant 0 : i32
    %c0_i32_0 = arith.constant 0 : i32
    %c0_i32_1 = arith.constant 0 : i32
    return %c0_i32, %c0_i32_0 : i32, i32
  }
  func.func @transform_5(%arg0: i32) -> (i32, i32) {
    %c0_i32 = arith.constant 0 : i32
    %c0_i32_0 = arith.constant 0 : i32
    %c0_i32_1 = arith.constant 0 : i32
    return %c0_i32, %c0_i32_0 : i32, i32
  }
  func.func @transform_6(%arg0: i32) -> (i32, i32, i32, i32) {
    %c0_i32 = arith.constant 0 : i32
    %c0_i32_0 = arith.constant 0 : i32
    %c0_i32_1 = arith.constant 0 : i32
    %c0_i32_2 = arith.constant 0 : i32
    return %arg0, %c0_i32, %c0_i32_0, %c0_i32_1 : i32, i32, i32, i32
  }
}

</mosaic_0001>

<llo_original>
// kernel: tpu_custom_call.1
$region0: #{tpu_custom_call.1}
  #allocation0 [shape = 'u32[]', space=smem, size = 0x4, offset = 0x4, fixed_abs, tag = 'smem constant byte address 0x4 - core index']
  #allocation1 [shape = 'u32[144,128]{1,0:T(1,128)}', space=vmem, size = 0x12000, scoped, tag = 'internal scratch']
  %s0 = inlined_call_operand.vmem [shape: f32[2,36,256], index: 0, kind: input, shape index: {}]
  %s1 = inlined_call_operand.vmem [shape: f32[64,36], index: 1, kind: input, shape index: {}]
  %s2 = inlined_call_operand.vmem [shape: f32[64,1], index: 2, kind: input, shape index: {}]
  %s3 = inlined_call_operand.vmem [shape: f32[5,64], index: 3, kind: input, shape index: {}]
  %s4 = inlined_call_operand.vmem [shape: f32[5,1], index: 4, kind: input, shape index: {}]
  %s5 = inlined_call_operand.vmem [shape: f32[16,32], index: 5, kind: input, shape index: {}]
  %s6 = inlined_call_operand.hbm [shape: f32[2,5,32,32], index: 6, kind: output, shape index: {}]
  %s7 = sld [smem:[#allocation0]]
  $region57: #{tpu_custom_call.1} parent=0
    _
  %s9 = ssub.s32 1, %s7
  %s10 = scalar_select 0, %s9, %s7
  $region1: #{tpu_custom_call.1} parent=0
    #allocation2 [shape = 'u8[163840]{0}', space=vmem, size = 0x28000, scoped, tag = 'output window, operand 0']
    #allocation3 [shape = 's32[2]{0}', space=sflag, size = 0x8, scoped, tag = 'scoped memory for tpu_custom_call.1']
    %11 = vsyncpa [#allocation3], 0
    %s12 = scalar_lea.sflag [#allocation3], 1
    %13 = vsyncpa %s12, 0
    loop: start=0, step=1, limit=4
    $region2: #{tpu_custom_call.1} parent=1 // loop_pre_header
      _
    $region3: #{tpu_custom_call.1} parent=1 // loop_header
      %s15 = sphi 0, %s19
      %p16 = scmp.ge.s32.totalorder %s15, 4
      %s25 = sphi 0, %s27
      %s28 = sphi 0, %s25
      %s29 = sphi 0, %s28
      %s45 = sphi 0, %s29
      %s49 = sphi 0, %s49
      %s51 = sphi 0, %s49
      %s52 = sphi 0, %s51
      %s66 = sphi 0, %s52
      %s70 = sphi 0, %s70
      %s72 = sphi 0, %s70
      %s73 = sphi 0, %s72
      %s87 = sphi 0, %s73
      %s91 = sphi 0, %s91
      %s93 = sphi 0, %s91
      %s94 = sphi 0, %s93
      %s108 = sphi 0, %s94
      %s112 = sphi 0, %s112
      %s114 = sphi 0, %s112
      %s115 = sphi 0, %s114
      %s129 = sphi 0, %s115
      %s133 = sphi 0, %s133
      %s135 = sphi 0, %s133
      %s136 = sphi 0, %s135
      %s150 = sphi 0, %s136
      %s156 = sphi 0, %s158
      %s159 = sphi 0, %s156
      %s160 = sphi 0, %s159
      %s176 = sphi 0, %s160
    $region4: #{tpu_custom_call.1} parent=1 // loop_header_branch
      %18 = sbr.rel (%p16) target = $region8
    $region5: #{tpu_custom_call.1} parent=1 // loop_body
      %s20 = ssub.s32 %s15, 1
      %s21 = ssub.s32 %s15, 2
      %s22 = sadd.s32 %s15, 1
      %s23 = ssub.s32 %s15, %s22
      %p24 = scmp.eq.s32.totalorder %s23, 0
      %s26 = sadd.s32 %s25, 1
      %s27 = scalar_select %p24, %s25, %s26
      %p30 = pneg %p24
      %p31 = scmp.eq.s32.totalorder %s15, 1
      %p32 = por %p30, %p31
      %p33 = scmp.ne.s32.totalorder %s25, %s28
      %p34 = scmp.eq.s32.totalorder %s15, 0
      %p35 = por %p33, %p34
      %p36 = scmp.ne.s32.totalorder %s25, %s28
      %p37 = scmp.eq.s32.totalorder %s20, 1
      %p38 = por %p36, %p37
      %p39 = scmp.ne.s32.totalorder %s28, %s29
      %p40 = scmp.eq.s32.totalorder %s20, 0
      %p41 = por %p39, %p40
      %p42 = scmp.ne.s32.totalorder %s28, %s29
      %p43 = scmp.eq.s32.totalorder %s21, 1
      %p44 = por %p42, %p43
      %p46 = scmp.ne.s32.totalorder %s29, %s45
      %p47 = scmp.eq.s32.totalorder %s21, 0
      %p48 = por %p46, %p47
      %s50 = sadd.s32 %s49, 1
      %p53 = scmp.eq.s32.totalorder %s15, 1
      %p54 = scmp.ne.s32.totalorder %s49, %s51
      %p55 = scmp.eq.s32.totalorder %s15, 0
      %p56 = por %p54, %p55
      %p57 = scmp.ne.s32.totalorder %s49, %s51
      %p58 = scmp.eq.s32.totalorder %s20, 1
      %p59 = por %p57, %p58
      %p60 = scmp.ne.s32.totalorder %s51, %s52
      %p61 = scmp.eq.s32.totalorder %s20, 0
      %p62 = por %p60, %p61
      %p63 = scmp.ne.s32.totalorder %s51, %s52
      %p64 = scmp.eq.s32.totalorder %s21, 1
      %p65 = por %p63, %p64
      %p67 = scmp.ne.s32.totalorder %s52, %s66
      %p68 = scmp.eq.s32.totalorder %s21, 0
      %p69 = por %p67, %p68
      %s71 = sadd.s32 %s70, 1
      %p74 = scmp.eq.s32.totalorder %s15, 1
      %p75 = scmp.ne.s32.totalorder %s70, %s72
      %p76 = scmp.eq.s32.totalorder %s15, 0
      %p77 = por %p75, %p76
      %p78 = scmp.ne.s32.totalorder %s70, %s72
      %p79 = scmp.eq.s32.totalorder %s20, 1
      %p80 = por %p78, %p79
      %p81 = scmp.ne.s32.totalorder %s72, %s73
      %p82 = scmp.eq.s32.totalorder %s20, 0
      %p83 = por %p81, %p82
      %p84 = scmp.ne.s32.totalorder %s72, %s73
      %p85 = scmp.eq.s32.totalorder %s21, 1
      %p86 = por %p84, %p85
      %p88 = scmp.ne.s32.totalorder %s73, %s87
      %p89 = scmp.eq.s32.totalorder %s21, 0
      %p90 = por %p88, %p89
      %s92 = sadd.s32 %s91, 1
      %p95 = scmp.eq.s32.totalorder %s15, 1
      %p96 = scmp.ne.s32.totalorder %s91, %s93
      %p97 = scmp.eq.s32.totalorder %s15, 0
      %p98 = por %p96, %p97
      %p99 = scmp.ne.s32.totalorder %s91, %s93
      %p100 = scmp.eq.s32.totalorder %s20, 1
      %p101 = por %p99, %p100
      %p102 = scmp.ne.s32.totalorder %s93, %s94
      %p103 = scmp.eq.s32.totalorder %s20, 0
      %p104 = por %p102, %p103
      %p105 = scmp.ne.s32.totalorder %s93, %s94
      %p106 = scmp.eq.s32.totalorder %s21, 1
      %p107 = por %p105, %p106
      %p109 = scmp.ne.s32.totalorder %s94, %s108
      %p110 = scmp.eq.s32.totalorder %s21, 0
      %p111 = por %p109, %p110
      %s113 = sadd.s32 %s112, 1
      %p116 = scmp.eq.s32.totalorder %s15, 1
      %p117 = scmp.ne.s32.totalorder %s112, %s114
      %p118 = scmp.eq.s32.totalorder %s15, 0
      %p119 = por %p117, %p118
      %p120 = scmp.ne.s32.totalorder %s112, %s114
      %p121 = scmp.eq.s32.totalorder %s20, 1
      %p122 = por %p120, %p121
      %p123 = scmp.ne.s32.totalorder %s114, %s115
      %p124 = scmp.eq.s32.totalorder %s20, 0
      %p125 = por %p123, %p124
      %p126 = scmp.ne.s32.totalorder %s114, %s115
      %p127 = scmp.eq.s32.totalorder %s21, 1
      %p128 = por %p126, %p127
      %p130 = scmp.ne.s32.totalorder %s115, %s129
      %p131 = scmp.eq.s32.totalorder %s21, 0
      %p132 = por %p130, %p131
      %s134 = sadd.s32 %s133, 1
      %p137 = scmp.eq.s32.totalorder %s15, 1
      %p138 = scmp.ne.s32.totalorder %s133, %s135
      %p139 = scmp.eq.s32.totalorder %s15, 0
      %p140 = por %p138, %p139
      %p141 = scmp.ne.s32.totalorder %s133, %s135
      %p142 = scmp.eq.s32.totalorder %s20, 1
      %p143 = por %p141, %p142
      %p144 = scmp.ne.s32.totalorder %s135, %s136
      %p145 = scmp.eq.s32.totalorder %s20, 0
      %p146 = por %p144, %p145
      %p147 = scmp.ne.s32.totalorder %s135, %s136
      %p148 = scmp.eq.s32.totalorder %s21, 1
      %p149 = por %p147, %p148
      %p151 = scmp.ne.s32.totalorder %s136, %s150
      %p152 = scmp.eq.s32.totalorder %s21, 0
      %p153 = por %p151, %p152
      %s154 = ssub.s32 %s15, %s22
      %p155 = scmp.eq.s32.totalorder %s154, 0
      %s157 = sadd.s32 %s156, 1
      %s158 = scalar_select %p155, %s156, %s157
      %p161 = pneg %p155
      %p162 = scmp.eq.s32.totalorder %s15, 1
      %p163 = por %p161, %p162
      %p164 = scmp.ne.s32.totalorder %s156, %s159
      %p165 = scmp.eq.s32.totalorder %s15, 0
      %p166 = por %p164, %p165
      %p167 = scmp.ne.s32.totalorder %s156, %s159
      %p168 = scmp.eq.s32.totalorder %s20, 1
      %p169 = por %p167, %p168
      %p170 = scmp.ne.s32.totalorder %s159, %s160
      %p171 = scmp.eq.s32.totalorder %s20, 0
      %p172 = por %p170, %p171
      %p173 = scmp.ne.s32.totalorder %s159, %s160
      %p174 = scmp.eq.s32.totalorder %s21, 1
      %p175 = por %p173, %p174
      %p177 = scmp.ne.s32.totalorder %s160, %s176
      %p178 = scmp.eq.s32.totalorder %s21, 0
      %p179 = por %p177, %p178
      %p180 = scmp.le.s32.totalorder 1, %s15
      %p181 = scmp.lt.s32.totalorder %s15, 3
      %p182 = pnand %p180, %p181
      %p183 = pneg %p182
      // Predicated region
      $region9: #{tpu_custom_call.1} parent=5 // pred_check
        _
      $region10: #{tpu_custom_call.1} parent=5 // pred_check_branch
        %185 = sbr.rel (%p182) target = $region12
      $region11: #{tpu_custom_call.1} parent=5 // pred_region
        %s186 = ssub.s32 %s15, 1
        // Predicated region
        $region13: #{tpu_custom_call.1} parent=11 // pred_check
          %p187 = pneg %p62
        $region14: #{tpu_custom_call.1} parent=11 // pred_check_branch
          %189 = sbr.rel (%p187) target = $region16
        $region15: #{tpu_custom_call.1} parent=11 // pred_region
          _
        $region16: #{tpu_custom_call.1} parent=11 // pred_fallthru
          _
        // Predicated region
        $region17: #{tpu_custom_call.1} parent=11 // pred_check
          %p190 = pneg %p83
        $region18: #{tpu_custom_call.1} parent=11 // pred_check_branch
          %192 = sbr.rel (%p190) target = $region20
        $region19: #{tpu_custom_call.1} parent=11 // pred_region
          _
        $region20: #{tpu_custom_call.1} parent=11 // pred_fallthru
          _
        // Predicated region
        $region21: #{tpu_custom_call.1} parent=11 // pred_check
          %p193 = pneg %p104
        $region22: #{tpu_custom_call.1} parent=11 // pred_check_branch
          %195 = sbr.rel (%p193) target = $region24
        $region23: #{tpu_custom_call.1} parent=11 // pred_region
          _
        $region24: #{tpu_custom_call.1} parent=11 // pred_fallthru
          _
        // Predicated region
        $region25: #{tpu_custom_call.1} parent=11 // pred_check
          %p196 = pneg %p125
        $region26: #{tpu_custom_call.1} parent=11 // pred_check_branch
          %198 = sbr.rel (%p196) target = $region28
        $region27: #{tpu_custom_call.1} parent=11 // pred_region
          _
        $region28: #{tpu_custom_call.1} parent=11 // pred_fallthru
          _
        // Predicated region
        $region29: #{tpu_custom_call.1} parent=11 // pred_check
          %p199 = pneg %p146
        $region30: #{tpu_custom_call.1} parent=11 // pred_check_branch
          %201 = sbr.rel (%p199) target = $region32
        $region31: #{tpu_custom_call.1} parent=11 // pred_region
          _
        $region32: #{tpu_custom_call.1} parent=11 // pred_fallthru
          _
      $region12: #{tpu_custom_call.1} parent=5 // pred_fallthru
        _
      %p202 = scmp.lt.s32.totalorder %s15, 2
      // Predicated region
      $region33: #{tpu_custom_call.1} parent=5 // pred_check
        %p203 = pneg %p202
      $region34: #{tpu_custom_call.1} parent=5 // pred_check_branch
        %205 = sbr.rel (%p203) target = $region36
      $region35: #{tpu_custom_call.1} parent=5 // pred_region
        // Predicated region
        $region37: #{tpu_custom_call.1} parent=35 // pred_check
          %p206 = pneg %p35
        $region38: #{tpu_custom_call.1} parent=35 // pred_check_branch
          %208 = sbr.rel (%p206) target = $region40
        $region39: #{tpu_custom_call.1} parent=35 // pred_region
          %p209 = scmp.lt.s32.totalorder %s15, 1
          %s210 = scalar_select %p209, %s15, 1
          %s211 = smul.addr %s210, 10
          %s212 = smul.addr %s211, 8
          %s213 = scalar_lea.vmem %s0, %s212
        $region40: #{tpu_custom_call.1} parent=35 // pred_fallthru
          _
      $region36: #{tpu_custom_call.1} parent=5 // pred_fallthru
        _
      %p214 = scmp.le.s32.totalorder 1, %s15
      %p215 = scmp.lt.s32.totalorder %s15, 3
      %p216 = pnand %p214, %p215
      %p217 = pneg %p216
      // Predicated region
      $region41: #{tpu_custom_call.1} parent=5 // pred_check
        _
      $region42: #{tpu_custom_call.1} parent=5 // pred_check_branch
        %219 = sbr.rel (%p216) target = $region44
      $region43: #{tpu_custom_call.1} parent=5 // pred_region
        %s220 = ssub.s32 %s15, 1
        %p221 = scmp.lt.s32.totalorder %s20, 1
        %s222 = scalar_select %p221, %s20, 1
        %s223 = smul.addr %s222, 10
        %s224 = smul.addr %s223, 8
        %s225 = scalar_lea.vmem %s0, %s224
        %p226 = pneg %p41
        %p227 = pneg %p38
        %p228 = pneg %p62
        %p229 = pneg %p59
        %p230 = pneg %p83
        %p231 = pneg %p80
        %p232 = pneg %p104
        %p233 = pneg %p101
        %p234 = pneg %p125
        %p235 = pneg %p122
        %p236 = pneg %p146
        %p237 = pneg %p143
        %p238 = pneg %p172
        %p239 = pneg %p169
        %s240 = sand.u32 %s159, 1
        %s241 = scalar_lea.sflag [#allocation3], %s240
        %s242 = sand.u32 %s159, 1
        %s243 = smul.addr %s242, 160
        %s244 = scalar_lea.vmem [#allocation2], %s243
        %p245 = scmp.lt.s32.totalorder %s20, 1
        %s246 = scalar_select %p245, %s20, 1
        %s247 = smul.addr %s246, 10
        %s248 = smul.addr %s247, 8
        %s249 = scalar_lea.vmem %s0, %s248
        %v250 = vld [vmem:[%s1] sm:$0xff]
        %v251 = vld [vmem:[%s1 + $0x8] sm:$0xff]
        %v252 = vld [vmem:[%s1 + $0x10] sm:$0xff]
        %v253 = vld [vmem:[%s1 + $0x18] sm:$0xff]
        %v254 = vld [vmem:[%s1 + $0x20] sm:$0xff]
        %v255 = vld [vmem:[%s1 + $0x28] sm:$0xff]
        %v256 = vld [vmem:[%s1 + $0x30] sm:$0xff]
        %v257 = vld [vmem:[%s1 + $0x38] sm:$0xff]
        %v258 = vld [vmem:[%s2] sm:$0xff]
        %v259 = vld [vmem:[%s2 + $0x8] sm:$0xff]
        %v260 = vld [vmem:[%s2 + $0x10] sm:$0xff]
        %v261 = vld [vmem:[%s2 + $0x18] sm:$0xff]
        %v262 = vld [vmem:[%s2 + $0x20] sm:$0xff]
        %v263 = vld [vmem:[%s2 + $0x28] sm:$0xff]
        %v264 = vld [vmem:[%s2 + $0x30] sm:$0xff]
        %v265 = vld [vmem:[%s2 + $0x38] sm:$0xff]
        %v266 = vld [vmem:[%s3] sm:$0x1f]
        %v267 = vld [vmem:[%s4] sm:$0x1f]
        %v268 = vld [vmem:[%s5] sm:$0xff]
        %v269 = vld [vmem:[%s5 + $0x8] sm:$0xff]
        %v270 = vld [vmem:[%s249] sm:$0xff]
        %v271 = vld [vmem:[%s249 + $0x8] sm:$0xff]
        %v272 = vld [vmem:[%s249 + $0x10] sm:$0xff]
        %v273 = vld [vmem:[%s249 + $0x18] sm:$0xff]
        %v274 = vld [vmem:[%s249 + $0x20] sm:$0xff]
        %v275 = vld [vmem:[%s249 + $0x28] sm:$0xff]
        %v276 = vld [vmem:[%s249 + $0x30] sm:$0xff]
        %v277 = vld [vmem:[%s249 + $0x38] sm:$0xff]
        %v278 = vld [vmem:[%s249 + $0x40] sm:$0xf]
        %v279 = vld [vmem:[%s249 + $0x48] sm:$0xf]
        %281 = vset.pattern.permute.xlu0 0
        %282 = vperm.xlu0 %281, %v258
        %v283 = vpop.permute.xlu0 %282
        %286 = vset.pattern.permute.xlu0 0
        %287 = vperm.xlu0 %286, %v259
        %v288 = vpop.permute.xlu0 %287
        %291 = vset.pattern.permute.xlu0 0
        %292 = vperm.xlu0 %291, %v260
        %v293 = vpop.permute.xlu0 %292
        %296 = vset.pattern.permute.xlu0 0
        %297 = vperm.xlu0 %296, %v261
        %v298 = vpop.permute.xlu0 %297
        %301 = vset.pattern.permute.xlu0 0
        %302 = vperm.xlu0 %301, %v262
        %v303 = vpop.permute.xlu0 %302
        %306 = vset.pattern.permute.xlu0 0
        %307 = vperm.xlu0 %306, %v263
        %v308 = vpop.permute.xlu0 %307
        %311 = vset.pattern.permute.xlu0 0
        %312 = vperm.xlu0 %311, %v264
        %v313 = vpop.permute.xlu0 %312
        %316 = vset.pattern.permute.xlu0 0
        %317 = vperm.xlu0 %316, %v265
        %v318 = vpop.permute.xlu0 %317
        %vm320 = vcmask 293888
        %v322 = vsel %vm320, %v250, 0
        %v325 = vsel %vm320, %v251, 0
        %v328 = vsel %vm320, %v252, 0
        %v331 = vsel %vm320, %v253, 0
        %v334 = vsel %vm320, %v254, 0
        %v337 = vsel %vm320, %v255, 0
        %v340 = vsel %vm320, %v256, 0
        %v343 = vsel %vm320, %v257, 0
        %vm345 = vcmask 1043456
        %v347 = vsel %vm345, %v278, 0
        %v350 = vsel %vm345, %v279, 0
        %352 = vmatprep.subr.mxu0 %v271
        %353 = vmatpush1.msra.mxu0 %v270
        %354 = vmatprep.subr.mxu0 %v273
        %355 = vmatpush1.msra.mxu0 %v272
        %356 = vmatprep.subr.mxu0 %v275
        %357 = vmatpush1.msra.mxu0 %v274
        %358 = vmatprep.subr.mxu0 %v277
        %359 = vmatpush1.msra.mxu0 %v276
        %360 = vmatprep.subr.mxu0 %v350
        %361 = vmatpush1.msra.mxu0 %v347
        %362 = vmatprep.subr.mxu0 0.0
        %363 = vmatpush1.msra.mxu0 0.0
        %364 = vmatprep.subr.mxu0 0.0
        %365 = vmatpush1.msra.mxu0 0.0
        %366 = vmatprep.subr.mxu0 0.0
        %367 = vmatpush1.msra.mxu0 0.0
        %368 = vmatprep.subr.mxu0 0.0
        %369 = vmatpush1.msra.mxu0 0.0
        %370 = vmatprep.subr.mxu0 0.0
        %371 = vmatpush1.msra.mxu0 0.0
        %372 = vmatprep.subr.mxu0 0.0
        %373 = vmatpush1.msra.mxu0 0.0
        %374 = vmatprep.subr.mxu0 0.0
        %375 = vmatpush1.msra.mxu0 0.0
        %376 = vmatprep.subr.mxu0 0.0
        %377 = vmatpush1.msra.mxu0 0.0
        %378 = vmatprep.subr.mxu0 0.0
        %379 = vmatpush1.msra.mxu0 0.0
        %380 = vmatprep.subr.mxu0 0.0
        %381 = vmatpush1.msra.mxu0 0.0
        %382 = vmatprep.subr.mxu0 0.0
        %383 = vmatpush1.msra.mxu0 0.0
        %384 = vmatprep.subr.mxu0 0.0
        %385 = vmatpush1.msra.mxu0 0.0
        %386 = vmatprep.subr.mxu0 0.0
        %387 = vmatpush1.msra.mxu0 0.0
        %388 = vmatprep.subr.mxu0 0.0
        %389 = vmatpush1.msra.mxu0 0.0
        %390 = vmatprep.subr.mxu0 0.0
        %391 = vmatpush1.msra.mxu0 0.0
        %392 = vmatprep.subr.mxu0 0.0
        %393 = vmatpush1.msra.mxu0 0.0
        %394 = vmatprep.subr.mxu0 0.0
        %395 = vmatpush1.msra.mxu0 0.0
        %396 = vmatprep.subr.mxu0 0.0
        %397 = vmatpush1.msra.mxu0 0.0
        %398 = vmatprep.subr.mxu0 0.0
        %399 = vmatpush1.msra.mxu0 0.0
        %400 = vmatprep.subr.mxu0 0.0
        %401 = vmatpush1.msra.mxu0 0.0
        %402 = vmatprep.subr.mxu0 0.0
        %403 = vmatpush1.msra.mxu0 0.0
        %404 = vmatprep.subr.mxu0 0.0
        %405 = vmatpush1.msra.mxu0 0.0
        %406 = vmatprep.subr.mxu0 0.0
        %407 = vmatpush1.msra.mxu0 0.0
        %408 = vmatprep.subr.mxu0 0.0
        %409 = vmatpush1.msra.mxu0 0.0
        %410 = vmatprep.subr.mxu0 0.0
        %411 = vmatpush1.msra.mxu0 0.0
        %412 = vmatprep.subr.mxu0 0.0
        %413 = vmatpush1.msra.mxu0 0.0
        %414 = vmatprep.subr.mxu0 0.0
        %415 = vmatpush1.msra.mxu0 0.0
        %416 = vmatprep.mubr.f32.mxu0 0.0
        %417 = vmatmul.mubr.f32.gmra.mrb[0].mxu0 %v322
        %v418 = vpop.f32.mrb[0].mxu0
        %v419 = vadd.f32 %v283, %v418
        %v420 = vpop.f32.mrb[0].mxu0
        %v421 = vadd.f32 %v283, %v420
        %422 = vmatprep.mubr.f32.mxu0 0.0
        %423 = vmatmul.mubr.f32.gmra.mrb[0].mxu0 %v325
        %v424 = vpop.f32.mrb[0].mxu0
        %v425 = vadd.f32 %v288, %v424
        %v426 = vpop.f32.mrb[0].mxu0
        %v427 = vadd.f32 %v288, %v426
        %428 = vmatprep.mubr.f32.mxu0 0.0
        %429 = vmatmul.mubr.f32.gmra.mrb[0].mxu0 %v328
        %v430 = vpop.f32.mrb[0].mxu0
        %v431 = vadd.f32 %v293, %v430
        %v432 = vpop.f32.mrb[0].mxu0
        %v433 = vadd.f32 %v293, %v432
        %434 = vmatprep.mubr.f32.mxu0 0.0
        %435 = vmatmul.mubr.f32.gmra.mrb[0].mxu0 %v331
        %v436 = vpop.f32.mrb[0].mxu0
        %v437 = vadd.f32 %v298, %v436
        %v438 = vpop.f32.mrb[0].mxu0
        %v439 = vadd.f32 %v298, %v438
        %440 = vmatprep.mubr.f32.mxu0 0.0
        %441 = vmatmul.mubr.f32.gmra.mrb[0].mxu0 %v334
        %v442 = vpop.f32.mrb[0].mxu0
        %v443 = vadd.f32 %v303, %v442
        %v444 = vpop.f32.mrb[0].mxu0
        %v445 = vadd.f32 %v303, %v444
        %446 = vmatprep.mubr.f32.mxu0 0.0
        %447 = vmatmul.mubr.f32.gmra.mrb[0].mxu0 %v337
        %v448 = vpop.f32.mrb[0].mxu0
        %v449 = vadd.f32 %v308, %v448
        %v450 = vpop.f32.mrb[0].mxu0
        %v451 = vadd.f32 %v308, %v450
        %452 = vmatprep.mubr.f32.mxu0 0.0
        %453 = vmatmul.mubr.f32.gmra.mrb[0].mxu0 %v340
        %v454 = vpop.f32.mrb[0].mxu0
        %v455 = vadd.f32 %v313, %v454
        %v456 = vpop.f32.mrb[0].mxu0
        %v457 = vadd.f32 %v313, %v456
        %458 = vmatprep.mubr.f32.mxu0 0.0
        %459 = vmatmul.mubr.f32.gmra.mrb[0].mxu0 %v343
        %v460 = vpop.f32.mrb[0].mxu0
        %v461 = vadd.f32 %v318, %v460
        %v462 = vpop.f32.mrb[0].mxu0
        %v463 = vadd.f32 %v318, %v462
        %464 = vdwg.mxu0
        %v465 = vmax.f32 %v419, 0.0
        %v466 = vmax.f32 %v421, 0.0
        %v467 = vmax.f32 %v425, 0.0
        %v468 = vmax.f32 %v427, 0.0
        %v469 = vmax.f32 %v431, 0.0
        %v470 = vmax.f32 %v433, 0.0
        %v471 = vmax.f32 %v437, 0.0
        %v472 = vmax.f32 %v439, 0.0
        %v473 = vmax.f32 %v443, 0.0
        %v474 = vmax.f32 %v445, 0.0
        %v475 = vmax.f32 %v449, 0.0
        %v476 = vmax.f32 %v451, 0.0
        %v477 = vmax.f32 %v455, 0.0
        %v478 = vmax.f32 %v457, 0.0
        %v479 = vmax.f32 %v461, 0.0
        %v480 = vmax.f32 %v463, 0.0
        %482 = vset.pattern.permute.xlu0 0
        %483 = vperm.xlu0 %482, %v267
        %v484 = vpop.permute.xlu0 %483
        %vm486 = vcmask 523264
        %v488 = vsel %vm486, %v266, 0
        %490 = vmatprep.subr.mxu0 %v466
        %491 = vmatpush1.msra.mxu0 %v465
        %492 = vmatprep.subr.mxu0 %v468
        %493 = vmatpush1.msra.mxu0 %v467
        %494 = vmatprep.subr.mxu0 %v470
        %495 = vmatpush1.msra.mxu0 %v469
        %496 = vmatprep.subr.mxu0 %v472
        %497 = vmatpush1.msra.mxu0 %v471
        %498 = vmatprep.subr.mxu0 %v474
        %499 = vmatpush1.msra.mxu0 %v473
        %500 = vmatprep.subr.mxu0 %v476
        %501 = vmatpush1.msra.mxu0 %v475
        %502 = vmatprep.subr.mxu0 %v478
        %503 = vmatpush1.msra.mxu0 %v477
        %504 = vmatprep.subr.mxu0 %v480
        %505 = vmatpush1.msra.mxu0 %v479
        %506 = vmatprep.subr.mxu0 0.0
        %507 = vmatpush1.msra.mxu0 0.0
        %508 = vmatprep.subr.mxu0 0.0
        %509 = vmatpush1.msra.mxu0 0.0
        %510 = vmatprep.subr.mxu0 0.0
        %511 = vmatpush1.msra.mxu0 0.0
        %512 = vmatprep.subr.mxu0 0.0
        %513 = vmatpush1.msra.mxu0 0.0
        %514 = vmatprep.subr.mxu0 0.0
        %515 = vmatpush1.msra.mxu0 0.0
        %516 = vmatprep.subr.mxu0 0.0
        %517 = vmatpush1.msra.mxu0 0.0
        %518 = vmatprep.subr.mxu0 0.0
        %519 = vmatpush1.msra.mxu0 0.0
        %520 = vmatprep.subr.mxu0 0.0
        %521 = vmatpush1.msra.mxu0 0.0
        %522 = vmatprep.subr.mxu0 0.0
        %523 = vmatpush1.msra.mxu0 0.0
        %524 = vmatprep.subr.mxu0 0.0
        %525 = vmatpush1.msra.mxu0 0.0
        %526 = vmatprep.subr.mxu0 0.0
        %527 = vmatpush1.msra.mxu0 0.0
        %528 = vmatprep.subr.mxu0 0.0
        %529 = vmatpush1.msra.mxu0 0.0
        %530 = vmatprep.subr.mxu0 0.0
        %531 = vmatpush1.msra.mxu0 0.0
        %532 = vmatprep.subr.mxu0 0.0
        %533 = vmatpush1.msra.mxu0 0.0
        %534 = vmatprep.subr.mxu0 0.0
        %535 = vmatpush1.msra.mxu0 0.0
        %536 = vmatprep.subr.mxu0 0.0
        %537 = vmatpush1.msra.mxu0 0.0
        %538 = vmatprep.subr.mxu0 0.0
        %539 = vmatpush1.msra.mxu0 0.0
        %540 = vmatprep.subr.mxu0 0.0
        %541 = vmatpush1.msra.mxu0 0.0
        %542 = vmatprep.subr.mxu0 0.0
        %543 = vmatpush1.msra.mxu0 0.0
        %544 = vmatprep.subr.mxu0 0.0
        %545 = vmatpush1.msra.mxu0 0.0
        %546 = vmatprep.subr.mxu0 0.0
        %547 = vmatpush1.msra.mxu0 0.0
        %548 = vmatprep.subr.mxu0 0.0
        %549 = vmatpush1.msra.mxu0 0.0
        %550 = vmatprep.subr.mxu0 0.0
        %551 = vmatpush1.msra.mxu0 0.0
        %552 = vmatprep.subr.mxu0 0.0
        %553 = vmatpush1.msra.mxu0 0.0
        %554 = vmatprep.mubr.f32.mxu0 0.0
        %555 = vmatmul.mubr.f32.gmra.mrb[0].mxu0 %v488
        %v556 = vpop.f32.mrb[0].mxu0
        %v557 = vadd.f32 %v484, %v556
        %v558 = vpop.f32.mrb[0].mxu0
        %v559 = vadd.f32 %v484, %v558
        %560 = vdwg.mxu0
        %vm561 = vcmask 130048
        %v563 = vsel %vm561, %v557, 0
        %565 = vmatprep.subr.mxu0 0.0
        %566 = vmatpush1.msra.mxu0 %v268
        %567 = vmatprep.subr.mxu0 0.0
        %568 = vmatpush1.msra.mxu0 %v269
        %569 = vmatprep.subr.mxu0 0.0
        %570 = vmatpush1.msra.mxu0 0.0
        %571 = vmatprep.subr.mxu0 0.0
        %572 = vmatpush1.msra.mxu0 0.0
        %573 = vmatprep.subr.mxu0 0.0
        %574 = vmatpush1.msra.mxu0 0.0
        %575 = vmatprep.subr.mxu0 0.0
        %576 = vmatpush1.msra.mxu0 0.0
        %577 = vmatprep.subr.mxu0 0.0
        %578 = vmatpush1.msra.mxu0 0.0
        %579 = vmatprep.subr.mxu0 0.0
        %580 = vmatpush1.msra.mxu0 0.0
        %581 = vmatprep.subr.mxu0 0.0
        %582 = vmatpush1.msra.mxu0 0.0
        %583 = vmatprep.subr.mxu0 0.0
        %584 = vmatpush1.msra.mxu0 0.0
        %585 = vmatprep.subr.mxu0 0.0
        %586 = vmatpush1.msra.mxu0 0.0
        %587 = vmatprep.subr.mxu0 0.0
        %588 = vmatpush1.msra.mxu0 0.0
        %589 = vmatprep.subr.mxu0 0.0
        %590 = vmatpush1.msra.mxu0 0.0
        %591 = vmatprep.subr.mxu0 0.0
        %592 = vmatpush1.msra.mxu0 0.0
        %593 = vmatprep.subr.mxu0 0.0
        %594 = vmatpush1.msra.mxu0 0.0
        %595 = vmatprep.subr.mxu0 0.0
        %596 = vmatpush1.msra.mxu0 0.0
        %597 = vmatprep.subr.mxu0 0.0
        %598 = vmatpush1.msra.mxu0 0.0
        %599 = vmatprep.subr.mxu0 0.0
        %600 = vmatpush1.msra.mxu0 0.0
        %601 = vmatprep.subr.mxu0 0.0
        %602 = vmatpush1.msra.mxu0 0.0
        %603 = vmatprep.subr.mxu0 0.0
        %604 = vmatpush1.msra.mxu0 0.0
        %605 = vmatprep.subr.mxu0 0.0
        %606 = vmatpush1.msra.mxu0 0.0
        %607 = vmatprep.subr.mxu0 0.0
        %608 = vmatpush1.msra.mxu0 0.0
        %609 = vmatprep.subr.mxu0 0.0
        %610 = vmatpush1.msra.mxu0 0.0
        %611 = vmatprep.subr.mxu0 0.0
        %612 = vmatpush1.msra.mxu0 0.0
        %613 = vmatprep.subr.mxu0 0.0
        %614 = vmatpush1.msra.mxu0 0.0
        %615 = vmatprep.subr.mxu0 0.0
        %616 = vmatpush1.msra.mxu0 0.0
        %617 = vmatprep.subr.mxu0 0.0
        %618 = vmatpush1.msra.mxu0 0.0
        %619 = vmatprep.subr.mxu0 0.0
        %620 = vmatpush1.msra.mxu0 0.0
        %621 = vmatprep.subr.mxu0 0.0
        %622 = vmatpush1.msra.mxu0 0.0
        %623 = vmatprep.subr.mxu0 0.0
        %624 = vmatpush1.msra.mxu0 0.0
        %625 = vmatprep.subr.mxu0 0.0
        %626 = vmatpush1.msra.mxu0 0.0
        %627 = vmatprep.subr.mxu0 0.0
        %628 = vmatpush1.msra.mxu0 0.0
        %629 = vmatprep.mubr.f32.mxu0 0.0
        %630 = vmatmul.mubr.f32.gmra.mrb[0].mxu0 %v563
        %v631 = vpop.f32.mrb[0].mxu0
        %v632 = vadd.f32 0.0, %v631
        %v633 = vpop.f32.mrb[0].mxu0
        %634 = vdwg.mxu0
        %635 = vrot.lane.b32.xlu0 %v557, 112
        %v636 = vpop.permute.xlu0 %635
        %v637 = vsel %vm561, %v636, 0
        %639 = vmatprep.subr.mxu0 0.0
        %640 = vmatpush1.msra.mxu0 %v268
        %641 = vmatprep.subr.mxu0 0.0
        %642 = vmatpush1.msra.mxu0 %v269
        %643 = vmatprep.subr.mxu0 0.0
        %644 = vmatpush1.msra.mxu0 0.0
        %645 = vmatprep.subr.mxu0 0.0
        %646 = vmatpush1.msra.mxu0 0.0
        %647 = vmatprep.subr.mxu0 0.0
        %648 = vmatpush1.msra.mxu0 0.0
        %649 = vmatprep.subr.mxu0 0.0
        %650 = vmatpush1.msra.mxu0 0.0
        %651 = vmatprep.subr.mxu0 0.0
        %652 = vmatpush1.msra.mxu0 0.0
        %653 = vmatprep.subr.mxu0 0.0
        %654 = vmatpush1.msra.mxu0 0.0
        %655 = vmatprep.subr.mxu0 0.0
        %656 = vmatpush1.msra.mxu0 0.0
        %657 = vmatprep.subr.mxu0 0.0
        %658 = vmatpush1.msra.mxu0 0.0
        %659 = vmatprep.subr.mxu0 0.0
        %660 = vmatpush1.msra.mxu0 0.0
        %661 = vmatprep.subr.mxu0 0.0
        %662 = vmatpush1.msra.mxu0 0.0
        %663 = vmatprep.subr.mxu0 0.0
        %664 = vmatpush1.msra.mxu0 0.0
        %665 = vmatprep.subr.mxu0 0.0
        %666 = vmatpush1.msra.mxu0 0.0
        %667 = vmatprep.subr.mxu0 0.0
        %668 = vmatpush1.msra.mxu0 0.0
        %669 = vmatprep.subr.mxu0 0.0
        %670 = vmatpush1.msra.mxu0 0.0
        %671 = vmatprep.subr.mxu0 0.0
        %672 = vmatpush1.msra.mxu0 0.0
        %673 = vmatprep.subr.mxu0 0.0
        %674 = vmatpush1.msra.mxu0 0.0
        %675 = vmatprep.subr.mxu0 0.0
        %676 = vmatpush1.msra.mxu0 0.0
        %677 = vmatprep.subr.mxu0 0.0
        %678 = vmatpush1.msra.mxu0 0.0
        %679 = vmatprep.subr.mxu0 0.0
        %680 = vmatpush1.msra.mxu0 0.0
        %681 = vmatprep.subr.mxu0 0.0
        %682 = vmatpush1.msra.mxu0 0.0
        %683 = vmatprep.subr.mxu0 0.0
        %684 = vmatpush1.msra.mxu0 0.0
        %685 = vmatprep.subr.mxu0 0.0
        %686 = vmatpush1.msra.mxu0 0.0
        %687 = vmatprep.subr.mxu0 0.0
        %688 = vmatpush1.msra.mxu0 0.0
        %689 = vmatprep.subr.mxu0 0.0
        %690 = vmatpush1.msra.mxu0 0.0
        %691 = vmatprep.subr.mxu0 0.0
        %692 = vmatpush1.msra.mxu0 0.0
        %693 = vmatprep.subr.mxu0 0.0
        %694 = vmatpush1.msra.mxu0 0.0
        %695 = vmatprep.subr.mxu0 0.0
        %696 = vmatpush1.msra.mxu0 0.0
        %697 = vmatprep.subr.mxu0 0.0
        %698 = vmatpush1.msra.mxu0 0.0
        %699 = vmatprep.subr.mxu0 0.0
        %700 = vmatpush1.msra.mxu0 0.0
        %701 = vmatprep.subr.mxu0 0.0
        %702 = vmatpush1.msra.mxu0 0.0
        %703 = vmatprep.mubr.f32.mxu0 0.0
        %704 = vmatmul.mubr.f32.gmra.mrb[0].mxu0 %v637
        %v705 = vpop.f32.mrb[0].mxu0
        %v706 = vadd.f32 0.0, %v705
        %v707 = vpop.f32.mrb[0].mxu0
        %708 = vdwg.mxu0
        %709 = vrot.lane.b32.xlu0 %v557, 96
        %v710 = vpop.permute.xlu0 %709
        %v711 = vsel %vm561, %v710, 0
        %713 = vmatprep.subr.mxu0 0.0
        %714 = vmatpush1.msra.mxu0 %v268
        %715 = vmatprep.subr.mxu0 0.0
        %716 = vmatpush1.msra.mxu0 %v269
        %717 = vmatprep.subr.mxu0 0.0
        %718 = vmatpush1.msra.mxu0 0.0
        %719 = vmatprep.subr.mxu0 0.0
        %720 = vmatpush1.msra.mxu0 0.0
        %721 = vmatprep.subr.mxu0 0.0
        %722 = vmatpush1.msra.mxu0 0.0
        %723 = vmatprep.subr.mxu0 0.0
        %724 = vmatpush1.msra.mxu0 0.0
        %725 = vmatprep.subr.mxu0 0.0
        %726 = vmatpush1.msra.mxu0 0.0
        %727 = vmatprep.subr.mxu0 0.0
        %728 = vmatpush1.msra.mxu0 0.0
        %729 = vmatprep.subr.mxu0 0.0
        %730 = vmatpush1.msra.mxu0 0.0
        %731 = vmatprep.subr.mxu0 0.0
        %732 = vmatpush1.msra.mxu0 0.0
        %733 = vmatprep.subr.mxu0 0.0
        %734 = vmatpush1.msra.mxu0 0.0
        %735 = vmatprep.subr.mxu0 0.0
        %736 = vmatpush1.msra.mxu0 0.0
        %737 = vmatprep.subr.mxu0 0.0
        %738 = vmatpush1.msra.mxu0 0.0
        %739 = vmatprep.subr.mxu0 0.0
        %740 = vmatpush1.msra.mxu0 0.0
        %741 = vmatprep.subr.mxu0 0.0
        %742 = vmatpush1.msra.mxu0 0.0
        %743 = vmatprep.subr.mxu0 0.0
        %744 = vmatpush1.msra.mxu0 0.0
        %745 = vmatprep.subr.mxu0 0.0
        %746 = vmatpush1.msra.mxu0 0.0
        %747 = vmatprep.subr.mxu0 0.0
        %748 = vmatpush1.msra.mxu0 0.0
        %749 = vmatprep.subr.mxu0 0.0
        %750 = vmatpush1.msra.mxu0 0.0
        %751 = vmatprep.subr.mxu0 0.0
        %752 = vmatpush1.msra.mxu0 0.0
        %753 = vmatprep.subr.mxu0 0.0
        %754 = vmatpush1.msra.mxu0 0.0
        %755 = vmatprep.subr.mxu0 0.0
        %756 = vmatpush1.msra.mxu0 0.0
        %757 = vmatprep.subr.mxu0 0.0
        %758 = vmatpush1.msra.mxu0 0.0
        %759 = vmatprep.subr.mxu0 0.0
        %760 = vmatpush1.msra.mxu0 0.0
        %761 = vmatprep.subr.mxu0 0.0
        %762 = vmatpush1.msra.mxu0 0.0
        %763 = vmatprep.subr.mxu0 0.0
        %764 = vmatpush1.msra.mxu0 0.0
        %765 = vmatprep.subr.mxu0 0.0
        %766 = vmatpush1.msra.mxu0 0.0
        %767 = vmatprep.subr.mxu0 0.0
        %768 = vmatpush1.msra.mxu0 0.0
        %769 = vmatprep.subr.mxu0 0.0
        %770 = vmatpush1.msra.mxu0 0.0
        %771 = vmatprep.subr.mxu0 0.0
        %772 = vmatpush1.msra.mxu0 0.0
        %773 = vmatprep.subr.mxu0 0.0
        %774 = vmatpush1.msra.mxu0 0.0
        %775 = vmatprep.subr.mxu0 0.0
        %776 = vmatpush1.msra.mxu0 0.0
        %777 = vmatprep.mubr.f32.mxu0 0.0
        %778 = vmatmul.mubr.f32.gmra.mrb[0].mxu0 %v711
        %v779 = vpop.f32.mrb[0].mxu0
        %v780 = vadd.f32 0.0, %v779
        %v781 = vpop.f32.mrb[0].mxu0
        %782 = vdwg.mxu0
        %783 = vrot.lane.b32.xlu0 %v557, 80
        %v784 = vpop.permute.xlu0 %783
        %v785 = vsel %vm561, %v784, 0
        %787 = vmatprep.subr.mxu0 0.0
        %788 = vmatpush1.msra.mxu0 %v268
        %789 = vmatprep.subr.mxu0 0.0
        %790 = vmatpush1.msra.mxu0 %v269
        %791 = vmatprep.subr.mxu0 0.0
        %792 = vmatpush1.msra.mxu0 0.0
        %793 = vmatprep.subr.mxu0 0.0
        %794 = vmatpush1.msra.mxu0 0.0
        %795 = vmatprep.subr.mxu0 0.0
        %796 = vmatpush1.msra.mxu0 0.0
        %797 = vmatprep.subr.mxu0 0.0
        %798 = vmatpush1.msra.mxu0 0.0
        %799 = vmatprep.subr.mxu0 0.0
        %800 = vmatpush1.msra.mxu0 0.0
        %801 = vmatprep.subr.mxu0 0.0
        %802 = vmatpush1.msra.mxu0 0.0
        %803 = vmatprep.subr.mxu0 0.0
        %804 = vmatpush1.msra.mxu0 0.0
        %805 = vmatprep.subr.mxu0 0.0
        %806 = vmatpush1.msra.mxu0 0.0
        %807 = vmatprep.subr.mxu0 0.0
        %808 = vmatpush1.msra.mxu0 0.0
        %809 = vmatprep.subr.mxu0 0.0
        %810 = vmatpush1.msra.mxu0 0.0
        %811 = vmatprep.subr.mxu0 0.0
        %812 = vmatpush1.msra.mxu0 0.0
        %813 = vmatprep.subr.mxu0 0.0
        %814 = vmatpush1.msra.mxu0 0.0
        %815 = vmatprep.subr.mxu0 0.0
        %816 = vmatpush1.msra.mxu0 0.0
        %817 = vmatprep.subr.mxu0 0.0
        %818 = vmatpush1.msra.mxu0 0.0
        %819 = vmatprep.subr.mxu0 0.0
        %820 = vmatpush1.msra.mxu0 0.0
        %821 = vmatprep.subr.mxu0 0.0
        %822 = vmatpush1.msra.mxu0 0.0
        %823 = vmatprep.subr.mxu0 0.0
        %824 = vmatpush1.msra.mxu0 0.0
        %825 = vmatprep.subr.mxu0 0.0
        %826 = vmatpush1.msra.mxu0 0.0
        %827 = vmatprep.subr.mxu0 0.0
        %828 = vmatpush1.msra.mxu0 0.0
        %829 = vmatprep.subr.mxu0 0.0
        %830 = vmatpush1.msra.mxu0 0.0
        %831 = vmatprep.subr.mxu0 0.0
        %832 = vmatpush1.msra.mxu0 0.0
        %833 = vmatprep.subr.mxu0 0.0
        %834 = vmatpush1.msra.mxu0 0.0
        %835 = vmatprep.subr.mxu0 0.0
        %836 = vmatpush1.msra.mxu0 0.0
        %837 = vmatprep.subr.mxu0 0.0
        %838 = vmatpush1.msra.mxu0 0.0
        %839 = vmatprep.subr.mxu0 0.0
        %840 = vmatpush1.msra.mxu0 0.0
        %841 = vmatprep.subr.mxu0 0.0
        %842 = vmatpush1.msra.mxu0 0.0
        %843 = vmatprep.subr.mxu0 0.0
        %844 = vmatpush1.msra.mxu0 0.0
        %845 = vmatprep.subr.mxu0 0.0
        %846 = vmatpush1.msra.mxu0 0.0
        %847 = vmatprep.subr.mxu0 0.0
        %848 = vmatpush1.msra.mxu0 0.0
        %849 = vmatprep.subr.mxu0 0.0
        %850 = vmatpush1.msra.mxu0 0.0
        %851 = vmatprep.mubr.f32.mxu0 0.0
        %852 = vmatmul.mubr.f32.gmra.mrb[0].mxu0 %v785
        %v853 = vpop.f32.mrb[0].mxu0
        %v854 = vadd.f32 0.0, %v853
        %v855 = vpop.f32.mrb[0].mxu0
        %856 = vdwg.mxu0
        %857 = vrot.lane.b32.xlu0 %v557, 64
        %v858 = vpop.permute.xlu0 %857
        %v859 = vsel %vm561, %v858, 0
        %861 = vmatprep.subr.mxu0 0.0
        %862 = vmatpush1.msra.mxu0 %v268
        %863 = vmatprep.subr.mxu0 0.0
        %864 = vmatpush1.msra.mxu0 %v269
        %865 = vmatprep.subr.mxu0 0.0
        %866 = vmatpush1.msra.mxu0 0.0
        %867 = vmatprep.subr.mxu0 0.0
        %868 = vmatpush1.msra.mxu0 0.0
        %869 = vmatprep.subr.mxu0 0.0
        %870 = vmatpush1.msra.mxu0 0.0
        %871 = vmatprep.subr.mxu0 0.0
        %872 = vmatpush1.msra.mxu0 0.0
        %873 = vmatprep.subr.mxu0 0.0
        %874 = vmatpush1.msra.mxu0 0.0
        %875 = vmatprep.subr.mxu0 0.0
        %876 = vmatpush1.msra.mxu0 0.0
        %877 = vmatprep.subr.mxu0 0.0
        %878 = vmatpush1.msra.mxu0 0.0
        %879 = vmatprep.subr.mxu0 0.0
        %880 = vmatpush1.msra.mxu0 0.0
        %881 = vmatprep.subr.mxu0 0.0
        %882 = vmatpush1.msra.mxu0 0.0
        %883 = vmatprep.subr.mxu0 0.0
        %884 = vmatpush1.msra.mxu0 0.0
        %885 = vmatprep.subr.mxu0 0.0
        %886 = vmatpush1.msra.mxu0 0.0
        %887 = vmatprep.subr.mxu0 0.0
        %888 = vmatpush1.msra.mxu0 0.0
        %889 = vmatprep.subr.mxu0 0.0
        %890 = vmatpush1.msra.mxu0 0.0
        %891 = vmatprep.subr.mxu0 0.0
        %892 = vmatpush1.msra.mxu0 0.0
        %893 = vmatprep.subr.mxu0 0.0
        %894 = vmatpush1.msra.mxu0 0.0
        %895 = vmatprep.subr.mxu0 0.0
        %896 = vmatpush1.msra.mxu0 0.0
        %897 = vmatprep.subr.mxu0 0.0
        %898 = vmatpush1.msra.mxu0 0.0
        %899 = vmatprep.subr.mxu0 0.0
        %900 = vmatpush1.msra.mxu0 0.0
        %901 = vmatprep.subr.mxu0 0.0
        %902 = vmatpush1.msra.mxu0 0.0
        %903 = vmatprep.subr.mxu0 0.0
        %904 = vmatpush1.msra.mxu0 0.0
        %905 = vmatprep.subr.mxu0 0.0
        %906 = vmatpush1.msra.mxu0 0.0
        %907 = vmatprep.subr.mxu0 0.0
        %908 = vmatpush1.msra.mxu0 0.0
        %909 = vmatprep.subr.mxu0 0.0
        %910 = vmatpush1.msra.mxu0 0.0
        %911 = vmatprep.subr.mxu0 0.0
        %912 = vmatpush1.msra.mxu0 0.0
        %913 = vmatprep.subr.mxu0 0.0
        %914 = vmatpush1.msra.mxu0 0.0
        %915 = vmatprep.subr.mxu0 0.0
        %916 = vmatpush1.msra.mxu0 0.0
        %917 = vmatprep.subr.mxu0 0.0
        %918 = vmatpush1.msra.mxu0 0.0
        %919 = vmatprep.subr.mxu0 0.0
        %920 = vmatpush1.msra.mxu0 0.0
        %921 = vmatprep.subr.mxu0 0.0
        %922 = vmatpush1.msra.mxu0 0.0
        %923 = vmatprep.subr.mxu0 0.0
        %924 = vmatpush1.msra.mxu0 0.0
        %925 = vmatprep.mubr.f32.mxu0 0.0
        %926 = vmatmul.mubr.f32.gmra.mrb[0].mxu0 %v859
        %v927 = vpop.f32.mrb[0].mxu0
        %v928 = vadd.f32 0.0, %v927
        %v929 = vpop.f32.mrb[0].mxu0
        %930 = vdwg.mxu0
        %931 = vrot.lane.b32.xlu0 %v557, 48
        %v932 = vpop.permute.xlu0 %931
        %v933 = vsel %vm561, %v932, 0
        %935 = vmatprep.subr.mxu0 0.0
        %936 = vmatpush1.msra.mxu0 %v268
        %937 = vmatprep.subr.mxu0 0.0
        %938 = vmatpush1.msra.mxu0 %v269
        %939 = vmatprep.subr.mxu0 0.0
        %940 = vmatpush1.msra.mxu0 0.0
        %941 = vmatprep.subr.mxu0 0.0
        %942 = vmatpush1.msra.mxu0 0.0
        %943 = vmatprep.subr.mxu0 0.0
        %944 = vmatpush1.msra.mxu0 0.0
        %945 = vmatprep.subr.mxu0 0.0
        %946 = vmatpush1.msra.mxu0 0.0
        %947 = vmatprep.subr.mxu0 0.0
        %948 = vmatpush1.msra.mxu0 0.0
        %949 = vmatprep.subr.mxu0 0.0
        %950 = vmatpush1.msra.mxu0 0.0
        %951 = vmatprep.subr.mxu0 0.0
        %952 = vmatpush1.msra.mxu0 0.0
        %953 = vmatprep.subr.mxu0 0.0
        %954 = vmatpush1.msra.mxu0 0.0
        %955 = vmatprep.subr.mxu0 0.0
        %956 = vmatpush1.msra.mxu0 0.0
        %957 = vmatprep.subr.mxu0 0.0
        %958 = vmatpush1.msra.mxu0 0.0
        %959 = vmatprep.subr.mxu0 0.0
        %960 = vmatpush1.msra.mxu0 0.0
        %961 = vmatprep.subr.mxu0 0.0
        %962 = vmatpush1.msra.mxu0 0.0
        %963 = vmatprep.subr.mxu0 0.0
        %964 = vmatpush1.msra.mxu0 0.0
        %965 = vmatprep.subr.mxu0 0.0
        %966 = vmatpush1.msra.mxu0 0.0
        %967 = vmatprep.subr.mxu0 0.0
        %968 = vmatpush1.msra.mxu0 0.0
        %969 = vmatprep.subr.mxu0 0.0
        %970 = vmatpush1.msra.mxu0 0.0
        %971 = vmatprep.subr.mxu0 0.0
        %972 = vmatpush1.msra.mxu0 0.0
        %973 = vmatprep.subr.mxu0 0.0
        %974 = vmatpush1.msra.mxu0 0.0
        %975 = vmatprep.subr.mxu0 0.0
        %976 = vmatpush1.msra.mxu0 0.0
        %977 = vmatprep.subr.mxu0 0.0
        %978 = vmatpush1.msra.mxu0 0.0
        %979 = vmatprep.subr.mxu0 0.0
        %980 = vmatpush1.msra.mxu0 0.0
        %981 = vmatprep.subr.mxu0 0.0
        %982 = vmatpush1.msra.mxu0 0.0
        %983 = vmatprep.subr.mxu0 0.0
        %984 = vmatpush1.msra.mxu0 0.0
        %985 = vmatprep.subr.mxu0 0.0
        %986 = vmatpush1.msra.mxu0 0.0
        %987 = vmatprep.subr.mxu0 0.0
        %988 = vmatpush1.msra.mxu0 0.0
        %989 = vmatprep.subr.mxu0 0.0
        %990 = vmatpush1.msra.mxu0 0.0
        %991 = vmatprep.subr.mxu0 0.0
        %992 = vmatpush1.msra.mxu0 0.0
        %993 = vmatprep.subr.mxu0 0.0
        %994 = vmatpush1.msra.mxu0 0.0
        %995 = vmatprep.subr.mxu0 0.0
        %996 = vmatpush1.msra.mxu0 0.0
        %997 = vmatprep.subr.mxu0 0.0
        %998 = vmatpush1.msra.mxu0 0.0
        %999 = vmatprep.mubr.f32.mxu0 0.0
        %1000 = vmatmul.mubr.f32.gmra.mrb[0].mxu0 %v933
        %v1001 = vpop.f32.mrb[0].mxu0
        %v1002 = vadd.f32 0.0, %v1001
        %v1003 = vpop.f32.mrb[0].mxu0
        %1004 = vdwg.mxu0
        %1005 = vrot.lane.b32.xlu0 %v557, 32
        %v1006 = vpop.permute.xlu0 %1005
        %v1007 = vsel %vm561, %v1006, 0
        %1009 = vmatprep.subr.mxu0 0.0
        %1010 = vmatpush1.msra.mxu0 %v268
        %1011 = vmatprep.subr.mxu0 0.0
        %1012 = vmatpush1.msra.mxu0 %v269
        %1013 = vmatprep.subr.mxu0 0.0
        %1014 = vmatpush1.msra.mxu0 0.0
        %1015 = vmatprep.subr.mxu0 0.0
        %1016 = vmatpush1.msra.mxu0 0.0
        %1017 = vmatprep.subr.mxu0 0.0
        %1018 = vmatpush1.msra.mxu0 0.0
        %1019 = vmatprep.subr.mxu0 0.0
        %1020 = vmatpush1.msra.mxu0 0.0
        %1021 = vmatprep.subr.mxu0 0.0
        %1022 = vmatpush1.msra.mxu0 0.0
        %1023 = vmatprep.subr.mxu0 0.0
        %1024 = vmatpush1.msra.mxu0 0.0
        %1025 = vmatprep.subr.mxu0 0.0
        %1026 = vmatpush1.msra.mxu0 0.0
        %1027 = vmatprep.subr.mxu0 0.0
        %1028 = vmatpush1.msra.mxu0 0.0
        %1029 = vmatprep.subr.mxu0 0.0
        %1030 = vmatpush1.msra.mxu0 0.0
        %1031 = vmatprep.subr.mxu0 0.0
        %1032 = vmatpush1.msra.mxu0 0.0
        %1033 = vmatprep.subr.mxu0 0.0
        %1034 = vmatpush1.msra.mxu0 0.0
        %1035 = vmatprep.subr.mxu0 0.0
        %1036 = vmatpush1.msra.mxu0 0.0
        %1037 = vmatprep.subr.mxu0 0.0
        %1038 = vmatpush1.msra.mxu0 0.0
        %1039 = vmatprep.subr.mxu0 0.0
        %1040 = vmatpush1.msra.mxu0 0.0
        %1041 = vmatprep.subr.mxu0 0.0
        %1042 = vmatpush1.msra.mxu0 0.0
        %1043 = vmatprep.subr.mxu0 0.0
        %1044 = vmatpush1.msra.mxu0 0.0
        %1045 = vmatprep.subr.mxu0 0.0
        %1046 = vmatpush1.msra.mxu0 0.0
        %1047 = vmatprep.subr.mxu0 0.0
        %1048 = vmatpush1.msra.mxu0 0.0
        %1049 = vmatprep.subr.mxu0 0.0
        %1050 = vmatpush1.msra.mxu0 0.0
        %1051 = vmatprep.subr.mxu0 0.0
        %1052 = vmatpush1.msra.mxu0 0.0
        %1053 = vmatprep.subr.mxu0 0.0
        %1054 = vmatpush1.msra.mxu0 0.0
        %1055 = vmatprep.subr.mxu0 0.0
        %1056 = vmatpush1.msra.mxu0 0.0
        %1057 = vmatprep.subr.mxu0 0.0
        %1058 = vmatpush1.msra.mxu0 0.0
        %1059 = vmatprep.subr.mxu0 0.0
        %1060 = vmatpush1.msra.mxu0 0.0
        %1061 = vmatprep.subr.mxu0 0.0
        %1062 = vmatpush1.msra.mxu0 0.0
        %1063 = vmatprep.subr.mxu0 0.0
        %1064 = vmatpush1.msra.mxu0 0.0
        %1065 = vmatprep.subr.mxu0 0.0
        %1066 = vmatpush1.msra.mxu0 0.0
        %1067 = vmatprep.subr.mxu0 0.0
        %1068 = vmatpush1.msra.mxu0 0.0
        %1069 = vmatprep.subr.mxu0 0.0
        %1070 = vmatpush1.msra.mxu0 0.0
        %1071 = vmatprep.subr.mxu0 0.0
        %1072 = vmatpush1.msra.mxu0 0.0
        %1073 = vmatprep.mubr.f32.mxu0 0.0
        %1074 = vmatmul.mubr.f32.gmra.mrb[0].mxu0 %v1007
        %v1075 = vpop.f32.mrb[0].mxu0
        %v1076 = vadd.f32 0.0, %v1075
        %v1077 = vpop.f32.mrb[0].mxu0
        %1078 = vdwg.mxu0
        %1079 = vrot.lane.b32.xlu0 %v557, 16
        %v1080 = vpop.permute.xlu0 %1079
        %v1081 = vsel %vm561, %v1080, 0
        %1083 = vmatprep.subr.mxu0 0.0
        %1084 = vmatpush1.msra.mxu0 %v268
        %1085 = vmatprep.subr.mxu0 0.0
        %1086 = vmatpush1.msra.mxu0 %v269
        %1087 = vmatprep.subr.mxu0 0.0
        %1088 = vmatpush1.msra.mxu0 0.0
        %1089 = vmatprep.subr.mxu0 0.0
        %1090 = vmatpush1.msra.mxu0 0.0
        %1091 = vmatprep.subr.mxu0 0.0
        %1092 = vmatpush1.msra.mxu0 0.0
        %1093 = vmatprep.subr.mxu0 0.0
        %1094 = vmatpush1.msra.mxu0 0.0
        %1095 = vmatprep.subr.mxu0 0.0
        %1096 = vmatpush1.msra.mxu0 0.0
        %1097 = vmatprep.subr.mxu0 0.0
        %1098 = vmatpush1.msra.mxu0 0.0
        %1099 = vmatprep.subr.mxu0 0.0
        %1100 = vmatpush1.msra.mxu0 0.0
        %1101 = vmatprep.subr.mxu0 0.0
        %1102 = vmatpush1.msra.mxu0 0.0
        %1103 = vmatprep.subr.mxu0 0.0
        %1104 = vmatpush1.msra.mxu0 0.0
        %1105 = vmatprep.subr.mxu0 0.0
        %1106 = vmatpush1.msra.mxu0 0.0
        %1107 = vmatprep.subr.mxu0 0.0
        %1108 = vmatpush1.msra.mxu0 0.0
        %1109 = vmatprep.subr.mxu0 0.0
        %1110 = vmatpush1.msra.mxu0 0.0
        %1111 = vmatprep.subr.mxu0 0.0
        %1112 = vmatpush1.msra.mxu0 0.0
        %1113 = vmatprep.subr.mxu0 0.0
        %1114 = vmatpush1.msra.mxu0 0.0
        %1115 = vmatprep.subr.mxu0 0.0
        %1116 = vmatpush1.msra.mxu0 0.0
        %1117 = vmatprep.subr.mxu0 0.0
        %1118 = vmatpush1.msra.mxu0 0.0
        %1119 = vmatprep.subr.mxu0 0.0
        %1120 = vmatpush1.msra.mxu0 0.0
        %1121 = vmatprep.subr.mxu0 0.0
        %1122 = vmatpush1.msra.mxu0 0.0
        %1123 = vmatprep.subr.mxu0 0.0
        %1124 = vmatpush1.msra.mxu0 0.0
        %1125 = vmatprep.subr.mxu0 0.0
        %1126 = vmatpush1.msra.mxu0 0.0
        %1127 = vmatprep.subr.mxu0 0.0
        %1128 = vmatpush1.msra.mxu0 0.0
        %1129 = vmatprep.subr.mxu0 0.0
        %1130 = vmatpush1.msra.mxu0 0.0
        %1131 = vmatprep.subr.mxu0 0.0
        %1132 = vmatpush1.msra.mxu0 0.0
        %1133 = vmatprep.subr.mxu0 0.0
        %1134 = vmatpush1.msra.mxu0 0.0
        %1135 = vmatprep.subr.mxu0 0.0
        %1136 = vmatpush1.msra.mxu0 0.0
        %1137 = vmatprep.subr.mxu0 0.0
        %1138 = vmatpush1.msra.mxu0 0.0
        %1139 = vmatprep.subr.mxu0 0.0
        %1140 = vmatpush1.msra.mxu0 0.0
        %1141 = vmatprep.subr.mxu0 0.0
        %1142 = vmatpush1.msra.mxu0 0.0
        %1143 = vmatprep.subr.mxu0 0.0
        %1144 = vmatpush1.msra.mxu0 0.0
        %1145 = vmatprep.subr.mxu0 0.0
        %1146 = vmatpush1.msra.mxu0 0.0
        %1147 = vmatprep.mubr.f32.mxu0 0.0
        %1148 = vmatmul.mubr.f32.gmra.mrb[0].mxu0 %v1081
        %v1149 = vpop.f32.mrb[0].mxu0
        %v1150 = vadd.f32 0.0, %v1149
        %v1151 = vpop.f32.mrb[0].mxu0
        %1152 = vdwg.mxu0
        %v1154 = vsel %vm561, %v559, 0
        %1156 = vmatprep.subr.mxu0 0.0
        %1157 = vmatpush1.msra.mxu0 %v268
        %1158 = vmatprep.subr.mxu0 0.0
        %1159 = vmatpush1.msra.mxu0 %v269
        %1160 = vmatprep.subr.mxu0 0.0
        %1161 = vmatpush1.msra.mxu0 0.0
        %1162 = vmatprep.subr.mxu0 0.0
        %1163 = vmatpush1.msra.mxu0 0.0
        %1164 = vmatprep.subr.mxu0 0.0
        %1165 = vmatpush1.msra.mxu0 0.0
        %1166 = vmatprep.subr.mxu0 0.0
        %1167 = vmatpush1.msra.mxu0 0.0
        %1168 = vmatprep.subr.mxu0 0.0
        %1169 = vmatpush1.msra.mxu0 0.0
        %1170 = vmatprep.subr.mxu0 0.0
        %1171 = vmatpush1.msra.mxu0 0.0
        %1172 = vmatprep.subr.mxu0 0.0
        %1173 = vmatpush1.msra.mxu0 0.0
        %1174 = vmatprep.subr.mxu0 0.0
        %1175 = vmatpush1.msra.mxu0 0.0
        %1176 = vmatprep.subr.mxu0 0.0
        %1177 = vmatpush1.msra.mxu0 0.0
        %1178 = vmatprep.subr.mxu0 0.0
        %1179 = vmatpush1.msra.mxu0 0.0
        %1180 = vmatprep.subr.mxu0 0.0
        %1181 = vmatpush1.msra.mxu0 0.0
        %1182 = vmatprep.subr.mxu0 0.0
        %1183 = vmatpush1.msra.mxu0 0.0
        %1184 = vmatprep.subr.mxu0 0.0
        %1185 = vmatpush1.msra.mxu0 0.0
        %1186 = vmatprep.subr.mxu0 0.0
        %1187 = vmatpush1.msra.mxu0 0.0
        %1188 = vmatprep.subr.mxu0 0.0
        %1189 = vmatpush1.msra.mxu0 0.0
        %1190 = vmatprep.subr.mxu0 0.0
        %1191 = vmatpush1.msra.mxu0 0.0
        %1192 = vmatprep.subr.mxu0 0.0
        %1193 = vmatpush1.msra.mxu0 0.0
        %1194 = vmatprep.subr.mxu0 0.0
        %1195 = vmatpush1.msra.mxu0 0.0
        %1196 = vmatprep.subr.mxu0 0.0
        %1197 = vmatpush1.msra.mxu0 0.0
        %1198 = vmatprep.subr.mxu0 0.0
        %1199 = vmatpush1.msra.mxu0 0.0
        %1200 = vmatprep.subr.mxu0 0.0
        %1201 = vmatpush1.msra.mxu0 0.0
        %1202 = vmatprep.subr.mxu0 0.0
        %1203 = vmatpush1.msra.mxu0 0.0
        %1204 = vmatprep.subr.mxu0 0.0
        %1205 = vmatpush1.msra.mxu0 0.0
        %1206 = vmatprep.subr.mxu0 0.0
        %1207 = vmatpush1.msra.mxu0 0.0
        %1208 = vmatprep.subr.mxu0 0.0
        %1209 = vmatpush1.msra.mxu0 0.0
        %1210 = vmatprep.subr.mxu0 0.0
        %1211 = vmatpush1.msra.mxu0 0.0
        %1212 = vmatprep.subr.mxu0 0.0
        %1213 = vmatpush1.msra.mxu0 0.0
        %1214 = vmatprep.subr.mxu0 0.0
        %1215 = vmatpush1.msra.mxu0 0.0
        %1216 = vmatprep.subr.mxu0 0.0
        %1217 = vmatpush1.msra.mxu0 0.0
        %1218 = vmatprep.subr.mxu0 0.0
        %1219 = vmatpush1.msra.mxu0 0.0
        %1220 = vmatprep.mubr.f32.mxu0 0.0
        %1221 = vmatmul.mubr.f32.gmra.mrb[0].mxu0 %v1154
        %v1222 = vpop.f32.mrb[0].mxu0
        %v1223 = vadd.f32 0.0, %v1222
        %v1224 = vpop.f32.mrb[0].mxu0
        %1225 = vdwg.mxu0
        %1226 = vrot.lane.b32.xlu0 %v559, 112
        %v1227 = vpop.permute.xlu0 %1226
        %v1228 = vsel %vm561, %v1227, 0
        %1230 = vmatprep.subr.mxu0 0.0
        %1231 = vmatpush1.msra.mxu0 %v268
        %1232 = vmatprep.subr.mxu0 0.0
        %1233 = vmatpush1.msra.mxu0 %v269
        %1234 = vmatprep.subr.mxu0 0.0
        %1235 = vmatpush1.msra.mxu0 0.0
        %1236 = vmatprep.subr.mxu0 0.0
        %1237 = vmatpush1.msra.mxu0 0.0
        %1238 = vmatprep.subr.mxu0 0.0
        %1239 = vmatpush1.msra.mxu0 0.0
        %1240 = vmatprep.subr.mxu0 0.0
        %1241 = vmatpush1.msra.mxu0 0.0
        %1242 = vmatprep.subr.mxu0 0.0
        %1243 = vmatpush1.msra.mxu0 0.0
        %1244 = vmatprep.subr.mxu0 0.0
        %1245 = vmatpush1.msra.mxu0 0.0
        %1246 = vmatprep.subr.mxu0 0.0
        %1247 = vmatpush1.msra.mxu0 0.0
        %1248 = vmatprep.subr.mxu0 0.0
        %1249 = vmatpush1.msra.mxu0 0.0
        %1250 = vmatprep.subr.mxu0 0.0
        %1251 = vmatpush1.msra.mxu0 0.0
        %1252 = vmatprep.subr.mxu0 0.0
        %1253 = vmatpush1.msra.mxu0 0.0
        %1254 = vmatprep.subr.mxu0 0.0
        %1255 = vmatpush1.msra.mxu0 0.0
        %1256 = vmatprep.subr.mxu0 0.0
        %1257 = vmatpush1.msra.mxu0 0.0
        %1258 = vmatprep.subr.mxu0 0.0
        %1259 = vmatpush1.msra.mxu0 0.0
        %1260 = vmatprep.subr.mxu0 0.0
        %1261 = vmatpush1.msra.mxu0 0.0
        %1262 = vmatprep.subr.mxu0 0.0
        %1263 = vmatpush1.msra.mxu0 0.0
        %1264 = vmatprep.subr.mxu0 0.0
        %1265 = vmatpush1.msra.mxu0 0.0
        %1266 = vmatprep.subr.mxu0 0.0
        %1267 = vmatpush1.msra.mxu0 0.0
        %1268 = vmatprep.subr.mxu0 0.0
        %1269 = vmatpush1.msra.mxu0 0.0
        %1270 = vmatprep.subr.mxu0 0.0
        %1271 = vmatpush1.msra.mxu0 0.0
        %1272 = vmatprep.subr.mxu0 0.0
        %1273 = vmatpush1.msra.mxu0 0.0
        %1274 = vmatprep.subr.mxu0 0.0
        %1275 = vmatpush1.msra.mxu0 0.0
        %1276 = vmatprep.subr.mxu0 0.0
        %1277 = vmatpush1.msra.mxu0 0.0
        %1278 = vmatprep.subr.mxu0 0.0
        %1279 = vmatpush1.msra.mxu0 0.0
        %1280 = vmatprep.subr.mxu0 0.0
        %1281 = vmatpush1.msra.mxu0 0.0
        %1282 = vmatprep.subr.mxu0 0.0
        %1283 = vmatpush1.msra.mxu0 0.0
        %1284 = vmatprep.subr.mxu0 0.0
        %1285 = vmatpush1.msra.mxu0 0.0
        %1286 = vmatprep.subr.mxu0 0.0
        %1287 = vmatpush1.msra.mxu0 0.0
        %1288 = vmatprep.subr.mxu0 0.0
        %1289 = vmatpush1.msra.mxu0 0.0
        %1290 = vmatprep.subr.mxu0 0.0
        %1291 = vmatpush1.msra.mxu0 0.0
        %1292 = vmatprep.subr.mxu0 0.0
        %1293 = vmatpush1.msra.mxu0 0.0
        %1294 = vmatprep.mubr.f32.mxu0 0.0
        %1295 = vmatmul.mubr.f32.gmra.mrb[0].mxu0 %v1228
        %v1296 = vpop.f32.mrb[0].mxu0
        %v1297 = vadd.f32 0.0, %v1296
        %v1298 = vpop.f32.mrb[0].mxu0
        %1299 = vdwg.mxu0
        %1300 = vrot.lane.b32.xlu0 %v559, 96
        %v1301 = vpop.permute.xlu0 %1300
        %v1302 = vsel %vm561, %v1301, 0
        %1304 = vmatprep.subr.mxu0 0.0
        %1305 = vmatpush1.msra.mxu0 %v268
        %1306 = vmatprep.subr.mxu0 0.0
        %1307 = vmatpush1.msra.mxu0 %v269
        %1308 = vmatprep.subr.mxu0 0.0
        %1309 = vmatpush1.msra.mxu0 0.0
        %1310 = vmatprep.subr.mxu0 0.0
        %1311 = vmatpush1.msra.mxu0 0.0
        %1312 = vmatprep.subr.mxu0 0.0
        %1313 = vmatpush1.msra.mxu0 0.0
        %1314 = vmatprep.subr.mxu0 0.0
        %1315 = vmatpush1.msra.mxu0 0.0
        %1316 = vmatprep.subr.mxu0 0.0
        %1317 = vmatpush1.msra.mxu0 0.0
        %1318 = vmatprep.subr.mxu0 0.0
        %1319 = vmatpush1.msra.mxu0 0.0
        %1320 = vmatprep.subr.mxu0 0.0
        %1321 = vmatpush1.msra.mxu0 0.0
        %1322 = vmatprep.subr.mxu0 0.0
        %1323 = vmatpush1.msra.mxu0 0.0
        %1324 = vmatprep.subr.mxu0 0.0
        %1325 = vmatpush1.msra.mxu0 0.0
        %1326 = vmatprep.subr.mxu0 0.0
        %1327 = vmatpush1.msra.mxu0 0.0
        %1328 = vmatprep.subr.mxu0 0.0
        %1329 = vmatpush1.msra.mxu0 0.0
        %1330 = vmatprep.subr.mxu0 0.0
        %1331 = vmatpush1.msra.mxu0 0.0
        %1332 = vmatprep.subr.mxu0 0.0
        %1333 = vmatpush1.msra.mxu0 0.0
        %1334 = vmatprep.subr.mxu0 0.0
        %1335 = vmatpush1.msra.mxu0 0.0
        %1336 = vmatprep.subr.mxu0 0.0
        %1337 = vmatpush1.msra.mxu0 0.0
        %1338 = vmatprep.subr.mxu0 0.0
        %1339 = vmatpush1.msra.mxu0 0.0
        %1340 = vmatprep.subr.mxu0 0.0
        %1341 = vmatpush1.msra.mxu0 0.0
        %1342 = vmatprep.subr.mxu0 0.0
        %1343 = vmatpush1.msra.mxu0 0.0
        %1344 = vmatprep.subr.mxu0 0.0
        %1345 = vmatpush1.msra.mxu0 0.0
        %1346 = vmatprep.subr.mxu0 0.0
        %1347 = vmatpush1.msra.mxu0 0.0
        %1348 = vmatprep.subr.mxu0 0.0
        %1349 = vmatpush1.msra.mxu0 0.0
        %1350 = vmatprep.subr.mxu0 0.0
        %1351 = vmatpush1.msra.mxu0 0.0
        %1352 = vmatprep.subr.mxu0 0.0
        %1353 = vmatpush1.msra.mxu0 0.0
        %1354 = vmatprep.subr.mxu0 0.0
        %1355 = vmatpush1.msra.mxu0 0.0
        %1356 = vmatprep.subr.mxu0 0.0
        %1357 = vmatpush1.msra.mxu0 0.0
        %1358 = vmatprep.subr.mxu0 0.0
        %1359 = vmatpush1.msra.mxu0 0.0
        %1360 = vmatprep.subr.mxu0 0.0
        %1361 = vmatpush1.msra.mxu0 0.0
        %1362 = vmatprep.subr.mxu0 0.0
        %1363 = vmatpush1.msra.mxu0 0.0
        %1364 = vmatprep.subr.mxu0 0.0
        %1365 = vmatpush1.msra.mxu0 0.0
        %1366 = vmatprep.subr.mxu0 0.0
        %1367 = vmatpush1.msra.mxu0 0.0
        %1368 = vmatprep.mubr.f32.mxu0 0.0
        %1369 = vmatmul.mubr.f32.gmra.mrb[0].mxu0 %v1302
        %v1370 = vpop.f32.mrb[0].mxu0
        %v1371 = vadd.f32 0.0, %v1370
        %v1372 = vpop.f32.mrb[0].mxu0
        %1373 = vdwg.mxu0
        %1374 = vrot.lane.b32.xlu0 %v559, 80
        %v1375 = vpop.permute.xlu0 %1374
        %v1376 = vsel %vm561, %v1375, 0
        %1378 = vmatprep.subr.mxu0 0.0
        %1379 = vmatpush1.msra.mxu0 %v268
        %1380 = vmatprep.subr.mxu0 0.0
        %1381 = vmatpush1.msra.mxu0 %v269
        %1382 = vmatprep.subr.mxu0 0.0
        %1383 = vmatpush1.msra.mxu0 0.0
        %1384 = vmatprep.subr.mxu0 0.0
        %1385 = vmatpush1.msra.mxu0 0.0
        %1386 = vmatprep.subr.mxu0 0.0
        %1387 = vmatpush1.msra.mxu0 0.0
        %1388 = vmatprep.subr.mxu0 0.0
        %1389 = vmatpush1.msra.mxu0 0.0
        %1390 = vmatprep.subr.mxu0 0.0
        %1391 = vmatpush1.msra.mxu0 0.0
        %1392 = vmatprep.subr.mxu0 0.0
        %1393 = vmatpush1.msra.mxu0 0.0
        %1394 = vmatprep.subr.mxu0 0.0
        %1395 = vmatpush1.msra.mxu0 0.0
        %1396 = vmatprep.subr.mxu0 0.0
        %1397 = vmatpush1.msra.mxu0 0.0
        %1398 = vmatprep.subr.mxu0 0.0
        %1399 = vmatpush1.msra.mxu0 0.0
        %1400 = vmatprep.subr.mxu0 0.0
        %1401 = vmatpush1.msra.mxu0 0.0
        %1402 = vmatprep.subr.mxu0 0.0
        %1403 = vmatpush1.msra.mxu0 0.0
        %1404 = vmatprep.subr.mxu0 0.0
        %1405 = vmatpush1.msra.mxu0 0.0
        %1406 = vmatprep.subr.mxu0 0.0
        %1407 = vmatpush1.msra.mxu0 0.0
        %1408 = vmatprep.subr.mxu0 0.0
        %1409 = vmatpush1.msra.mxu0 0.0
        %1410 = vmatprep.subr.mxu0 0.0
        %1411 = vmatpush1.msra.mxu0 0.0
        %1412 = vmatprep.subr.mxu0 0.0
        %1413 = vmatpush1.msra.mxu0 0.0
        %1414 = vmatprep.subr.mxu0 0.0
        %1415 = vmatpush1.msra.mxu0 0.0
        %1416 = vmatprep.subr.mxu0 0.0
        %1417 = vmatpush1.msra.mxu0 0.0
        %1418 = vmatprep.subr.mxu0 0.0
        %1419 = vmatpush1.msra.mxu0 0.0
        %1420 = vmatprep.subr.mxu0 0.0
        %1421 = vmatpush1.msra.mxu0 0.0
        %1422 = vmatprep.subr.mxu0 0.0
        %1423 = vmatpush1.msra.mxu0 0.0
        %1424 = vmatprep.subr.mxu0 0.0
        %1425 = vmatpush1.msra.mxu0 0.0
        %1426 = vmatprep.subr.mxu0 0.0
        %1427 = vmatpush1.msra.mxu0 0.0
        %1428 = vmatprep.subr.mxu0 0.0
        %1429 = vmatpush1.msra.mxu0 0.0
        %1430 = vmatprep.subr.mxu0 0.0
        %1431 = vmatpush1.msra.mxu0 0.0
        %1432 = vmatprep.subr.mxu0 0.0
        %1433 = vmatpush1.msra.mxu0 0.0
        %1434 = vmatprep.subr.mxu0 0.0
        %1435 = vmatpush1.msra.mxu0 0.0
        %1436 = vmatprep.subr.mxu0 0.0
        %1437 = vmatpush1.msra.mxu0 0.0
        %1438 = vmatprep.subr.mxu0 0.0
        %1439 = vmatpush1.msra.mxu0 0.0
        %1440 = vmatprep.subr.mxu0 0.0
        %1441 = vmatpush1.msra.mxu0 0.0
        %1442 = vmatprep.mubr.f32.mxu0 0.0
        %1443 = vmatmul.mubr.f32.gmra.mrb[0].mxu0 %v1376
        %v1444 = vpop.f32.mrb[0].mxu0
        %v1445 = vadd.f32 0.0, %v1444
        %v1446 = vpop.f32.mrb[0].mxu0
        %1447 = vdwg.mxu0
        %1448 = vrot.lane.b32.xlu0 %v559, 64
        %v1449 = vpop.permute.xlu0 %1448
        %v1450 = vsel %vm561, %v1449, 0
        %1452 = vmatprep.subr.mxu0 0.0
        %1453 = vmatpush1.msra.mxu0 %v268
        %1454 = vmatprep.subr.mxu0 0.0
        %1455 = vmatpush1.msra.mxu0 %v269
        %1456 = vmatprep.subr.mxu0 0.0
        %1457 = vmatpush1.msra.mxu0 0.0
        %1458 = vmatprep.subr.mxu0 0.0
        %1459 = vmatpush1.msra.mxu0 0.0
        %1460 = vmatprep.subr.mxu0 0.0
        %1461 = vmatpush1.msra.mxu0 0.0
        %1462 = vmatprep.subr.mxu0 0.0
        %1463 = vmatpush1.msra.mxu0 0.0
        %1464 = vmatprep.subr.mxu0 0.0
        %1465 = vmatpush1.msra.mxu0 0.0
        %1466 = vmatprep.subr.mxu0 0.0
        %1467 = vmatpush1.msra.mxu0 0.0
        %1468 = vmatprep.subr.mxu0 0.0
        %1469 = vmatpush1.msra.mxu0 0.0
        %1470 = vmatprep.subr.mxu0 0.0
        %1471 = vmatpush1.msra.mxu0 0.0
        %1472 = vmatprep.subr.mxu0 0.0
        %1473 = vmatpush1.msra.mxu0 0.0
        %1474 = vmatprep.subr.mxu0 0.0
        %1475 = vmatpush1.msra.mxu0 0.0
        %1476 = vmatprep.subr.mxu0 0.0
        %1477 = vmatpush1.msra.mxu0 0.0
        %1478 = vmatprep.subr.mxu0 0.0
        %1479 = vmatpush1.msra.mxu0 0.0
        %1480 = vmatprep.subr.mxu0 0.0
        %1481 = vmatpush1.msra.mxu0 0.0
        %1482 = vmatprep.subr.mxu0 0.0
        %1483 = vmatpush1.msra.mxu0 0.0
        %1484 = vmatprep.subr.mxu0 0.0
        %1485 = vmatpush1.msra.mxu0 0.0
        %1486 = vmatprep.subr.mxu0 0.0
        %1487 = vmatpush1.msra.mxu0 0.0
        %1488 = vmatprep.subr.mxu0 0.0
        %1489 = vmatpush1.msra.mxu0 0.0
        %1490 = vmatprep.subr.mxu0 0.0
        %1491 = vmatpush1.msra.mxu0 0.0
        %1492 = vmatprep.subr.mxu0 0.0
        %1493 = vmatpush1.msra.mxu0 0.0
        %1494 = vmatprep.subr.mxu0 0.0
        %1495 = vmatpush1.msra.mxu0 0.0
        %1496 = vmatprep.subr.mxu0 0.0
        %1497 = vmatpush1.msra.mxu0 0.0
        %1498 = vmatprep.subr.mxu0 0.0
        %1499 = vmatpush1.msra.mxu0 0.0
        %1500 = vmatprep.subr.mxu0 0.0
        %1501 = vmatpush1.msra.mxu0 0.0
        %1502 = vmatprep.subr.mxu0 0.0
        %1503 = vmatpush1.msra.mxu0 0.0
        %1504 = vmatprep.subr.mxu0 0.0
        %1505 = vmatpush1.msra.mxu0 0.0
        %1506 = vmatprep.subr.mxu0 0.0
        %1507 = vmatpush1.msra.mxu0 0.0
        %1508 = vmatprep.subr.mxu0 0.0
        %1509 = vmatpush1.msra.mxu0 0.0
        %1510 = vmatprep.subr.mxu0 0.0
        %1511 = vmatpush1.msra.mxu0 0.0
        %1512 = vmatprep.subr.mxu0 0.0
        %1513 = vmatpush1.msra.mxu0 0.0
        %1514 = vmatprep.subr.mxu0 0.0
        %1515 = vmatpush1.msra.mxu0 0.0
        %1516 = vmatprep.mubr.f32.mxu0 0.0
        %1517 = vmatmul.mubr.f32.gmra.mrb[0].mxu0 %v1450
        %v1518 = vpop.f32.mrb[0].mxu0
        %v1519 = vadd.f32 0.0, %v1518
        %v1520 = vpop.f32.mrb[0].mxu0
        %1521 = vdwg.mxu0
        %1522 = vrot.lane.b32.xlu0 %v559, 48
        %v1523 = vpop.permute.xlu0 %1522
        %v1524 = vsel %vm561, %v1523, 0
        %1526 = vmatprep.subr.mxu0 0.0
        %1527 = vmatpush1.msra.mxu0 %v268
        %1528 = vmatprep.subr.mxu0 0.0
        %1529 = vmatpush1.msra.mxu0 %v269
        %1530 = vmatprep.subr.mxu0 0.0
        %1531 = vmatpush1.msra.mxu0 0.0
        %1532 = vmatprep.subr.mxu0 0.0
        %1533 = vmatpush1.msra.mxu0 0.0
        %1534 = vmatprep.subr.mxu0 0.0
        %1535 = vmatpush1.msra.mxu0 0.0
        %1536 = vmatprep.subr.mxu0 0.0
        %1537 = vmatpush1.msra.mxu0 0.0
        %1538 = vmatprep.subr.mxu0 0.0
        %1539 = vmatpush1.msra.mxu0 0.0
        %1540 = vmatprep.subr.mxu0 0.0
        %1541 = vmatpush1.msra.mxu0 0.0
        %1542 = vmatprep.subr.mxu0 0.0
        %1543 = vmatpush1.msra.mxu0 0.0
        %1544 = vmatprep.subr.mxu0 0.0
        %1545 = vmatpush1.msra.mxu0 0.0
        %1546 = vmatprep.subr.mxu0 0.0
        %1547 = vmatpush1.msra.mxu0 0.0
        %1548 = vmatprep.subr.mxu0 0.0
        %1549 = vmatpush1.msra.mxu0 0.0
        %1550 = vmatprep.subr.mxu0 0.0
        %1551 = vmatpush1.msra.mxu0 0.0
        %1552 = vmatprep.subr.mxu0 0.0
        %1553 = vmatpush1.msra.mxu0 0.0
        %1554 = vmatprep.subr.mxu0 0.0
        %1555 = vmatpush1.msra.mxu0 0.0
        %1556 = vmatprep.subr.mxu0 0.0
        %1557 = vmatpush1.msra.mxu0 0.0
        %1558 = vmatprep.subr.mxu0 0.0
        %1559 = vmatpush1.msra.mxu0 0.0
        %1560 = vmatprep.subr.mxu0 0.0
        %1561 = vmatpush1.msra.mxu0 0.0
        %1562 = vmatprep.subr.mxu0 0.0
        %1563 = vmatpush1.msra.mxu0 0.0
        %1564 = vmatprep.subr.mxu0 0.0
        %1565 = vmatpush1.msra.mxu0 0.0
        %1566 = vmatprep.subr.mxu0 0.0
        %1567 = vmatpush1.msra.mxu0 0.0
        %1568 = vmatprep.subr.mxu0 0.0
        %1569 = vmatpush1.msra.mxu0 0.0
        %1570 = vmatprep.subr.mxu0 0.0
        %1571 = vmatpush1.msra.mxu0 0.0
        %1572 = vmatprep.subr.mxu0 0.0
        %1573 = vmatpush1.msra.mxu0 0.0
        %1574 = vmatprep.subr.mxu0 0.0
        %1575 = vmatpush1.msra.mxu0 0.0
        %1576 = vmatprep.subr.mxu0 0.0
        %1577 = vmatpush1.msra.mxu0 0.0
        %1578 = vmatprep.subr.mxu0 0.0
        %1579 = vmatpush1.msra.mxu0 0.0
        %1580 = vmatprep.subr.mxu0 0.0
        %1581 = vmatpush1.msra.mxu0 0.0
        %1582 = vmatprep.subr.mxu0 0.0
        %1583 = vmatpush1.msra.mxu0 0.0
        %1584 = vmatprep.subr.mxu0 0.0
        %1585 = vmatpush1.msra.mxu0 0.0
        %1586 = vmatprep.subr.mxu0 0.0
        %1587 = vmatpush1.msra.mxu0 0.0
        %1588 = vmatprep.subr.mxu0 0.0
        %1589 = vmatpush1.msra.mxu0 0.0
        %1590 = vmatprep.mubr.f32.mxu0 0.0
        %1591 = vmatmul.mubr.f32.gmra.mrb[0].mxu0 %v1524
        %v1592 = vpop.f32.mrb[0].mxu0
        %v1593 = vadd.f32 0.0, %v1592
        %v1594 = vpop.f32.mrb[0].mxu0
        %1595 = vdwg.mxu0
        %1596 = vrot.lane.b32.xlu0 %v559, 32
        %v1597 = vpop.permute.xlu0 %1596
        %v1598 = vsel %vm561, %v1597, 0
        %1600 = vmatprep.subr.mxu0 0.0
        %1601 = vmatpush1.msra.mxu0 %v268
        %1602 = vmatprep.subr.mxu0 0.0
        %1603 = vmatpush1.msra.mxu0 %v269
        %1604 = vmatprep.subr.mxu0 0.0
        %1605 = vmatpush1.msra.mxu0 0.0
        %1606 = vmatprep.subr.mxu0 0.0
        %1607 = vmatpush1.msra.mxu0 0.0
        %1608 = vmatprep.subr.mxu0 0.0
        %1609 = vmatpush1.msra.mxu0 0.0
        %1610 = vmatprep.subr.mxu0 0.0
        %1611 = vmatpush1.msra.mxu0 0.0
        %1612 = vmatprep.subr.mxu0 0.0
        %1613 = vmatpush1.msra.mxu0 0.0
        %1614 = vmatprep.subr.mxu0 0.0
        %1615 = vmatpush1.msra.mxu0 0.0
        %1616 = vmatprep.subr.mxu0 0.0
        %1617 = vmatpush1.msra.mxu0 0.0
        %1618 = vmatprep.subr.mxu0 0.0
        %1619 = vmatpush1.msra.mxu0 0.0
        %1620 = vmatprep.subr.mxu0 0.0
        %1621 = vmatpush1.msra.mxu0 0.0
        %1622 = vmatprep.subr.mxu0 0.0
        %1623 = vmatpush1.msra.mxu0 0.0
        %1624 = vmatprep.subr.mxu0 0.0
        %1625 = vmatpush1.msra.mxu0 0.0
        %1626 = vmatprep.subr.mxu0 0.0
        %1627 = vmatpush1.msra.mxu0 0.0
        %1628 = vmatprep.subr.mxu0 0.0
        %1629 = vmatpush1.msra.mxu0 0.0
        %1630 = vmatprep.subr.mxu0 0.0
        %1631 = vmatpush1.msra.mxu0 0.0
        %1632 = vmatprep.subr.mxu0 0.0
        %1633 = vmatpush1.msra.mxu0 0.0
        %1634 = vmatprep.subr.mxu0 0.0
        %1635 = vmatpush1.msra.mxu0 0.0
        %1636 = vmatprep.subr.mxu0 0.0
        %1637 = vmatpush1.msra.mxu0 0.0
        %1638 = vmatprep.subr.mxu0 0.0
        %1639 = vmatpush1.msra.mxu0 0.0
        %1640 = vmatprep.subr.mxu0 0.0
        %1641 = vmatpush1.msra.mxu0 0.0
        %1642 = vmatprep.subr.mxu0 0.0
        %1643 = vmatpush1.msra.mxu0 0.0
        %1644 = vmatprep.subr.mxu0 0.0
        %1645 = vmatpush1.msra.mxu0 0.0
        %1646 = vmatprep.subr.mxu0 0.0
        %1647 = vmatpush1.msra.mxu0 0.0
        %1648 = vmatprep.subr.mxu0 0.0
        %1649 = vmatpush1.msra.mxu0 0.0
        %1650 = vmatprep.subr.mxu0 0.0
        %1651 = vmatpush1.msra.mxu0 0.0
        %1652 = vmatprep.subr.mxu0 0.0
        %1653 = vmatpush1.msra.mxu0 0.0
        %1654 = vmatprep.subr.mxu0 0.0
        %1655 = vmatpush1.msra.mxu0 0.0
        %1656 = vmatprep.subr.mxu0 0.0
        %1657 = vmatpush1.msra.mxu0 0.0
        %1658 = vmatprep.subr.mxu0 0.0
        %1659 = vmatpush1.msra.mxu0 0.0
        %1660 = vmatprep.subr.mxu0 0.0
        %1661 = vmatpush1.msra.mxu0 0.0
        %1662 = vmatprep.subr.mxu0 0.0
        %1663 = vmatpush1.msra.mxu0 0.0
        %1664 = vmatprep.mubr.f32.mxu0 0.0
        %1665 = vmatmul.mubr.f32.gmra.mrb[0].mxu0 %v1598
        %v1666 = vpop.f32.mrb[0].mxu0
        %v1667 = vadd.f32 0.0, %v1666
        %v1668 = vpop.f32.mrb[0].mxu0
        %1669 = vdwg.mxu0
        %1670 = vrot.lane.b32.xlu0 %v559, 16
        %v1671 = vpop.permute.xlu0 %1670
        %v1672 = vsel %vm561, %v1671, 0
        %1674 = vmatprep.subr.mxu0 0.0
        %1675 = vmatpush1.msra.mxu0 %v268
        %1676 = vmatprep.subr.mxu0 0.0
        %1677 = vmatpush1.msra.mxu0 %v269
        %1678 = vmatprep.subr.mxu0 0.0
        %1679 = vmatpush1.msra.mxu0 0.0
        %1680 = vmatprep.subr.mxu0 0.0
        %1681 = vmatpush1.msra.mxu0 0.0
        %1682 = vmatprep.subr.mxu0 0.0
        %1683 = vmatpush1.msra.mxu0 0.0
        %1684 = vmatprep.subr.mxu0 0.0
        %1685 = vmatpush1.msra.mxu0 0.0
        %1686 = vmatprep.subr.mxu0 0.0
        %1687 = vmatpush1.msra.mxu0 0.0
        %1688 = vmatprep.subr.mxu0 0.0
        %1689 = vmatpush1.msra.mxu0 0.0
        %1690 = vmatprep.subr.mxu0 0.0
        %1691 = vmatpush1.msra.mxu0 0.0
        %1692 = vmatprep.subr.mxu0 0.0
        %1693 = vmatpush1.msra.mxu0 0.0
        %1694 = vmatprep.subr.mxu0 0.0
        %1695 = vmatpush1.msra.mxu0 0.0
        %1696 = vmatprep.subr.mxu0 0.0
        %1697 = vmatpush1.msra.mxu0 0.0
        %1698 = vmatprep.subr.mxu0 0.0
        %1699 = vmatpush1.msra.mxu0 0.0
        %1700 = vmatprep.subr.mxu0 0.0
        %1701 = vmatpush1.msra.mxu0 0.0
        %1702 = vmatprep.subr.mxu0 0.0
        %1703 = vmatpush1.msra.mxu0 0.0
        %1704 = vmatprep.subr.mxu0 0.0
        %1705 = vmatpush1.msra.mxu0 0.0
        %1706 = vmatprep.subr.mxu0 0.0
        %1707 = vmatpush1.msra.mxu0 0.0
        %1708 = vmatprep.subr.mxu0 0.0
        %1709 = vmatpush1.msra.mxu0 0.0
        %1710 = vmatprep.subr.mxu0 0.0
        %1711 = vmatpush1.msra.mxu0 0.0
        %1712 = vmatprep.subr.mxu0 0.0
        %1713 = vmatpush1.msra.mxu0 0.0
        %1714 = vmatprep.subr.mxu0 0.0
        %1715 = vmatpush1.msra.mxu0 0.0
        %1716 = vmatprep.subr.mxu0 0.0
        %1717 = vmatpush1.msra.mxu0 0.0
        %1718 = vmatprep.subr.mxu0 0.0
        %1719 = vmatpush1.msra.mxu0 0.0
        %1720 = vmatprep.subr.mxu0 0.0
        %1721 = vmatpush1.msra.mxu0 0.0
        %1722 = vmatprep.subr.mxu0 0.0
        %1723 = vmatpush1.msra.mxu0 0.0
        %1724 = vmatprep.subr.mxu0 0.0
        %1725 = vmatpush1.msra.mxu0 0.0
        %1726 = vmatprep.subr.mxu0 0.0
        %1727 = vmatpush1.msra.mxu0 0.0
        %1728 = vmatprep.subr.mxu0 0.0
        %1729 = vmatpush1.msra.mxu0 0.0
        %1730 = vmatprep.subr.mxu0 0.0
        %1731 = vmatpush1.msra.mxu0 0.0
        %1732 = vmatprep.subr.mxu0 0.0
        %1733 = vmatpush1.msra.mxu0 0.0
        %1734 = vmatprep.subr.mxu0 0.0
        %1735 = vmatpush1.msra.mxu0 0.0
        %1736 = vmatprep.subr.mxu0 0.0
        %1737 = vmatpush1.msra.mxu0 0.0
        %1738 = vmatprep.mubr.f32.mxu0 0.0
        %1739 = vmatmul.mubr.f32.gmra.mrb[0].mxu0 %v1672
        %v1740 = vpop.f32.mrb[0].mxu0
        %v1741 = vadd.f32 0.0, %v1740
        %v1742 = vpop.f32.mrb[0].mxu0
        %1743 = vdwg.mxu0
        %v1745 = vcombine.high %v632, %v632
        %v1747 = vunpack.c.l.s4 1966171168
        %v1748 = vunpack.c.0.s8 %v1747
        %v1749 = vlaneseq
        %v1750 = vshrl.u32 %v1749, 7
        %v1751 = vsub.s32 %v1748, %v1750
        %v1752 = vrot.slane %v632, %v1751
        %v1754 = vunpack.c.l.s4 1966171168
        %v1755 = vunpack.c.0.s8 %v1754
        %v1756 = vlaneseq
        %v1757 = vshrl.u32 %v1756, 7
        %v1758 = vsub.s32 %v1755, %v1757
        %v1759 = vrot.slane %v1745, %v1758
        %v1760 = vcombine.high %v1752, %v1752
        %v1762 = vunpack.c.l.s4 1966171168
        %v1763 = vunpack.c.0.s8 %v1762
        %v1764 = vlaneseq
        %v1765 = vshrl.u32 %v1764, 7
        %v1766 = vsub.s32 %v1763, %v1765
        %v1767 = vrot.slane %v1752, %v1766
        %v1769 = vunpack.c.l.s4 1966171168
        %v1770 = vunpack.c.0.s8 %v1769
        %v1771 = vlaneseq
        %v1772 = vshrl.u32 %v1771, 7
        %v1773 = vsub.s32 %v1770, %v1772
        %v1774 = vrot.slane %v1759, %v1773
        %v1776 = vunpack.c.l.s4 1966171168
        %v1777 = vunpack.c.0.s8 %v1776
        %v1778 = vlaneseq
        %v1779 = vshrl.u32 %v1778, 7
        %v1780 = vsub.s32 %v1777, %v1779
        %v1781 = vrot.slane %v1760, %v1780
        %v1782 = vcombine.high %v1767, %v1767
        %v1783 = vcombine.high %v1781, %v1781
        %vm1789 = vcmask 253952
        %1790 = vst.msk [vmem:[%s244] sm:$0x1] %vm1789, %v1767
        %1791 = vst.msk [vmem:[%s244 + $0x20] sm:$0x1] %vm1789, %v1781
        %1792 = vst.msk [vmem:[%s244 + $0x40] sm:$0x1] %vm1789, %v1782
        %1793 = vst.msk [vmem:[%s244 + $0x60] sm:$0x1] %vm1789, %v1783
        %1794 = vst.msk [vmem:[%s244 + $0x80] sm:$0x1] %vm1789, %v1774
        %v1795 = vmul.f32 %v632, 0.516129
        %v1796 = vmul.f32 %v706, 0.48387095
        %v1797 = vadd.f32 %v1795, %v1796
        %v1799 = vcombine.high %v1797, %v1797
        %v1801 = vunpack.c.l.s4 1966171168
        %v1802 = vunpack.c.0.s8 %v1801
        %v1803 = vlaneseq
        %v1804 = vshrl.u32 %v1803, 7
        %v1805 = vsub.s32 %v1802, %v1804
        %v1806 = vrot.slane %v1797, %v1805
        %v1808 = vunpack.c.l.s4 1966171168
        %v1809 = vunpack.c.0.s8 %v1808
        %v1810 = vlaneseq
        %v1811 = vshrl.u32 %v1810, 7
        %v1812 = vsub.s32 %v1809, %v1811
        %v1813 = vrot.slane %v1799, %v1812
        %v1814 = vcombine.high %v1806, %v1806
        %v1816 = vunpack.c.l.s4 1966171168
        %v1817 = vunpack.c.0.s8 %v1816
        %v1818 = vlaneseq
        %v1819 = vshrl.u32 %v1818, 7
        %v1820 = vsub.s32 %v1817, %v1819
        %v1821 = vrot.slane %v1806, %v1820
        %v1823 = vunpack.c.l.s4 1966171168
        %v1824 = vunpack.c.0.s8 %v1823
        %v1825 = vlaneseq
        %v1826 = vshrl.u32 %v1825, 7
        %v1827 = vsub.s32 %v1824, %v1826
        %v1828 = vrot.slane %v1813, %v1827
        %v1830 = vunpack.c.l.s4 1966171168
        %v1831 = vunpack.c.0.s8 %v1830
        %v1832 = vlaneseq
        %v1833 = vshrl.u32 %v1832, 7
        %v1834 = vsub.s32 %v1831, %v1833
        %v1835 = vrot.slane %v1814, %v1834
        %v1836 = vcombine.high %v1821, %v1821
        %v1837 = vcombine.high %v1835, %v1835
        %1843 = vst.msk [vmem:[%s244 + $0x1] sm:$0x1] %vm1789, %v1821
        %1844 = vst.msk [vmem:[%s244 + $0x21] sm:$0x1] %vm1789, %v1835
        %1845 = vst.msk [vmem:[%s244 + $0x41] sm:$0x1] %vm1789, %v1836
        %1846 = vst.msk [vmem:[%s244 + $0x61] sm:$0x1] %vm1789, %v1837
        %1847 = vst.msk [vmem:[%s244 + $0x81] sm:$0x1] %vm1789, %v1828
        %v1848 = vmul.f32 %v632, 0.032258064
        %v1849 = vmul.f32 %v706, 0.9677419
        %v1850 = vadd.f32 %v1848, %v1849
        %v1852 = vcombine.high %v1850, %v1850
        %v1854 = vunpack.c.l.s4 1966171168
        %v1855 = vunpack.c.0.s8 %v1854
        %v1856 = vlaneseq
        %v1857 = vshrl.u32 %v1856, 7
        %v1858 = vsub.s32 %v1855, %v1857
        %v1859 = vrot.slane %v1850, %v1858
        %v1861 = vunpack.c.l.s4 1966171168
        %v1862 = vunpack.c.0.s8 %v1861
        %v1863 = vlaneseq
        %v1864 = vshrl.u32 %v1863, 7
        %v1865 = vsub.s32 %v1862, %v1864
        %v1866 = vrot.slane %v1852, %v1865
        %v1867 = vcombine.high %v1859, %v1859
        %v1869 = vunpack.c.l.s4 1966171168
        %v1870 = vunpack.c.0.s8 %v1869
        %v1871 = vlaneseq
        %v1872 = vshrl.u32 %v1871, 7
        %v1873 = vsub.s32 %v1870, %v1872
        %v1874 = vrot.slane %v1859, %v1873
        %v1876 = vunpack.c.l.s4 1966171168
        %v1877 = vunpack.c.0.s8 %v1876
        %v1878 = vlaneseq
        %v1879 = vshrl.u32 %v1878, 7
        %v1880 = vsub.s32 %v1877, %v1879
        %v1881 = vrot.slane %v1866, %v1880
        %v1883 = vunpack.c.l.s4 1966171168
        %v1884 = vunpack.c.0.s8 %v1883
        %v1885 = vlaneseq
        %v1886 = vshrl.u32 %v1885, 7
        %v1887 = vsub.s32 %v1884, %v1886
        %v1888 = vrot.slane %v1867, %v1887
        %v1889 = vcombine.high %v1874, %v1874
        %v1890 = vcombine.high %v1888, %v1888
        %1896 = vst.msk [vmem:[%s244 + $0x2] sm:$0x1] %vm1789, %v1874
        %1897 = vst.msk [vmem:[%s244 + $0x22] sm:$0x1] %vm1789, %v1888
        %1898 = vst.msk [vmem:[%s244 + $0x42] sm:$0x1] %vm1789, %v1889
        %1899 = vst.msk [vmem:[%s244 + $0x62] sm:$0x1] %vm1789, %v1890
        %1900 = vst.msk [vmem:[%s244 + $0x82] sm:$0x1] %vm1789, %v1881
        %v1901 = vmul.f32 %v706, 0.5483871
        %v1902 = vmul.f32 %v780, 0.4516129
        %v1903 = vadd.f32 %v1901, %v1902
        %v1905 = vcombine.high %v1903, %v1903
        %v1907 = vunpack.c.l.s4 1966171168
        %v1908 = vunpack.c.0.s8 %v1907
        %v1909 = vlaneseq
        %v1910 = vshrl.u32 %v1909, 7
        %v1911 = vsub.s32 %v1908, %v1910
        %v1912 = vrot.slane %v1903, %v1911
        %v1914 = vunpack.c.l.s4 1966171168
        %v1915 = vunpack.c.0.s8 %v1914
        %v1916 = vlaneseq
        %v1917 = vshrl.u32 %v1916, 7
        %v1918 = vsub.s32 %v1915, %v1917
        %v1919 = vrot.slane %v1905, %v1918
        %v1920 = vcombine.high %v1912, %v1912
        %v1922 = vunpack.c.l.s4 1966171168
        %v1923 = vunpack.c.0.s8 %v1922
        %v1924 = vlaneseq
        %v1925 = vshrl.u32 %v1924, 7
        %v1926 = vsub.s32 %v1923, %v1925
        %v1927 = vrot.slane %v1912, %v1926
        %v1929 = vunpack.c.l.s4 1966171168
        %v1930 = vunpack.c.0.s8 %v1929
        %v1931 = vlaneseq
        %v1932 = vshrl.u32 %v1931, 7
        %v1933 = vsub.s32 %v1930, %v1932
        %v1934 = vrot.slane %v1919, %v1933
        %v1936 = vunpack.c.l.s4 1966171168
        %v1937 = vunpack.c.0.s8 %v1936
        %v1938 = vlaneseq
        %v1939 = vshrl.u32 %v1938, 7
        %v1940 = vsub.s32 %v1937, %v1939
        %v1941 = vrot.slane %v1920, %v1940
        %v1942 = vcombine.high %v1927, %v1927
        %v1943 = vcombine.high %v1941, %v1941
        %1949 = vst.msk [vmem:[%s244 + $0x3] sm:$0x1] %vm1789, %v1927
        %1950 = vst.msk [vmem:[%s244 + $0x23] sm:$0x1] %vm1789, %v1941
        %1951 = vst.msk [vmem:[%s244 + $0x43] sm:$0x1] %vm1789, %v1942
        %1952 = vst.msk [vmem:[%s244 + $0x63] sm:$0x1] %vm1789, %v1943
        %1953 = vst.msk [vmem:[%s244 + $0x83] sm:$0x1] %vm1789, %v1934
        %v1954 = vmul.f32 %v706, 0.06451613
        %v1955 = vmul.f32 %v780, 0.9354839
        %v1956 = vadd.f32 %v1954, %v1955
        %v1958 = vcombine.high %v1956, %v1956
        %v1960 = vunpack.c.l.s4 1966171168
        %v1961 = vunpack.c.0.s8 %v1960
        %v1962 = vlaneseq
        %v1963 = vshrl.u32 %v1962, 7
        %v1964 = vsub.s32 %v1961, %v1963
        %v1965 = vrot.slane %v1956, %v1964
        %v1967 = vunpack.c.l.s4 1966171168
        %v1968 = vunpack.c.0.s8 %v1967
        %v1969 = vlaneseq
        %v1970 = vshrl.u32 %v1969, 7
        %v1971 = vsub.s32 %v1968, %v1970
        %v1972 = vrot.slane %v1958, %v1971
        %v1973 = vcombine.high %v1965, %v1965
        %v1975 = vunpack.c.l.s4 1966171168
        %v1976 = vunpack.c.0.s8 %v1975
        %v1977 = vlaneseq
        %v1978 = vshrl.u32 %v1977, 7
        %v1979 = vsub.s32 %v1976, %v1978
        %v1980 = vrot.slane %v1965, %v1979
        %v1982 = vunpack.c.l.s4 1966171168
        %v1983 = vunpack.c.0.s8 %v1982
        %v1984 = vlaneseq
        %v1985 = vshrl.u32 %v1984, 7
        %v1986 = vsub.s32 %v1983, %v1985
        %v1987 = vrot.slane %v1972, %v1986
        %v1989 = vunpack.c.l.s4 1966171168
        %v1990 = vunpack.c.0.s8 %v1989
        %v1991 = vlaneseq
        %v1992 = vshrl.u32 %v1991, 7
        %v1993 = vsub.s32 %v1990, %v1992
        %v1994 = vrot.slane %v1973, %v1993
        %v1995 = vcombine.high %v1980, %v1980
        %v1996 = vcombine.high %v1994, %v1994
        %2002 = vst.msk [vmem:[%s244 + $0x4] sm:$0x1] %vm1789, %v1980
        %2003 = vst.msk [vmem:[%s244 + $0x24] sm:$0x1] %vm1789, %v1994
        %2004 = vst.msk [vmem:[%s244 + $0x44] sm:$0x1] %vm1789, %v1995
        %2005 = vst.msk [vmem:[%s244 + $0x64] sm:$0x1] %vm1789, %v1996
        %2006 = vst.msk [vmem:[%s244 + $0x84] sm:$0x1] %vm1789, %v1987
        %v2007 = vmul.f32 %v780, 0.58064514
        %v2008 = vmul.f32 %v854, 0.41935483
        %v2009 = vadd.f32 %v2007, %v2008
        %v2011 = vcombine.high %v2009, %v2009
        %v2013 = vunpack.c.l.s4 1966171168
        %v2014 = vunpack.c.0.s8 %v2013
        %v2015 = vlaneseq
        %v2016 = vshrl.u32 %v2015, 7
        %v2017 = vsub.s32 %v2014, %v2016
        %v2018 = vrot.slane %v2009, %v2017
        %v2020 = vunpack.c.l.s4 1966171168
        %v2021 = vunpack.c.0.s8 %v2020
        %v2022 = vlaneseq
        %v2023 = vshrl.u32 %v2022, 7
        %v2024 = vsub.s32 %v2021, %v2023
        %v2025 = vrot.slane %v2011, %v2024
        %v2026 = vcombine.high %v2018, %v2018
        %v2028 = vunpack.c.l.s4 1966171168
        %v2029 = vunpack.c.0.s8 %v2028
        %v2030 = vlaneseq
        %v2031 = vshrl.u32 %v2030, 7
        %v2032 = vsub.s32 %v2029, %v2031
        %v2033 = vrot.slane %v2018, %v2032
        %v2035 = vunpack.c.l.s4 1966171168
        %v2036 = vunpack.c.0.s8 %v2035
        %v2037 = vlaneseq
        %v2038 = vshrl.u32 %v2037, 7
        %v2039 = vsub.s32 %v2036, %v2038
        %v2040 = vrot.slane %v2025, %v2039
        %v2042 = vunpack.c.l.s4 1966171168
        %v2043 = vunpack.c.0.s8 %v2042
        %v2044 = vlaneseq
        %v2045 = vshrl.u32 %v2044, 7
        %v2046 = vsub.s32 %v2043, %v2045
        %v2047 = vrot.slane %v2026, %v2046
        %v2048 = vcombine.high %v2033, %v2033
        %v2049 = vcombine.high %v2047, %v2047
        %2055 = vst.msk [vmem:[%s244 + $0x5] sm:$0x1] %vm1789, %v2033
        %2056 = vst.msk [vmem:[%s244 + $0x25] sm:$0x1] %vm1789, %v2047
        %2057 = vst.msk [vmem:[%s244 + $0x45] sm:$0x1] %vm1789, %v2048
        %2058 = vst.msk [vmem:[%s244 + $0x65] sm:$0x1] %vm1789, %v2049
        %2059 = vst.msk [vmem:[%s244 + $0x85] sm:$0x1] %vm1789, %v2040
        %v2060 = vmul.f32 %v780, 0.09677419
        %v2061 = vmul.f32 %v854, 0.9032258
        %v2062 = vadd.f32 %v2060, %v2061
        %v2064 = vcombine.high %v2062, %v2062
        %v2066 = vunpack.c.l.s4 1966171168
        %v2067 = vunpack.c.0.s8 %v2066
        %v2068 = vlaneseq
        %v2069 = vshrl.u32 %v2068, 7
        %v2070 = vsub.s32 %v2067, %v2069
        %v2071 = vrot.slane %v2062, %v2070
        %v2073 = vunpack.c.l.s4 1966171168
        %v2074 = vunpack.c.0.s8 %v2073
        %v2075 = vlaneseq
        %v2076 = vshrl.u32 %v2075, 7
        %v2077 = vsub.s32 %v2074, %v2076
        %v2078 = vrot.slane %v2064, %v2077
        %v2079 = vcombine.high %v2071, %v2071
        %v2081 = vunpack.c.l.s4 1966171168
        %v2082 = vunpack.c.0.s8 %v2081
        %v2083 = vlaneseq
        %v2084 = vshrl.u32 %v2083, 7
        %v2085 = vsub.s32 %v2082, %v2084
        %v2086 = vrot.slane %v2071, %v2085
        %v2088 = vunpack.c.l.s4 1966171168
        %v2089 = vunpack.c.0.s8 %v2088
        %v2090 = vlaneseq
        %v2091 = vshrl.u32 %v2090, 7
        %v2092 = vsub.s32 %v2089, %v2091
        %v2093 = vrot.slane %v2078, %v2092
        %v2095 = vunpack.c.l.s4 1966171168
        %v2096 = vunpack.c.0.s8 %v2095
        %v2097 = vlaneseq
        %v2098 = vshrl.u32 %v2097, 7
        %v2099 = vsub.s32 %v2096, %v2098
        %v2100 = vrot.slane %v2079, %v2099
        %v2101 = vcombine.high %v2086, %v2086
        %v2102 = vcombine.high %v2100, %v2100
        %2108 = vst.msk [vmem:[%s244 + $0x6] sm:$0x1] %vm1789, %v2086
        %2109 = vst.msk [vmem:[%s244 + $0x26] sm:$0x1] %vm1789, %v2100
        %2110 = vst.msk [vmem:[%s244 + $0x46] sm:$0x1] %vm1789, %v2101
        %2111 = vst.msk [vmem:[%s244 + $0x66] sm:$0x1] %vm1789, %v2102
        %2112 = vst.msk [vmem:[%s244 + $0x86] sm:$0x1] %vm1789, %v2093
        %v2113 = vmul.f32 %v854, 0.61290324
        %v2114 = vmul.f32 %v928, 0.38709676
        %v2115 = vadd.f32 %v2113, %v2114
        %v2117 = vcombine.high %v2115, %v2115
        %v2119 = vunpack.c.l.s4 1966171168
        %v2120 = vunpack.c.0.s8 %v2119
        %v2121 = vlaneseq
        %v2122 = vshrl.u32 %v2121, 7
        %v2123 = vsub.s32 %v2120, %v2122
        %v2124 = vrot.slane %v2115, %v2123
        %v2126 = vunpack.c.l.s4 1966171168
        %v2127 = vunpack.c.0.s8 %v2126
        %v2128 = vlaneseq
        %v2129 = vshrl.u32 %v2128, 7
        %v2130 = vsub.s32 %v2127, %v2129
        %v2131 = vrot.slane %v2117, %v2130
        %v2132 = vcombine.high %v2124, %v2124
        %v2134 = vunpack.c.l.s4 1966171168
        %v2135 = vunpack.c.0.s8 %v2134
        %v2136 = vlaneseq
        %v2137 = vshrl.u32 %v2136, 7
        %v2138 = vsub.s32 %v2135, %v2137
        %v2139 = vrot.slane %v2124, %v2138
        %v2141 = vunpack.c.l.s4 1966171168
        %v2142 = vunpack.c.0.s8 %v2141
        %v2143 = vlaneseq
        %v2144 = vshrl.u32 %v2143, 7
        %v2145 = vsub.s32 %v2142, %v2144
        %v2146 = vrot.slane %v2131, %v2145
        %v2148 = vunpack.c.l.s4 1966171168
        %v2149 = vunpack.c.0.s8 %v2148
        %v2150 = vlaneseq
        %v2151 = vshrl.u32 %v2150, 7
        %v2152 = vsub.s32 %v2149, %v2151
        %v2153 = vrot.slane %v2132, %v2152
        %v2154 = vcombine.high %v2139, %v2139
        %v2155 = vcombine.high %v2153, %v2153
        %2161 = vst.msk [vmem:[%s244 + $0x7] sm:$0x1] %vm1789, %v2139
        %2162 = vst.msk [vmem:[%s244 + $0x27] sm:$0x1] %vm1789, %v2153
        %2163 = vst.msk [vmem:[%s244 + $0x47] sm:$0x1] %vm1789, %v2154
        %2164 = vst.msk [vmem:[%s244 + $0x67] sm:$0x1] %vm1789, %v2155
        %2165 = vst.msk [vmem:[%s244 + $0x87] sm:$0x1] %vm1789, %v2146
        %v2166 = vmul.f32 %v854, 0.12903225
        %v2167 = vmul.f32 %v928, 0.87096775
        %v2168 = vadd.f32 %v2166, %v2167
        %v2170 = vcombine.high %v2168, %v2168
        %v2172 = vunpack.c.l.s4 1966171168
        %v2173 = vunpack.c.0.s8 %v2172
        %v2174 = vlaneseq
        %v2175 = vshrl.u32 %v2174, 7
        %v2176 = vsub.s32 %v2173, %v2175
        %v2177 = vrot.slane %v2168, %v2176
        %v2179 = vunpack.c.l.s4 1966171168
        %v2180 = vunpack.c.0.s8 %v2179
        %v2181 = vlaneseq
        %v2182 = vshrl.u32 %v2181, 7
        %v2183 = vsub.s32 %v2180, %v2182
        %v2184 = vrot.slane %v2170, %v2183
        %v2185 = vcombine.high %v2177, %v2177
        %v2187 = vunpack.c.l.s4 1966171168
        %v2188 = vunpack.c.0.s8 %v2187
        %v2189 = vlaneseq
        %v2190 = vshrl.u32 %v2189, 7
        %v2191 = vsub.s32 %v2188, %v2190
        %v2192 = vrot.slane %v2177, %v2191
        %v2194 = vunpack.c.l.s4 1966171168
        %v2195 = vunpack.c.0.s8 %v2194
        %v2196 = vlaneseq
        %v2197 = vshrl.u32 %v2196, 7
        %v2198 = vsub.s32 %v2195, %v2197
        %v2199 = vrot.slane %v2184, %v2198
        %v2201 = vunpack.c.l.s4 1966171168
        %v2202 = vunpack.c.0.s8 %v2201
        %v2203 = vlaneseq
        %v2204 = vshrl.u32 %v2203, 7
        %v2205 = vsub.s32 %v2202, %v2204
        %v2206 = vrot.slane %v2185, %v2205
        %v2207 = vcombine.high %v2192, %v2192
        %v2208 = vcombine.high %v2206, %v2206
        %2214 = vst.msk [vmem:[%s244 + $0x8] sm:$0x1] %vm1789, %v2192
        %2215 = vst.msk [vmem:[%s244 + $0x28] sm:$0x1] %vm1789, %v2206
        %2216 = vst.msk [vmem:[%s244 + $0x48] sm:$0x1] %vm1789, %v2207
        %2217 = vst.msk [vmem:[%s244 + $0x68] sm:$0x1] %vm1789, %v2208
        %2218 = vst.msk [vmem:[%s244 + $0x88] sm:$0x1] %vm1789, %v2199
        %v2219 = vmul.f32 %v928, 0.6451613
        %v2220 = vmul.f32 %v1002, 0.3548387
        %v2221 = vadd.f32 %v2219, %v2220
        %v2223 = vcombine.high %v2221, %v2221
        %v2225 = vunpack.c.l.s4 1966171168
        %v2226 = vunpack.c.0.s8 %v2225
        %v2227 = vlaneseq
        %v2228 = vshrl.u32 %v2227, 7
        %v2229 = vsub.s32 %v2226, %v2228
        %v2230 = vrot.slane %v2221, %v2229
        %v2232 = vunpack.c.l.s4 1966171168
        %v2233 = vunpack.c.0.s8 %v2232
        %v2234 = vlaneseq
        %v2235 = vshrl.u32 %v2234, 7
        %v2236 = vsub.s32 %v2233, %v2235
        %v2237 = vrot.slane %v2223, %v2236
        %v2238 = vcombine.high %v2230, %v2230
        %v2240 = vunpack.c.l.s4 1966171168
        %v2241 = vunpack.c.0.s8 %v2240
        %v2242 = vlaneseq
        %v2243 = vshrl.u32 %v2242, 7
        %v2244 = vsub.s32 %v2241, %v2243
        %v2245 = vrot.slane %v2230, %v2244
        %v2247 = vunpack.c.l.s4 1966171168
        %v2248 = vunpack.c.0.s8 %v2247
        %v2249 = vlaneseq
        %v2250 = vshrl.u32 %v2249, 7
        %v2251 = vsub.s32 %v2248, %v2250
        %v2252 = vrot.slane %v2237, %v2251
        %v2254 = vunpack.c.l.s4 1966171168
        %v2255 = vunpack.c.0.s8 %v2254
        %v2256 = vlaneseq
        %v2257 = vshrl.u32 %v2256, 7
        %v2258 = vsub.s32 %v2255, %v2257
        %v2259 = vrot.slane %v2238, %v2258
        %v2260 = vcombine.high %v2245, %v2245
        %v2261 = vcombine.high %v2259, %v2259
        %2267 = vst.msk [vmem:[%s244 + $0x9] sm:$0x1] %vm1789, %v2245
        %2268 = vst.msk [vmem:[%s244 + $0x29] sm:$0x1] %vm1789, %v2259
        %2269 = vst.msk [vmem:[%s244 + $0x49] sm:$0x1] %vm1789, %v2260
        %2270 = vst.msk [vmem:[%s244 + $0x69] sm:$0x1] %vm1789, %v2261
        %2271 = vst.msk [vmem:[%s244 + $0x89] sm:$0x1] %vm1789, %v2252
        %v2272 = vmul.f32 %v928, 0.16129032
        %v2273 = vmul.f32 %v1002, 0.83870965
        %v2274 = vadd.f32 %v2272, %v2273
        %v2276 = vcombine.high %v2274, %v2274
        %v2278 = vunpack.c.l.s4 1966171168
        %v2279 = vunpack.c.0.s8 %v2278
        %v2280 = vlaneseq
        %v2281 = vshrl.u32 %v2280, 7
        %v2282 = vsub.s32 %v2279, %v2281
        %v2283 = vrot.slane %v2274, %v2282
        %v2285 = vunpack.c.l.s4 1966171168
        %v2286 = vunpack.c.0.s8 %v2285
        %v2287 = vlaneseq
        %v2288 = vshrl.u32 %v2287, 7
        %v2289 = vsub.s32 %v2286, %v2288
        %v2290 = vrot.slane %v2276, %v2289
        %v2291 = vcombine.high %v2283, %v2283
        %v2293 = vunpack.c.l.s4 1966171168
        %v2294 = vunpack.c.0.s8 %v2293
        %v2295 = vlaneseq
        %v2296 = vshrl.u32 %v2295, 7
        %v2297 = vsub.s32 %v2294, %v2296
        %v2298 = vrot.slane %v2283, %v2297
        %v2300 = vunpack.c.l.s4 1966171168
        %v2301 = vunpack.c.0.s8 %v2300
        %v2302 = vlaneseq
        %v2303 = vshrl.u32 %v2302, 7
        %v2304 = vsub.s32 %v2301, %v2303
        %v2305 = vrot.slane %v2290, %v2304
        %v2307 = vunpack.c.l.s4 1966171168
        %v2308 = vunpack.c.0.s8 %v2307
        %v2309 = vlaneseq
        %v2310 = vshrl.u32 %v2309, 7
        %v2311 = vsub.s32 %v2308, %v2310
        %v2312 = vrot.slane %v2291, %v2311
        %v2313 = vcombine.high %v2298, %v2298
        %v2314 = vcombine.high %v2312, %v2312
        %2320 = vst.msk [vmem:[%s244 + $0xa] sm:$0x1] %vm1789, %v2298
        %2321 = vst.msk [vmem:[%s244 + $0x2a] sm:$0x1] %vm1789, %v2312
        %2322 = vst.msk [vmem:[%s244 + $0x4a] sm:$0x1] %vm1789, %v2313
        %2323 = vst.msk [vmem:[%s244 + $0x6a] sm:$0x1] %vm1789, %v2314
        %2324 = vst.msk [vmem:[%s244 + $0x8a] sm:$0x1] %vm1789, %v2305
        %v2325 = vmul.f32 %v1002, 0.67741936
        %v2326 = vmul.f32 %v1076, 0.32258064
        %v2327 = vadd.f32 %v2325, %v2326
        %v2329 = vcombine.high %v2327, %v2327
        %v2331 = vunpack.c.l.s4 1966171168
        %v2332 = vunpack.c.0.s8 %v2331
        %v2333 = vlaneseq
        %v2334 = vshrl.u32 %v2333, 7
        %v2335 = vsub.s32 %v2332, %v2334
        %v2336 = vrot.slane %v2327, %v2335
        %v2338 = vunpack.c.l.s4 1966171168
        %v2339 = vunpack.c.0.s8 %v2338
        %v2340 = vlaneseq
        %v2341 = vshrl.u32 %v2340, 7
        %v2342 = vsub.s32 %v2339, %v2341
        %v2343 = vrot.slane %v2329, %v2342
        %v2344 = vcombine.high %v2336, %v2336
        %v2346 = vunpack.c.l.s4 1966171168
        %v2347 = vunpack.c.0.s8 %v2346
        %v2348 = vlaneseq
        %v2349 = vshrl.u32 %v2348, 7
        %v2350 = vsub.s32 %v2347, %v2349
        %v2351 = vrot.slane %v2336, %v2350
        %v2353 = vunpack.c.l.s4 1966171168
        %v2354 = vunpack.c.0.s8 %v2353
        %v2355 = vlaneseq
        %v2356 = vshrl.u32 %v2355, 7
        %v2357 = vsub.s32 %v2354, %v2356
        %v2358 = vrot.slane %v2343, %v2357
        %v2360 = vunpack.c.l.s4 1966171168
        %v2361 = vunpack.c.0.s8 %v2360
        %v2362 = vlaneseq
        %v2363 = vshrl.u32 %v2362, 7
        %v2364 = vsub.s32 %v2361, %v2363
        %v2365 = vrot.slane %v2344, %v2364
        %v2366 = vcombine.high %v2351, %v2351
        %v2367 = vcombine.high %v2365, %v2365
        %2373 = vst.msk [vmem:[%s244 + $0xb] sm:$0x1] %vm1789, %v2351
        %2374 = vst.msk [vmem:[%s244 + $0x2b] sm:$0x1] %vm1789, %v2365
        %2375 = vst.msk [vmem:[%s244 + $0x4b] sm:$0x1] %vm1789, %v2366
        %2376 = vst.msk [vmem:[%s244 + $0x6b] sm:$0x1] %vm1789, %v2367
        %2377 = vst.msk [vmem:[%s244 + $0x8b] sm:$0x1] %vm1789, %v2358
        %v2378 = vmul.f32 %v1002, 0.19354838
        %v2379 = vmul.f32 %v1076, 0.8064516
        %v2380 = vadd.f32 %v2378, %v2379
        %v2382 = vcombine.high %v2380, %v2380
        %v2384 = vunpack.c.l.s4 1966171168
        %v2385 = vunpack.c.0.s8 %v2384
        %v2386 = vlaneseq
        %v2387 = vshrl.u32 %v2386, 7
        %v2388 = vsub.s32 %v2385, %v2387
        %v2389 = vrot.slane %v2380, %v2388
        %v2391 = vunpack.c.l.s4 1966171168
        %v2392 = vunpack.c.0.s8 %v2391
        %v2393 = vlaneseq
        %v2394 = vshrl.u32 %v2393, 7
        %v2395 = vsub.s32 %v2392, %v2394
        %v2396 = vrot.slane %v2382, %v2395
        %v2397 = vcombine.high %v2389, %v2389
        %v2399 = vunpack.c.l.s4 1966171168
        %v2400 = vunpack.c.0.s8 %v2399
        %v2401 = vlaneseq
        %v2402 = vshrl.u32 %v2401, 7
        %v2403 = vsub.s32 %v2400, %v2402
        %v2404 = vrot.slane %v2389, %v2403
        %v2406 = vunpack.c.l.s4 1966171168
        %v2407 = vunpack.c.0.s8 %v2406
        %v2408 = vlaneseq
        %v2409 = vshrl.u32 %v2408, 7
        %v2410 = vsub.s32 %v2407, %v2409
        %v2411 = vrot.slane %v2396, %v2410
        %v2413 = vunpack.c.l.s4 1966171168
        %v2414 = vunpack.c.0.s8 %v2413
        %v2415 = vlaneseq
        %v2416 = vshrl.u32 %v2415, 7
        %v2417 = vsub.s32 %v2414, %v2416
        %v2418 = vrot.slane %v2397, %v2417
        %v2419 = vcombine.high %v2404, %v2404
        %v2420 = vcombine.high %v2418, %v2418
        %2426 = vst.msk [vmem:[%s244 + $0xc] sm:$0x1] %vm1789, %v2404
        %2427 = vst.msk [vmem:[%s244 + $0x2c] sm:$0x1] %vm1789, %v2418
        %2428 = vst.msk [vmem:[%s244 + $0x4c] sm:$0x1] %vm1789, %v2419
        %2429 = vst.msk [vmem:[%s244 + $0x6c] sm:$0x1] %vm1789, %v2420
        %2430 = vst.msk [vmem:[%s244 + $0x8c] sm:$0x1] %vm1789, %v2411
        %v2431 = vmul.f32 %v1076, 0.7096774
        %v2432 = vmul.f32 %v1150, 0.29032257
        %v2433 = vadd.f32 %v2431, %v2432
        %v2435 = vcombine.high %v2433, %v2433
        %v2437 = vunpack.c.l.s4 1966171168
        %v2438 = vunpack.c.0.s8 %v2437
        %v2439 = vlaneseq
        %v2440 = vshrl.u32 %v2439, 7
        %v2441 = vsub.s32 %v2438, %v2440
        %v2442 = vrot.slane %v2433, %v2441
        %v2444 = vunpack.c.l.s4 1966171168
        %v2445 = vunpack.c.0.s8 %v2444
        %v2446 = vlaneseq
        %v2447 = vshrl.u32 %v2446, 7
        %v2448 = vsub.s32 %v2445, %v2447
        %v2449 = vrot.slane %v2435, %v2448
        %v2450 = vcombine.high %v2442, %v2442
        %v2452 = vunpack.c.l.s4 1966171168
        %v2453 = vunpack.c.0.s8 %v2452
        %v2454 = vlaneseq
        %v2455 = vshrl.u32 %v2454, 7
        %v2456 = vsub.s32 %v2453, %v2455
        %v2457 = vrot.slane %v2442, %v2456
        %v2459 = vunpack.c.l.s4 1966171168
        %v2460 = vunpack.c.0.s8 %v2459
        %v2461 = vlaneseq
        %v2462 = vshrl.u32 %v2461, 7
        %v2463 = vsub.s32 %v2460, %v2462
        %v2464 = vrot.slane %v2449, %v2463
        %v2466 = vunpack.c.l.s4 1966171168
        %v2467 = vunpack.c.0.s8 %v2466
        %v2468 = vlaneseq
        %v2469 = vshrl.u32 %v2468, 7
        %v2470 = vsub.s32 %v2467, %v2469
        %v2471 = vrot.slane %v2450, %v2470
        %v2472 = vcombine.high %v2457, %v2457
        %v2473 = vcombine.high %v2471, %v2471
        %2479 = vst.msk [vmem:[%s244 + $0xd] sm:$0x1] %vm1789, %v2457
        %2480 = vst.msk [vmem:[%s244 + $0x2d] sm:$0x1] %vm1789, %v2471
        %2481 = vst.msk [vmem:[%s244 + $0x4d] sm:$0x1] %vm1789, %v2472
        %2482 = vst.msk [vmem:[%s244 + $0x6d] sm:$0x1] %vm1789, %v2473
        %2483 = vst.msk [vmem:[%s244 + $0x8d] sm:$0x1] %vm1789, %v2464
        %v2484 = vmul.f32 %v1076, 0.22580644
        %v2485 = vmul.f32 %v1150, 0.7741935
        %v2486 = vadd.f32 %v2484, %v2485
        %v2488 = vcombine.high %v2486, %v2486
        %v2490 = vunpack.c.l.s4 1966171168
        %v2491 = vunpack.c.0.s8 %v2490
        %v2492 = vlaneseq
        %v2493 = vshrl.u32 %v2492, 7
        %v2494 = vsub.s32 %v2491, %v2493
        %v2495 = vrot.slane %v2486, %v2494
        %v2497 = vunpack.c.l.s4 1966171168
        %v2498 = vunpack.c.0.s8 %v2497
        %v2499 = vlaneseq
        %v2500 = vshrl.u32 %v2499, 7
        %v2501 = vsub.s32 %v2498, %v2500
        %v2502 = vrot.slane %v2488, %v2501
        %v2503 = vcombine.high %v2495, %v2495
        %v2505 = vunpack.c.l.s4 1966171168
        %v2506 = vunpack.c.0.s8 %v2505
        %v2507 = vlaneseq
        %v2508 = vshrl.u32 %v2507, 7
        %v2509 = vsub.s32 %v2506, %v2508
        %v2510 = vrot.slane %v2495, %v2509
        %v2512 = vunpack.c.l.s4 1966171168
        %v2513 = vunpack.c.0.s8 %v2512
        %v2514 = vlaneseq
        %v2515 = vshrl.u32 %v2514, 7
        %v2516 = vsub.s32 %v2513, %v2515
        %v2517 = vrot.slane %v2502, %v2516
        %v2519 = vunpack.c.l.s4 1966171168
        %v2520 = vunpack.c.0.s8 %v2519
        %v2521 = vlaneseq
        %v2522 = vshrl.u32 %v2521, 7
        %v2523 = vsub.s32 %v2520, %v2522
        %v2524 = vrot.slane %v2503, %v2523
        %v2525 = vcombine.high %v2510, %v2510
        %v2526 = vcombine.high %v2524, %v2524
        %2532 = vst.msk [vmem:[%s244 + $0xe] sm:$0x1] %vm1789, %v2510
        %2533 = vst.msk [vmem:[%s244 + $0x2e] sm:$0x1] %vm1789, %v2524
        %2534 = vst.msk [vmem:[%s244 + $0x4e] sm:$0x1] %vm1789, %v2525
        %2535 = vst.msk [vmem:[%s244 + $0x6e] sm:$0x1] %vm1789, %v2526
        %2536 = vst.msk [vmem:[%s244 + $0x8e] sm:$0x1] %vm1789, %v2517
        %v2537 = vmul.f32 %v1150, 0.7419355
        %v2538 = vmul.f32 %v1223, 0.2580645
        %v2539 = vadd.f32 %v2537, %v2538
        %v2541 = vcombine.high %v2539, %v2539
        %v2543 = vunpack.c.l.s4 1966171168
        %v2544 = vunpack.c.0.s8 %v2543
        %v2545 = vlaneseq
        %v2546 = vshrl.u32 %v2545, 7
        %v2547 = vsub.s32 %v2544, %v2546
        %v2548 = vrot.slane %v2539, %v2547
        %v2550 = vunpack.c.l.s4 1966171168
        %v2551 = vunpack.c.0.s8 %v2550
        %v2552 = vlaneseq
        %v2553 = vshrl.u32 %v2552, 7
        %v2554 = vsub.s32 %v2551, %v2553
        %v2555 = vrot.slane %v2541, %v2554
        %v2556 = vcombine.high %v2548, %v2548
        %v2558 = vunpack.c.l.s4 1966171168
        %v2559 = vunpack.c.0.s8 %v2558
        %v2560 = vlaneseq
        %v2561 = vshrl.u32 %v2560, 7
        %v2562 = vsub.s32 %v2559, %v2561
        %v2563 = vrot.slane %v2548, %v2562
        %v2565 = vunpack.c.l.s4 1966171168
        %v2566 = vunpack.c.0.s8 %v2565
        %v2567 = vlaneseq
        %v2568 = vshrl.u32 %v2567, 7
        %v2569 = vsub.s32 %v2566, %v2568
        %v2570 = vrot.slane %v2555, %v2569
        %v2572 = vunpack.c.l.s4 1966171168
        %v2573 = vunpack.c.0.s8 %v2572
        %v2574 = vlaneseq
        %v2575 = vshrl.u32 %v2574, 7
        %v2576 = vsub.s32 %v2573, %v2575
        %v2577 = vrot.slane %v2556, %v2576
        %v2578 = vcombine.high %v2563, %v2563
        %v2579 = vcombine.high %v2577, %v2577
        %2585 = vst.msk [vmem:[%s244 + $0xf] sm:$0x1] %vm1789, %v2563
        %2586 = vst.msk [vmem:[%s244 + $0x2f] sm:$0x1] %vm1789, %v2577
        %2587 = vst.msk [vmem:[%s244 + $0x4f] sm:$0x1] %vm1789, %v2578
        %2588 = vst.msk [vmem:[%s244 + $0x6f] sm:$0x1] %vm1789, %v2579
        %2589 = vst.msk [vmem:[%s244 + $0x8f] sm:$0x1] %vm1789, %v2570
        %v2590 = vmul.f32 %v1150, 0.2580645
        %v2591 = vmul.f32 %v1223, 0.7419355
        %v2592 = vadd.f32 %v2590, %v2591
        %v2594 = vcombine.high %v2592, %v2592
        %v2596 = vunpack.c.l.s4 1966171168
        %v2597 = vunpack.c.0.s8 %v2596
        %v2598 = vlaneseq
        %v2599 = vshrl.u32 %v2598, 7
        %v2600 = vsub.s32 %v2597, %v2599
        %v2601 = vrot.slane %v2592, %v2600
        %v2603 = vunpack.c.l.s4 1966171168
        %v2604 = vunpack.c.0.s8 %v2603
        %v2605 = vlaneseq
        %v2606 = vshrl.u32 %v2605, 7
        %v2607 = vsub.s32 %v2604, %v2606
        %v2608 = vrot.slane %v2594, %v2607
        %v2609 = vcombine.high %v2601, %v2601
        %v2611 = vunpack.c.l.s4 1966171168
        %v2612 = vunpack.c.0.s8 %v2611
        %v2613 = vlaneseq
        %v2614 = vshrl.u32 %v2613, 7
        %v2615 = vsub.s32 %v2612, %v2614
        %v2616 = vrot.slane %v2601, %v2615
        %v2618 = vunpack.c.l.s4 1966171168
        %v2619 = vunpack.c.0.s8 %v2618
        %v2620 = vlaneseq
        %v2621 = vshrl.u32 %v2620, 7
        %v2622 = vsub.s32 %v2619, %v2621
        %v2623 = vrot.slane %v2608, %v2622
        %v2625 = vunpack.c.l.s4 1966171168
        %v2626 = vunpack.c.0.s8 %v2625
        %v2627 = vlaneseq
        %v2628 = vshrl.u32 %v2627, 7
        %v2629 = vsub.s32 %v2626, %v2628
        %v2630 = vrot.slane %v2609, %v2629
        %v2631 = vcombine.high %v2616, %v2616
        %v2632 = vcombine.high %v2630, %v2630
        %2638 = vst.msk [vmem:[%s244 + $0x10] sm:$0x1] %vm1789, %v2616
        %2639 = vst.msk [vmem:[%s244 + $0x30] sm:$0x1] %vm1789, %v2630
        %2640 = vst.msk [vmem:[%s244 + $0x50] sm:$0x1] %vm1789, %v2631
        %2641 = vst.msk [vmem:[%s244 + $0x70] sm:$0x1] %vm1789, %v2632
        %2642 = vst.msk [vmem:[%s244 + $0x90] sm:$0x1] %vm1789, %v2623
        %v2643 = vmul.f32 %v1223, 0.7741935
        %v2644 = vmul.f32 %v1297, 0.22580644
        %v2645 = vadd.f32 %v2643, %v2644
        %v2647 = vcombine.high %v2645, %v2645
        %v2649 = vunpack.c.l.s4 1966171168
        %v2650 = vunpack.c.0.s8 %v2649
        %v2651 = vlaneseq
        %v2652 = vshrl.u32 %v2651, 7
        %v2653 = vsub.s32 %v2650, %v2652
        %v2654 = vrot.slane %v2645, %v2653
        %v2656 = vunpack.c.l.s4 1966171168
        %v2657 = vunpack.c.0.s8 %v2656
        %v2658 = vlaneseq
        %v2659 = vshrl.u32 %v2658, 7
        %v2660 = vsub.s32 %v2657, %v2659
        %v2661 = vrot.slane %v2647, %v2660
        %v2662 = vcombine.high %v2654, %v2654
        %v2664 = vunpack.c.l.s4 1966171168
        %v2665 = vunpack.c.0.s8 %v2664
        %v2666 = vlaneseq
        %v2667 = vshrl.u32 %v2666, 7
        %v2668 = vsub.s32 %v2665, %v2667
        %v2669 = vrot.slane %v2654, %v2668
        %v2671 = vunpack.c.l.s4 1966171168
        %v2672 = vunpack.c.0.s8 %v2671
        %v2673 = vlaneseq
        %v2674 = vshrl.u32 %v2673, 7
        %v2675 = vsub.s32 %v2672, %v2674
        %v2676 = vrot.slane %v2661, %v2675
        %v2678 = vunpack.c.l.s4 1966171168
        %v2679 = vunpack.c.0.s8 %v2678
        %v2680 = vlaneseq
        %v2681 = vshrl.u32 %v2680, 7
        %v2682 = vsub.s32 %v2679, %v2681
        %v2683 = vrot.slane %v2662, %v2682
        %v2684 = vcombine.high %v2669, %v2669
        %v2685 = vcombine.high %v2683, %v2683
        %2691 = vst.msk [vmem:[%s244 + $0x11] sm:$0x1] %vm1789, %v2669
        %2692 = vst.msk [vmem:[%s244 + $0x31] sm:$0x1] %vm1789, %v2683
        %2693 = vst.msk [vmem:[%s244 + $0x51] sm:$0x1] %vm1789, %v2684
        %2694 = vst.msk [vmem:[%s244 + $0x71] sm:$0x1] %vm1789, %v2685
        %2695 = vst.msk [vmem:[%s244 + $0x91] sm:$0x1] %vm1789, %v2676
        %v2696 = vmul.f32 %v1223, 0.29032257
        %v2697 = vmul.f32 %v1297, 0.7096774
        %v2698 = vadd.f32 %v2696, %v2697
        %v2700 = vcombine.high %v2698, %v2698
        %v2702 = vunpack.c.l.s4 1966171168
        %v2703 = vunpack.c.0.s8 %v2702
        %v2704 = vlaneseq
        %v2705 = vshrl.u32 %v2704, 7
        %v2706 = vsub.s32 %v2703, %v2705
        %v2707 = vrot.slane %v2698, %v2706
        %v2709 = vunpack.c.l.s4 1966171168
        %v2710 = vunpack.c.0.s8 %v2709
        %v2711 = vlaneseq
        %v2712 = vshrl.u32 %v2711, 7
        %v2713 = vsub.s32 %v2710, %v2712
        %v2714 = vrot.slane %v2700, %v2713
        %v2715 = vcombine.high %v2707, %v2707
        %v2717 = vunpack.c.l.s4 1966171168
        %v2718 = vunpack.c.0.s8 %v2717
        %v2719 = vlaneseq
        %v2720 = vshrl.u32 %v2719, 7
        %v2721 = vsub.s32 %v2718, %v2720
        %v2722 = vrot.slane %v2707, %v2721
        %v2724 = vunpack.c.l.s4 1966171168
        %v2725 = vunpack.c.0.s8 %v2724
        %v2726 = vlaneseq
        %v2727 = vshrl.u32 %v2726, 7
        %v2728 = vsub.s32 %v2725, %v2727
        %v2729 = vrot.slane %v2714, %v2728
        %v2731 = vunpack.c.l.s4 1966171168
        %v2732 = vunpack.c.0.s8 %v2731
        %v2733 = vlaneseq
        %v2734 = vshrl.u32 %v2733, 7
        %v2735 = vsub.s32 %v2732, %v2734
        %v2736 = vrot.slane %v2715, %v2735
        %v2737 = vcombine.high %v2722, %v2722
        %v2738 = vcombine.high %v2736, %v2736
        %2744 = vst.msk [vmem:[%s244 + $0x12] sm:$0x1] %vm1789, %v2722
        %2745 = vst.msk [vmem:[%s244 + $0x32] sm:$0x1] %vm1789, %v2736
        %2746 = vst.msk [vmem:[%s244 + $0x52] sm:$0x1] %vm1789, %v2737
        %2747 = vst.msk [vmem:[%s244 + $0x72] sm:$0x1] %vm1789, %v2738
        %2748 = vst.msk [vmem:[%s244 + $0x92] sm:$0x1] %vm1789, %v2729
        %v2749 = vmul.f32 %v1297, 0.8064516
        %v2750 = vmul.f32 %v1371, 0.19354838
        %v2751 = vadd.f32 %v2749, %v2750
        %v2753 = vcombine.high %v2751, %v2751
        %v2755 = vunpack.c.l.s4 1966171168
        %v2756 = vunpack.c.0.s8 %v2755
        %v2757 = vlaneseq
        %v2758 = vshrl.u32 %v2757, 7
        %v2759 = vsub.s32 %v2756, %v2758
        %v2760 = vrot.slane %v2751, %v2759
        %v2762 = vunpack.c.l.s4 1966171168
        %v2763 = vunpack.c.0.s8 %v2762
        %v2764 = vlaneseq
        %v2765 = vshrl.u32 %v2764, 7
        %v2766 = vsub.s32 %v2763, %v2765
        %v2767 = vrot.slane %v2753, %v2766
        %v2768 = vcombine.high %v2760, %v2760
        %v2770 = vunpack.c.l.s4 1966171168
        %v2771 = vunpack.c.0.s8 %v2770
        %v2772 = vlaneseq
        %v2773 = vshrl.u32 %v2772, 7
        %v2774 = vsub.s32 %v2771, %v2773
        %v2775 = vrot.slane %v2760, %v2774
        %v2777 = vunpack.c.l.s4 1966171168
        %v2778 = vunpack.c.0.s8 %v2777
        %v2779 = vlaneseq
        %v2780 = vshrl.u32 %v2779, 7
        %v2781 = vsub.s32 %v2778, %v2780
        %v2782 = vrot.slane %v2767, %v2781
        %v2784 = vunpack.c.l.s4 1966171168
        %v2785 = vunpack.c.0.s8 %v2784
        %v2786 = vlaneseq
        %v2787 = vshrl.u32 %v2786, 7
        %v2788 = vsub.s32 %v2785, %v2787
        %v2789 = vrot.slane %v2768, %v2788
        %v2790 = vcombine.high %v2775, %v2775
        %v2791 = vcombine.high %v2789, %v2789
        %2797 = vst.msk [vmem:[%s244 + $0x13] sm:$0x1] %vm1789, %v2775
        %2798 = vst.msk [vmem:[%s244 + $0x33] sm:$0x1] %vm1789, %v2789
        %2799 = vst.msk [vmem:[%s244 + $0x53] sm:$0x1] %vm1789, %v2790
        %2800 = vst.msk [vmem:[%s244 + $0x73] sm:$0x1] %vm1789, %v2791
        %2801 = vst.msk [vmem:[%s244 + $0x93] sm:$0x1] %vm1789, %v2782
        %v2802 = vmul.f32 %v1297, 0.32258064
        %v2803 = vmul.f32 %v1371, 0.67741936
        %v2804 = vadd.f32 %v2802, %v2803
        %v2806 = vcombine.high %v2804, %v2804
        %v2808 = vunpack.c.l.s4 1966171168
        %v2809 = vunpack.c.0.s8 %v2808
        %v2810 = vlaneseq
        %v2811 = vshrl.u32 %v2810, 7
        %v2812 = vsub.s32 %v2809, %v2811
        %v2813 = vrot.slane %v2804, %v2812
        %v2815 = vunpack.c.l.s4 1966171168
        %v2816 = vunpack.c.0.s8 %v2815
        %v2817 = vlaneseq
        %v2818 = vshrl.u32 %v2817, 7
        %v2819 = vsub.s32 %v2816, %v2818
        %v2820 = vrot.slane %v2806, %v2819
        %v2821 = vcombine.high %v2813, %v2813
        %v2823 = vunpack.c.l.s4 1966171168
        %v2824 = vunpack.c.0.s8 %v2823
        %v2825 = vlaneseq
        %v2826 = vshrl.u32 %v2825, 7
        %v2827 = vsub.s32 %v2824, %v2826
        %v2828 = vrot.slane %v2813, %v2827
        %v2830 = vunpack.c.l.s4 1966171168
        %v2831 = vunpack.c.0.s8 %v2830
        %v2832 = vlaneseq
        %v2833 = vshrl.u32 %v2832, 7
        %v2834 = vsub.s32 %v2831, %v2833
        %v2835 = vrot.slane %v2820, %v2834
        %v2837 = vunpack.c.l.s4 1966171168
        %v2838 = vunpack.c.0.s8 %v2837
        %v2839 = vlaneseq
        %v2840 = vshrl.u32 %v2839, 7
        %v2841 = vsub.s32 %v2838, %v2840
        %v2842 = vrot.slane %v2821, %v2841
        %v2843 = vcombine.high %v2828, %v2828
        %v2844 = vcombine.high %v2842, %v2842
        %2850 = vst.msk [vmem:[%s244 + $0x14] sm:$0x1] %vm1789, %v2828
        %2851 = vst.msk [vmem:[%s244 + $0x34] sm:$0x1] %vm1789, %v2842
        %2852 = vst.msk [vmem:[%s244 + $0x54] sm:$0x1] %vm1789, %v2843
        %2853 = vst.msk [vmem:[%s244 + $0x74] sm:$0x1] %vm1789, %v2844
        %2854 = vst.msk [vmem:[%s244 + $0x94] sm:$0x1] %vm1789, %v2835
        %v2855 = vmul.f32 %v1371, 0.83870965
        %v2856 = vmul.f32 %v1445, 0.16129032
        %v2857 = vadd.f32 %v2855, %v2856
        %v2859 = vcombine.high %v2857, %v2857
        %v2861 = vunpack.c.l.s4 1966171168
        %v2862 = vunpack.c.0.s8 %v2861
        %v2863 = vlaneseq
        %v2864 = vshrl.u32 %v2863, 7
        %v2865 = vsub.s32 %v2862, %v2864
        %v2866 = vrot.slane %v2857, %v2865
        %v2868 = vunpack.c.l.s4 1966171168
        %v2869 = vunpack.c.0.s8 %v2868
        %v2870 = vlaneseq
        %v2871 = vshrl.u32 %v2870, 7
        %v2872 = vsub.s32 %v2869, %v2871
        %v2873 = vrot.slane %v2859, %v2872
        %v2874 = vcombine.high %v2866, %v2866
        %v2876 = vunpack.c.l.s4 1966171168
        %v2877 = vunpack.c.0.s8 %v2876
        %v2878 = vlaneseq
        %v2879 = vshrl.u32 %v2878, 7
        %v2880 = vsub.s32 %v2877, %v2879
        %v2881 = vrot.slane %v2866, %v2880
        %v2883 = vunpack.c.l.s4 1966171168
        %v2884 = vunpack.c.0.s8 %v2883
        %v2885 = vlaneseq
        %v2886 = vshrl.u32 %v2885, 7
        %v2887 = vsub.s32 %v2884, %v2886
        %v2888 = vrot.slane %v2873, %v2887
        %v2890 = vunpack.c.l.s4 1966171168
        %v2891 = vunpack.c.0.s8 %v2890
        %v2892 = vlaneseq
        %v2893 = vshrl.u32 %v2892, 7
        %v2894 = vsub.s32 %v2891, %v2893
        %v2895 = vrot.slane %v2874, %v2894
        %v2896 = vcombine.high %v2881, %v2881
        %v2897 = vcombine.high %v2895, %v2895
        %2903 = vst.msk [vmem:[%s244 + $0x15] sm:$0x1] %vm1789, %v2881
        %2904 = vst.msk [vmem:[%s244 + $0x35] sm:$0x1] %vm1789, %v2895
        %2905 = vst.msk [vmem:[%s244 + $0x55] sm:$0x1] %vm1789, %v2896
        %2906 = vst.msk [vmem:[%s244 + $0x75] sm:$0x1] %vm1789, %v2897
        %2907 = vst.msk [vmem:[%s244 + $0x95] sm:$0x1] %vm1789, %v2888
        %v2908 = vmul.f32 %v1371, 0.3548387
        %v2909 = vmul.f32 %v1445, 0.6451613
        %v2910 = vadd.f32 %v2908, %v2909
        %v2912 = vcombine.high %v2910, %v2910
        %v2914 = vunpack.c.l.s4 1966171168
        %v2915 = vunpack.c.0.s8 %v2914
        %v2916 = vlaneseq
        %v2917 = vshrl.u32 %v2916, 7
        %v2918 = vsub.s32 %v2915, %v2917
        %v2919 = vrot.slane %v2910, %v2918
        %v2921 = vunpack.c.l.s4 1966171168
        %v2922 = vunpack.c.0.s8 %v2921
        %v2923 = vlaneseq
        %v2924 = vshrl.u32 %v2923, 7
        %v2925 = vsub.s32 %v2922, %v2924
        %v2926 = vrot.slane %v2912, %v2925
        %v2927 = vcombine.high %v2919, %v2919
        %v2929 = vunpack.c.l.s4 1966171168
        %v2930 = vunpack.c.0.s8 %v2929
        %v2931 = vlaneseq
        %v2932 = vshrl.u32 %v2931, 7
        %v2933 = vsub.s32 %v2930, %v2932
        %v2934 = vrot.slane %v2919, %v2933
        %v2936 = vunpack.c.l.s4 1966171168
        %v2937 = vunpack.c.0.s8 %v2936
        %v2938 = vlaneseq
        %v2939 = vshrl.u32 %v2938, 7
        %v2940 = vsub.s32 %v2937, %v2939
        %v2941 = vrot.slane %v2926, %v2940
        %v2943 = vunpack.c.l.s4 1966171168
        %v2944 = vunpack.c.0.s8 %v2943
        %v2945 = vlaneseq
        %v2946 = vshrl.u32 %v2945, 7
        %v2947 = vsub.s32 %v2944, %v2946
        %v2948 = vrot.slane %v2927, %v2947
        %v2949 = vcombine.high %v2934, %v2934
        %v2950 = vcombine.high %v2948, %v2948
        %2956 = vst.msk [vmem:[%s244 + $0x16] sm:$0x1] %vm1789, %v2934
        %2957 = vst.msk [vmem:[%s244 + $0x36] sm:$0x1] %vm1789, %v2948
        %2958 = vst.msk [vmem:[%s244 + $0x56] sm:$0x1] %vm1789, %v2949
        %2959 = vst.msk [vmem:[%s244 + $0x76] sm:$0x1] %vm1789, %v2950
        %2960 = vst.msk [vmem:[%s244 + $0x96] sm:$0x1] %vm1789, %v2941
        %v2961 = vmul.f32 %v1445, 0.87096775
        %v2962 = vmul.f32 %v1519, 0.12903225
        %v2963 = vadd.f32 %v2961, %v2962
        %v2965 = vcombine.high %v2963, %v2963
        %v2967 = vunpack.c.l.s4 1966171168
        %v2968 = vunpack.c.0.s8 %v2967
        %v2969 = vlaneseq
        %v2970 = vshrl.u32 %v2969, 7
        %v2971 = vsub.s32 %v2968, %v2970
        %v2972 = vrot.slane %v2963, %v2971
        %v2974 = vunpack.c.l.s4 1966171168
        %v2975 = vunpack.c.0.s8 %v2974
        %v2976 = vlaneseq
        %v2977 = vshrl.u32 %v2976, 7
        %v2978 = vsub.s32 %v2975, %v2977
        %v2979 = vrot.slane %v2965, %v2978
        %v2980 = vcombine.high %v2972, %v2972
        %v2982 = vunpack.c.l.s4 1966171168
        %v2983 = vunpack.c.0.s8 %v2982
        %v2984 = vlaneseq
        %v2985 = vshrl.u32 %v2984, 7
        %v2986 = vsub.s32 %v2983, %v2985
        %v2987 = vrot.slane %v2972, %v2986
        %v2989 = vunpack.c.l.s4 1966171168
        %v2990 = vunpack.c.0.s8 %v2989
        %v2991 = vlaneseq
        %v2992 = vshrl.u32 %v2991, 7
        %v2993 = vsub.s32 %v2990, %v2992
        %v2994 = vrot.slane %v2979, %v2993
        %v2996 = vunpack.c.l.s4 1966171168
        %v2997 = vunpack.c.0.s8 %v2996
        %v2998 = vlaneseq
        %v2999 = vshrl.u32 %v2998, 7
        %v3000 = vsub.s32 %v2997, %v2999
        %v3001 = vrot.slane %v2980, %v3000
        %v3002 = vcombine.high %v2987, %v2987
        %v3003 = vcombine.high %v3001, %v3001
        %3009 = vst.msk [vmem:[%s244 + $0x17] sm:$0x1] %vm1789, %v2987
        %3010 = vst.msk [vmem:[%s244 + $0x37] sm:$0x1] %vm1789, %v3001
        %3011 = vst.msk [vmem:[%s244 + $0x57] sm:$0x1] %vm1789, %v3002
        %3012 = vst.msk [vmem:[%s244 + $0x77] sm:$0x1] %vm1789, %v3003
        %3013 = vst.msk [vmem:[%s244 + $0x97] sm:$0x1] %vm1789, %v2994
        %v3014 = vmul.f32 %v1445, 0.38709676
        %v3015 = vmul.f32 %v1519, 0.61290324
        %v3016 = vadd.f32 %v3014, %v3015
        %v3018 = vcombine.high %v3016, %v3016
        %v3020 = vunpack.c.l.s4 1966171168
        %v3021 = vunpack.c.0.s8 %v3020
        %v3022 = vlaneseq
        %v3023 = vshrl.u32 %v3022, 7
        %v3024 = vsub.s32 %v3021, %v3023
        %v3025 = vrot.slane %v3016, %v3024
        %v3027 = vunpack.c.l.s4 1966171168
        %v3028 = vunpack.c.0.s8 %v3027
        %v3029 = vlaneseq
        %v3030 = vshrl.u32 %v3029, 7
        %v3031 = vsub.s32 %v3028, %v3030
        %v3032 = vrot.slane %v3018, %v3031
        %v3033 = vcombine.high %v3025, %v3025
        %v3035 = vunpack.c.l.s4 1966171168
        %v3036 = vunpack.c.0.s8 %v3035
        %v3037 = vlaneseq
        %v3038 = vshrl.u32 %v3037, 7
        %v3039 = vsub.s32 %v3036, %v3038
        %v3040 = vrot.slane %v3025, %v3039
        %v3042 = vunpack.c.l.s4 1966171168
        %v3043 = vunpack.c.0.s8 %v3042
        %v3044 = vlaneseq
        %v3045 = vshrl.u32 %v3044, 7
        %v3046 = vsub.s32 %v3043, %v3045
        %v3047 = vrot.slane %v3032, %v3046
        %v3049 = vunpack.c.l.s4 1966171168
        %v3050 = vunpack.c.0.s8 %v3049
        %v3051 = vlaneseq
        %v3052 = vshrl.u32 %v3051, 7
        %v3053 = vsub.s32 %v3050, %v3052
        %v3054 = vrot.slane %v3033, %v3053
        %v3055 = vcombine.high %v3040, %v3040
        %v3056 = vcombine.high %v3054, %v3054
        %3062 = vst.msk [vmem:[%s244 + $0x18] sm:$0x1] %vm1789, %v3040
        %3063 = vst.msk [vmem:[%s244 + $0x38] sm:$0x1] %vm1789, %v3054
        %3064 = vst.msk [vmem:[%s244 + $0x58] sm:$0x1] %vm1789, %v3055
        %3065 = vst.msk [vmem:[%s244 + $0x78] sm:$0x1] %vm1789, %v3056
        %3066 = vst.msk [vmem:[%s244 + $0x98] sm:$0x1] %vm1789, %v3047
        %v3067 = vmul.f32 %v1519, 0.9032258
        %v3068 = vmul.f32 %v1593, 0.09677419
        %v3069 = vadd.f32 %v3067, %v3068
        %v3071 = vcombine.high %v3069, %v3069
        %v3073 = vunpack.c.l.s4 1966171168
        %v3074 = vunpack.c.0.s8 %v3073
        %v3075 = vlaneseq
        %v3076 = vshrl.u32 %v3075, 7
        %v3077 = vsub.s32 %v3074, %v3076
        %v3078 = vrot.slane %v3069, %v3077
        %v3080 = vunpack.c.l.s4 1966171168
        %v3081 = vunpack.c.0.s8 %v3080
        %v3082 = vlaneseq
        %v3083 = vshrl.u32 %v3082, 7
        %v3084 = vsub.s32 %v3081, %v3083
        %v3085 = vrot.slane %v3071, %v3084
        %v3086 = vcombine.high %v3078, %v3078
        %v3088 = vunpack.c.l.s4 1966171168
        %v3089 = vunpack.c.0.s8 %v3088
        %v3090 = vlaneseq
        %v3091 = vshrl.u32 %v3090, 7
        %v3092 = vsub.s32 %v3089, %v3091
        %v3093 = vrot.slane %v3078, %v3092
        %v3095 = vunpack.c.l.s4 1966171168
        %v3096 = vunpack.c.0.s8 %v3095
        %v3097 = vlaneseq
        %v3098 = vshrl.u32 %v3097, 7
        %v3099 = vsub.s32 %v3096, %v3098
        %v3100 = vrot.slane %v3085, %v3099
        %v3102 = vunpack.c.l.s4 1966171168
        %v3103 = vunpack.c.0.s8 %v3102
        %v3104 = vlaneseq
        %v3105 = vshrl.u32 %v3104, 7
        %v3106 = vsub.s32 %v3103, %v3105
        %v3107 = vrot.slane %v3086, %v3106
        %v3108 = vcombine.high %v3093, %v3093
        %v3109 = vcombine.high %v3107, %v3107
        %3115 = vst.msk [vmem:[%s244 + $0x19] sm:$0x1] %vm1789, %v3093
        %3116 = vst.msk [vmem:[%s244 + $0x39] sm:$0x1] %vm1789, %v3107
        %3117 = vst.msk [vmem:[%s244 + $0x59] sm:$0x1] %vm1789, %v3108
        %3118 = vst.msk [vmem:[%s244 + $0x79] sm:$0x1] %vm1789, %v3109
        %3119 = vst.msk [vmem:[%s244 + $0x99] sm:$0x1] %vm1789, %v3100
        %v3120 = vmul.f32 %v1519, 0.41935483
        %v3121 = vmul.f32 %v1593, 0.58064514
        %v3122 = vadd.f32 %v3120, %v3121
        %v3124 = vcombine.high %v3122, %v3122
        %v3126 = vunpack.c.l.s4 1966171168
        %v3127 = vunpack.c.0.s8 %v3126
        %v3128 = vlaneseq
        %v3129 = vshrl.u32 %v3128, 7
        %v3130 = vsub.s32 %v3127, %v3129
        %v3131 = vrot.slane %v3122, %v3130
        %v3133 = vunpack.c.l.s4 1966171168
        %v3134 = vunpack.c.0.s8 %v3133
        %v3135 = vlaneseq
        %v3136 = vshrl.u32 %v3135, 7
        %v3137 = vsub.s32 %v3134, %v3136
        %v3138 = vrot.slane %v3124, %v3137
        %v3139 = vcombine.high %v3131, %v3131
        %v3141 = vunpack.c.l.s4 1966171168
        %v3142 = vunpack.c.0.s8 %v3141
        %v3143 = vlaneseq
        %v3144 = vshrl.u32 %v3143, 7
        %v3145 = vsub.s32 %v3142, %v3144
        %v3146 = vrot.slane %v3131, %v3145
        %v3148 = vunpack.c.l.s4 1966171168
        %v3149 = vunpack.c.0.s8 %v3148
        %v3150 = vlaneseq
        %v3151 = vshrl.u32 %v3150, 7
        %v3152 = vsub.s32 %v3149, %v3151
        %v3153 = vrot.slane %v3138, %v3152
        %v3155 = vunpack.c.l.s4 1966171168
        %v3156 = vunpack.c.0.s8 %v3155
        %v3157 = vlaneseq
        %v3158 = vshrl.u32 %v3157, 7
        %v3159 = vsub.s32 %v3156, %v3158
        %v3160 = vrot.slane %v3139, %v3159
        %v3161 = vcombine.high %v3146, %v3146
        %v3162 = vcombine.high %v3160, %v3160
        %3168 = vst.msk [vmem:[%s244 + $0x1a] sm:$0x1] %vm1789, %v3146
        %3169 = vst.msk [vmem:[%s244 + $0x3a] sm:$0x1] %vm1789, %v3160
        %3170 = vst.msk [vmem:[%s244 + $0x5a] sm:$0x1] %vm1789, %v3161
        %3171 = vst.msk [vmem:[%s244 + $0x7a] sm:$0x1] %vm1789, %v3162
        %3172 = vst.msk [vmem:[%s244 + $0x9a] sm:$0x1] %vm1789, %v3153
        %v3173 = vmul.f32 %v1593, 0.9354839
        %v3174 = vmul.f32 %v1667, 0.06451613
        %v3175 = vadd.f32 %v3173, %v3174
        %v3177 = vcombine.high %v3175, %v3175
        %v3179 = vunpack.c.l.s4 1966171168
        %v3180 = vunpack.c.0.s8 %v3179
        %v3181 = vlaneseq
        %v3182 = vshrl.u32 %v3181, 7
        %v3183 = vsub.s32 %v3180, %v3182
        %v3184 = vrot.slane %v3175, %v3183
        %v3186 = vunpack.c.l.s4 1966171168
        %v3187 = vunpack.c.0.s8 %v3186
        %v3188 = vlaneseq
        %v3189 = vshrl.u32 %v3188, 7
        %v3190 = vsub.s32 %v3187, %v3189
        %v3191 = vrot.slane %v3177, %v3190
        %v3192 = vcombine.high %v3184, %v3184
        %v3194 = vunpack.c.l.s4 1966171168
        %v3195 = vunpack.c.0.s8 %v3194
        %v3196 = vlaneseq
        %v3197 = vshrl.u32 %v3196, 7
        %v3198 = vsub.s32 %v3195, %v3197
        %v3199 = vrot.slane %v3184, %v3198
        %v3201 = vunpack.c.l.s4 1966171168
        %v3202 = vunpack.c.0.s8 %v3201
        %v3203 = vlaneseq
        %v3204 = vshrl.u32 %v3203, 7
        %v3205 = vsub.s32 %v3202, %v3204
        %v3206 = vrot.slane %v3191, %v3205
        %v3208 = vunpack.c.l.s4 1966171168
        %v3209 = vunpack.c.0.s8 %v3208
        %v3210 = vlaneseq
        %v3211 = vshrl.u32 %v3210, 7
        %v3212 = vsub.s32 %v3209, %v3211
        %v3213 = vrot.slane %v3192, %v3212
        %v3214 = vcombine.high %v3199, %v3199
        %v3215 = vcombine.high %v3213, %v3213
        %3221 = vst.msk [vmem:[%s244 + $0x1b] sm:$0x1] %vm1789, %v3199
        %3222 = vst.msk [vmem:[%s244 + $0x3b] sm:$0x1] %vm1789, %v3213
        %3223 = vst.msk [vmem:[%s244 + $0x5b] sm:$0x1] %vm1789, %v3214
        %3224 = vst.msk [vmem:[%s244 + $0x7b] sm:$0x1] %vm1789, %v3215
        %3225 = vst.msk [vmem:[%s244 + $0x9b] sm:$0x1] %vm1789, %v3206
        %v3226 = vmul.f32 %v1593, 0.4516129
        %v3227 = vmul.f32 %v1667, 0.5483871
        %v3228 = vadd.f32 %v3226, %v3227
        %v3230 = vcombine.high %v3228, %v3228
        %v3232 = vunpack.c.l.s4 1966171168
        %v3233 = vunpack.c.0.s8 %v3232
        %v3234 = vlaneseq
        %v3235 = vshrl.u32 %v3234, 7
        %v3236 = vsub.s32 %v3233, %v3235
        %v3237 = vrot.slane %v3228, %v3236
        %v3239 = vunpack.c.l.s4 1966171168
        %v3240 = vunpack.c.0.s8 %v3239
        %v3241 = vlaneseq
        %v3242 = vshrl.u32 %v3241, 7
        %v3243 = vsub.s32 %v3240, %v3242
        %v3244 = vrot.slane %v3230, %v3243
        %v3245 = vcombine.high %v3237, %v3237
        %v3247 = vunpack.c.l.s4 1966171168
        %v3248 = vunpack.c.0.s8 %v3247
        %v3249 = vlaneseq
        %v3250 = vshrl.u32 %v3249, 7
        %v3251 = vsub.s32 %v3248, %v3250
        %v3252 = vrot.slane %v3237, %v3251
        %v3254 = vunpack.c.l.s4 1966171168
        %v3255 = vunpack.c.0.s8 %v3254
        %v3256 = vlaneseq
        %v3257 = vshrl.u32 %v3256, 7
        %v3258 = vsub.s32 %v3255, %v3257
        %v3259 = vrot.slane %v3244, %v3258
        %v3261 = vunpack.c.l.s4 1966171168
        %v3262 = vunpack.c.0.s8 %v3261
        %v3263 = vlaneseq
        %v3264 = vshrl.u32 %v3263, 7
        %v3265 = vsub.s32 %v3262, %v3264
        %v3266 = vrot.slane %v3245, %v3265
        %v3267 = vcombine.high %v3252, %v3252
        %v3268 = vcombine.high %v3266, %v3266
        %3274 = vst.msk [vmem:[%s244 + $0x1c] sm:$0x1] %vm1789, %v3252
        %3275 = vst.msk [vmem:[%s244 + $0x3c] sm:$0x1] %vm1789, %v3266
        %3276 = vst.msk [vmem:[%s244 + $0x5c] sm:$0x1] %vm1789, %v3267
        %3277 = vst.msk [vmem:[%s244 + $0x7c] sm:$0x1] %vm1789, %v3268
        %3278 = vst.msk [vmem:[%s244 + $0x9c] sm:$0x1] %vm1789, %v3259
        %v3279 = vmul.f32 %v1667, 0.9677419
        %v3280 = vmul.f32 %v1741, 0.032258064
        %v3281 = vadd.f32 %v3279, %v3280
        %v3283 = vcombine.high %v3281, %v3281
        %v3285 = vunpack.c.l.s4 1966171168
        %v3286 = vunpack.c.0.s8 %v3285
        %v3287 = vlaneseq
        %v3288 = vshrl.u32 %v3287, 7
        %v3289 = vsub.s32 %v3286, %v3288
        %v3290 = vrot.slane %v3281, %v3289
        %v3292 = vunpack.c.l.s4 1966171168
        %v3293 = vunpack.c.0.s8 %v3292
        %v3294 = vlaneseq
        %v3295 = vshrl.u32 %v3294, 7
        %v3296 = vsub.s32 %v3293, %v3295
        %v3297 = vrot.slane %v3283, %v3296
        %v3298 = vcombine.high %v3290, %v3290
        %v3300 = vunpack.c.l.s4 1966171168
        %v3301 = vunpack.c.0.s8 %v3300
        %v3302 = vlaneseq
        %v3303 = vshrl.u32 %v3302, 7
        %v3304 = vsub.s32 %v3301, %v3303
        %v3305 = vrot.slane %v3290, %v3304
        %v3307 = vunpack.c.l.s4 1966171168
        %v3308 = vunpack.c.0.s8 %v3307
        %v3309 = vlaneseq
        %v3310 = vshrl.u32 %v3309, 7
        %v3311 = vsub.s32 %v3308, %v3310
        %v3312 = vrot.slane %v3297, %v3311
        %v3314 = vunpack.c.l.s4 1966171168
        %v3315 = vunpack.c.0.s8 %v3314
        %v3316 = vlaneseq
        %v3317 = vshrl.u32 %v3316, 7
        %v3318 = vsub.s32 %v3315, %v3317
        %v3319 = vrot.slane %v3298, %v3318
        %v3320 = vcombine.high %v3305, %v3305
        %v3321 = vcombine.high %v3319, %v3319
        %3327 = vst.msk [vmem:[%s244 + $0x1d] sm:$0x1] %vm1789, %v3305
        %3328 = vst.msk [vmem:[%s244 + $0x3d] sm:$0x1] %vm1789, %v3319
        %3329 = vst.msk [vmem:[%s244 + $0x5d] sm:$0x1] %vm1789, %v3320
        %3330 = vst.msk [vmem:[%s244 + $0x7d] sm:$0x1] %vm1789, %v3321
        %3331 = vst.msk [vmem:[%s244 + $0x9d] sm:$0x1] %vm1789, %v3312
        %v3332 = vmul.f32 %v1667, 0.48387095
        %v3333 = vmul.f32 %v1741, 0.516129
        %v3334 = vadd.f32 %v3332, %v3333
        %v3336 = vcombine.high %v3334, %v3334
        %v3338 = vunpack.c.l.s4 1966171168
        %v3339 = vunpack.c.0.s8 %v3338
        %v3340 = vlaneseq
        %v3341 = vshrl.u32 %v3340, 7
        %v3342 = vsub.s32 %v3339, %v3341
        %v3343 = vrot.slane %v3334, %v3342
        %v3345 = vunpack.c.l.s4 1966171168
        %v3346 = vunpack.c.0.s8 %v3345
        %v3347 = vlaneseq
        %v3348 = vshrl.u32 %v3347, 7
        %v3349 = vsub.s32 %v3346, %v3348
        %v3350 = vrot.slane %v3336, %v3349
        %v3351 = vcombine.high %v3343, %v3343
        %v3353 = vunpack.c.l.s4 1966171168
        %v3354 = vunpack.c.0.s8 %v3353
        %v3355 = vlaneseq
        %v3356 = vshrl.u32 %v3355, 7
        %v3357 = vsub.s32 %v3354, %v3356
        %v3358 = vrot.slane %v3343, %v3357
        %v3360 = vunpack.c.l.s4 1966171168
        %v3361 = vunpack.c.0.s8 %v3360
        %v3362 = vlaneseq
        %v3363 = vshrl.u32 %v3362, 7
        %v3364 = vsub.s32 %v3361, %v3363
        %v3365 = vrot.slane %v3350, %v3364
        %v3367 = vunpack.c.l.s4 1966171168
        %v3368 = vunpack.c.0.s8 %v3367
        %v3369 = vlaneseq
        %v3370 = vshrl.u32 %v3369, 7
        %v3371 = vsub.s32 %v3368, %v3370
        %v3372 = vrot.slane %v3351, %v3371
        %v3373 = vcombine.high %v3358, %v3358
        %v3374 = vcombine.high %v3372, %v3372
        %3380 = vst.msk [vmem:[%s244 + $0x1e] sm:$0x1] %vm1789, %v3358
        %3381 = vst.msk [vmem:[%s244 + $0x3e] sm:$0x1] %vm1789, %v3372
        %3382 = vst.msk [vmem:[%s244 + $0x5e] sm:$0x1] %vm1789, %v3373
        %3383 = vst.msk [vmem:[%s244 + $0x7e] sm:$0x1] %vm1789, %v3374
        %3384 = vst.msk [vmem:[%s244 + $0x9e] sm:$0x1] %vm1789, %v3365
        %v3385 = vmul.f32 %v1667, 0.0
        %v3386 = vadd.f32 %v3385, %v1741
        %v3388 = vcombine.high %v3386, %v3386
        %v3390 = vunpack.c.l.s4 1966171168
        %v3391 = vunpack.c.0.s8 %v3390
        %v3392 = vlaneseq
        %v3393 = vshrl.u32 %v3392, 7
        %v3394 = vsub.s32 %v3391, %v3393
        %v3395 = vrot.slane %v3386, %v3394
        %v3397 = vunpack.c.l.s4 1966171168
        %v3398 = vunpack.c.0.s8 %v3397
        %v3399 = vlaneseq
        %v3400 = vshrl.u32 %v3399, 7
        %v3401 = vsub.s32 %v3398, %v3400
        %v3402 = vrot.slane %v3388, %v3401
        %v3403 = vcombine.high %v3395, %v3395
        %v3405 = vunpack.c.l.s4 1966171168
        %v3406 = vunpack.c.0.s8 %v3405
        %v3407 = vlaneseq
        %v3408 = vshrl.u32 %v3407, 7
        %v3409 = vsub.s32 %v3406, %v3408
        %v3410 = vrot.slane %v3395, %v3409
        %v3412 = vunpack.c.l.s4 1966171168
        %v3413 = vunpack.c.0.s8 %v3412
        %v3414 = vlaneseq
        %v3415 = vshrl.u32 %v3414, 7
        %v3416 = vsub.s32 %v3413, %v3415
        %v3417 = vrot.slane %v3402, %v3416
        %v3419 = vunpack.c.l.s4 1966171168
        %v3420 = vunpack.c.0.s8 %v3419
        %v3421 = vlaneseq
        %v3422 = vshrl.u32 %v3421, 7
        %v3423 = vsub.s32 %v3420, %v3422
        %v3424 = vrot.slane %v3403, %v3423
        %v3425 = vcombine.high %v3410, %v3410
        %v3426 = vcombine.high %v3424, %v3424
        %3432 = vst.msk [vmem:[%s244 + $0x1f] sm:$0x1] %vm1789, %v3410
        %3433 = vst.msk [vmem:[%s244 + $0x3f] sm:$0x1] %vm1789, %v3424
        %3434 = vst.msk [vmem:[%s244 + $0x5f] sm:$0x1] %vm1789, %v3425
        %3435 = vst.msk [vmem:[%s244 + $0x7f] sm:$0x1] %vm1789, %v3426
        %3436 = vst.msk [vmem:[%s244 + $0x9f] sm:$0x1] %vm1789, %v3417
        %s3437 = sand.u32 %s159, 1
        %s3438 = scalar_lea.sflag [#allocation3], %s3437
        %s3439 = sand.u32 %s159, 1
        %s3440 = smul.addr %s3439, 160
        %s3441 = scalar_lea.vmem [#allocation2], %s3440
        // Predicated region
        $region45: #{tpu_custom_call.1} parent=43 // pred_check
          %p3442 = pneg %p169
        $region46: #{tpu_custom_call.1} parent=43 // pred_check_branch
          %3444 = sbr.rel (%p3442) target = $region48
        $region47: #{tpu_custom_call.1} parent=43 // pred_region
          %s3446 = ssub.s32 2560, 2560
          %3447 = vsyncadd %s3438, %s3446
          %s3448 = smul.addr %s20, 20
          %s3449 = smul.addr %s3448, 128
          %s3450 = scalar_lea.hbm %s6, %s3449
          %s3451 = sshll.u32 %s3441, 4
          %s3452 = int_to_ptr.vmem [resolvable:$true] %s3451
          %3457 = dma.vmem_to_hbm [thread:$0]  %s3452, 2560, %s3450, %s3438, 128, 128, 8
        $region48: #{tpu_custom_call.1} parent=43 // pred_fallthru
          _
      $region44: #{tpu_custom_call.1} parent=5 // pred_fallthru
        _
      %p3458 = scmp.le.s32.totalorder 2, %s15
      // Predicated region
      $region49: #{tpu_custom_call.1} parent=5 // pred_check
        %p3459 = pneg %p3458
      $region50: #{tpu_custom_call.1} parent=5 // pred_check_branch
        %3461 = sbr.rel (%p3459) target = $region52
      $region51: #{tpu_custom_call.1} parent=5 // pred_region
        %s3462 = ssub.s32 %s15, 2
        // Predicated region
        $region53: #{tpu_custom_call.1} parent=51 // pred_check
          %p3463 = pneg %p175
        $region54: #{tpu_custom_call.1} parent=51 // pred_check_branch
          %3465 = sbr.rel (%p3463) target = $region56
        $region55: #{tpu_custom_call.1} parent=51 // pred_region
          %s3466 = sand.u32 %s160, 1
          %s3467 = scalar_lea.sflag [#allocation3], %s3466
          %s3468 = sand.u32 %s160, 1
          %s3469 = smul.addr %s3468, 160
          %s3470 = scalar_lea.vmem [#allocation2], %s3469
          %3471 = dma.done %s3467, 2560
        $region56: #{tpu_custom_call.1} parent=51 // pred_fallthru
          _
      $region52: #{tpu_custom_call.1} parent=5 // pred_fallthru
        _
    $region6: #{tpu_custom_call.1} parent=1 // loop_footer
      %s19 = sadd.s32 1, %s15
    $region7: #{tpu_custom_call.1} parent=1 // loop_footer_branch
      %14 = sbr.rel target = $region3
    $region8: #{tpu_custom_call.1} parent=1 // loop_exit
      _
    %3472 = vsyncpa [#allocation3], 1
    %s3473 = scalar_lea.sflag [#allocation3], 1
    %3474 = vsyncpa %s3473, 1

</llo_original>
